<compile_context>
chip_gen: v7x
topology: tpu7x:2x2x1
jax: 0.10.0
libtpu: 0.0.40
codegen_flags: <defaults>
</compile_context>

<pallas_src>
import functools

import jax
import jax.numpy as jnp
from jax.experimental import pallas as pl
from jax.experimental.pallas import tpu as pltpu

# ---- RenderingNetwork config (mode='idr', no dir encoder) ----
D_POINTS = 3
D_VIEWS = 3
D_NORMALS = 3
D_FEATURE = 256
D_IN = D_POINTS + D_VIEWS + D_NORMALS          # 9 geometric channels
D_HIDDEN = 256
N_LAYERS = 4                                   # -> 5 Linear layers total
D_OUT = 3

N_MID = N_LAYERS - 1                           # lin1..lin3 (hidden -> hidden)
LANE = 128
GEOM_PAD = LANE                                # 9 geometric dims lane-padded to 128
DOUT_PAD = LANE                                # lane-dense output head (sliced to 3)

TM = 512                                       # batch tile (sweep 512/1024/2048 at prod N)


def rendering_kernel(geom_ref, feat_ref, w0g_ref, w0f_ref, b0_ref,
                     wmid_ref, bmid_ref, wlast_ref, blast_ref, out_ref):
    # geom: (TM, 128) bf16 (9 real lanes), feat: (TM, 256) in its native dtype.
    feat = feat_ref[...].astype(jnp.bfloat16)
    geom = geom_ref[...]

    # lin0 (265 -> 256), split-K over [feature | geometric], then ReLU (bf16 out).
    h = jnp.dot(feat, w0f_ref[...], preferred_element_type=jnp.float32)
    h += jnp.dot(geom, w0g_ref[...], preferred_element_type=jnp.float32)
    h = jnp.maximum(h + b0_ref[...], 0.0).astype(jnp.bfloat16)

    # lin1..lin3 (256 -> 256) + ReLU.  Static unroll; weights resident in VMEM.
    for i in range(N_MID):
        z = jnp.dot(h, wmid_ref[i], preferred_element_type=jnp.float32)
        h = jnp.maximum(z + bmid_ref[i:i + 1, :], 0.0).astype(jnp.bfloat16)

    # lin4 (256 -> 3, lane-padded to 128) + sigmoid (squeeze_out=True).
    y = jnp.dot(h, wlast_ref[...], preferred_element_type=jnp.float32)
    y += blast_ref[...]
    sig = pl.reciprocal(1.0 + jnp.exp(-y), approx=True)   # EUP exp + EUP recip
    out_ref[...] = sig.astype(out_ref.dtype)               # bf16, unmasked vst


def pack_params(p):
    """One-time conversion of the f32 reference parameters into the kernel
    layout: split lin0 into geometric/feature blocks, lane-pad the geometric
    rows and the 3-wide output head, quantize weights to bf16 (biases f32)."""
    w0g = jnp.pad(p["w0"][:D_IN], ((0, GEOM_PAD - D_IN), (0, 0))).astype(jnp.bfloat16)
    w0f = p["w0"][D_IN:].astype(jnp.bfloat16)
    wlast = jnp.pad(p["wlast"], ((0, 0), (0, DOUT_PAD - D_OUT))).astype(jnp.bfloat16)
    blast = jnp.pad(p["blast"], ((0, 0), (0, DOUT_PAD - D_OUT)))
    return dict(w0g=w0g, w0f=w0f, b0=p["b0"],
                wmid=p["wmid"].astype(jnp.bfloat16), bmid=p["bmid"],
                wlast=wlast, blast=blast)


@functools.partial(jax.jit, static_argnames=("tm",))
def rendering_forward(points, normals, view_dirs, feature_vectors, kp, *, tm=TM):
    n = points.shape[0]
    n_pad = ((n + tm - 1) // tm) * tm

    # Only the 9 geometric channels are packed/cast ('idr' order is
    # [points, view_dirs, normals, feature]); feature_vectors streams directly
    # into the kernel (no wide staging copy).
    geom = jnp.concatenate([points, view_dirs, normals], axis=-1)        # (n, 9)
    geom = jnp.pad(geom, ((0, n_pad - n), (0, GEOM_PAD - D_IN))).astype(jnp.bfloat16)
    feat = feature_vectors
    if n_pad != n:
        feat = jnp.pad(feat, ((0, n_pad - n), (0, 0)))

    grid = (n_pad // tm,)

    def const(shape):  # constant index map -> DMA'd once, VMEM-resident
        return pl.BlockSpec(shape, lambda i, _nd=len(shape): (0,) * _nd)

    in_specs = [
        pl.BlockSpec((tm, GEOM_PAD), lambda i: (i, 0)),    # geom   (bf16)
        pl.BlockSpec((tm, D_FEATURE), lambda i: (i, 0)),   # feature_vectors
        const((GEOM_PAD, D_HIDDEN)),                       # w0_geom (bf16)
        const((D_FEATURE, D_HIDDEN)),                      # w0_feat (bf16)
        const((1, D_HIDDEN)),                              # b0      (f32)
        const((N_MID, D_HIDDEN, D_HIDDEN)),                # wmid    (bf16)
        const((N_MID, D_HIDDEN)),                          # bmid    (f32)
        const((D_HIDDEN, DOUT_PAD)),                       # wlast   (bf16)
        const((1, DOUT_PAD)),                              # blast   (f32)
    ]
    out_spec = pl.BlockSpec((tm, DOUT_PAD), lambda i: (i, 0))
    out_shape = jax.ShapeDtypeStruct((n_pad, DOUT_PAD), jnp.bfloat16)

    out = pl.pallas_call(
        rendering_kernel,
        grid=grid,
        in_specs=in_specs,
        out_specs=out_spec,
        out_shape=out_shape,
        compiler_params=pltpu.CompilerParams(dimension_semantics=("parallel",)),
    )(geom, feat, kp["w0g"], kp["w0f"], kp["b0"], kp["wmid"], kp["bmid"],
      kp["wlast"], kp["blast"])

    # Slice the padded lane-dense head back to the 3 real channels (kept bf16;
    # sigmoid outputs in [0,1] are well inside bf16 precision).
    return out[:n, :D_OUT]


def init_params(key):
    """Deterministic synthetic parameters (f32, PyTorch-equivalent).  The
    weight_norm effective weight g * v / ||v|| (per output column) is folded."""
    dims = [D_IN + D_FEATURE] + [D_HIDDEN] * N_LAYERS + [D_OUT]  # [265,256,256,256,256,3]

    def linear(k, din, dout):
        kv, kg, kb = jax.random.split(k, 3)
        v = jax.random.normal(kv, (din, dout), jnp.float32) / jnp.sqrt(din)
        g = 1.0 + 0.05 * jax.random.normal(kg, (1, dout), jnp.float32)
        w = g * v / jnp.linalg.norm(v, axis=0, keepdims=True)
        b = 0.01 * jax.random.normal(kb, (1, dout), jnp.float32)
        return w, b

    keys = jax.random.split(key, len(dims) - 1)
    w0, b0 = linear(keys[0], dims[0], dims[1])
    wmid, bmid = [], []
    for l in range(1, N_LAYERS):                     # lin1 .. lin3
        w, b = linear(keys[l], dims[l], dims[l + 1])
        wmid.append(w)
        bmid.append(b[0])
    wmid = jnp.stack(wmid, axis=0)                   # (N_MID, 256, 256) f32
    bmid = jnp.stack(bmid, axis=0)                   # (N_MID, 256) f32
    wlast, blast = linear(keys[N_LAYERS], dims[N_LAYERS], dims[N_LAYERS + 1])
    return dict(w0=w0, b0=b0, wmid=wmid, bmid=bmid, wlast=wlast, blast=blast)


def rendering_reference_mixed(points, normals, view_dirs, feature_vectors, p):
    """Pure-JAX reference mirroring the kernel's bf16-weight / f32-accum mix."""
    x = jnp.concatenate([points, view_dirs, normals, feature_vectors], axis=-1)
    x = x.astype(jnp.bfloat16)
    h = jnp.dot(x, p["w0"].astype(jnp.bfloat16),
                preferred_element_type=jnp.float32) + p["b0"]
    h = jnp.maximum(h, 0.0).astype(jnp.bfloat16)
    for i in range(N_MID):
        z = jnp.dot(h, p["wmid"][i].astype(jnp.bfloat16),
                    preferred_element_type=jnp.float32) + p["bmid"][i]
        h = jnp.maximum(z, 0.0).astype(jnp.bfloat16)
    y = jnp.dot(h, p["wlast"].astype(jnp.bfloat16),
                preferred_element_type=jnp.float32) + p["blast"]
    return jax.nn.sigmoid(y)


def rendering_reference_f32(points, normals, view_dirs, feature_vectors, p):
    """True f32 reference matching the PyTorch module (no bf16 anywhere)."""
    x = jnp.concatenate([points, view_dirs, normals, feature_vectors], axis=-1)
    h = jnp.maximum(x @ p["w0"] + p["b0"], 0.0)
    for i in range(N_MID):
        h = jnp.maximum(h @ p["wmid"][i] + p["bmid"][i], 0.0)
    y = h @ p["wlast"] + p["blast"]
    return jax.nn.sigmoid(y)


if __name__ == "__main__":
    key = jax.random.PRNGKey(0)
    kp_, kn_, kv_, kf_, kw_ = jax.random.split(key, 5)

    N = 1024  # rays/samples; grid = N // TM = 2 ("parallel" -> both v7x TCs busy)
    points = jax.random.normal(kp_, (N, D_POINTS), dtype=jnp.float32)
    normals = jax.random.normal(kn_, (N, D_NORMALS), dtype=jnp.float32)
    view_dirs = jax.random.normal(kv_, (N, D_VIEWS), dtype=jnp.float32)
    feature_vectors = jax.random.normal(kf_, (N, D_FEATURE), dtype=jnp.float32)

    params = init_params(kw_)          # f32 PyTorch-equivalent parameters
    kparams = pack_params(params)      # one-time kernel-layout conversion

    out = rendering_forward(points, normals, view_dirs, feature_vectors, kparams)
    out = jax.block_until_ready(out)

    ref_mixed = rendering_reference_mixed(points, normals, view_dirs,
                                          feature_vectors, params)
    ref_f32 = rendering_reference_f32(points, normals, view_dirs,
                                      feature_vectors, params)

    out_f32 = out.astype(jnp.float32)
    assert out.shape == (N, D_OUT)
    assert bool(jnp.all(jnp.isfinite(out_f32)))
    # Tight check vs. a reference with the same bf16/f32 mix as the kernel.
    assert jnp.allclose(out_f32, ref_mixed, atol=1e-2, rtol=1e-2)
    # Coarse sanity check vs. the true f32 PyTorch-equivalent model
    # (covers bf16 quantization of inputs/weights at these magnitudes).
    assert jnp.allclose(out_f32, ref_f32, atol=5e-2, rtol=5e-2)

    print("KERNEL_OK")
</pallas_src>

<mosaic_0001>
module attributes {stable_mosaic.version = 11 : i64} {
  func.func @rendering_kernel(%arg0: i32, %arg1: memref<512x128xbf16, #tpu.memory_space<vmem>>, %arg2: memref<512x256xf32, #tpu.memory_space<vmem>>, %arg3: memref<128x256xbf16, #tpu.memory_space<vmem>>, %arg4: memref<256x256xbf16, #tpu.memory_space<vmem>>, %arg5: memref<1x256xf32, #tpu.memory_space<vmem>>, %arg6: memref<3x256x256xbf16, #tpu.memory_space<vmem>>, %arg7: memref<3x256xf32, #tpu.memory_space<vmem>>, %arg8: memref<256x128xbf16, #tpu.memory_space<vmem>>, %arg9: memref<1x128xf32, #tpu.memory_space<vmem>>, %arg10: memref<512x128xbf16, #tpu.memory_space<vmem>>) attributes {dimension_semantics = [#tpu.dimension_semantics<parallel>], iteration_bounds = array<i64: 2>, scalar_prefetch = 0 : i64, scratch_operands = 0 : i64, tpu.core_type = #tpu.core_type<tc>, window_params = [{transform_indices = @transform_0, window_bounds = array<i64: 512, 128>}, {transform_indices = @transform_1, window_bounds = array<i64: 512, 256>}, {pipeline_mode = #tpu.pipeline_mode<synchronous>, transform_indices = @transform_2, window_bounds = array<i64: 128, 256>}, {pipeline_mode = #tpu.pipeline_mode<synchronous>, transform_indices = @transform_3, window_bounds = array<i64: 256, 256>}, {pipeline_mode = #tpu.pipeline_mode<synchronous>, transform_indices = @transform_4, window_bounds = array<i64: 1, 256>}, {pipeline_mode = #tpu.pipeline_mode<synchronous>, transform_indices = @transform_5, window_bounds = array<i64: 3, 256, 256>}, {pipeline_mode = #tpu.pipeline_mode<synchronous>, transform_indices = @transform_6, window_bounds = array<i64: 3, 256>}, {pipeline_mode = #tpu.pipeline_mode<synchronous>, transform_indices = @transform_7, window_bounds = array<i64: 256, 128>}, {pipeline_mode = #tpu.pipeline_mode<synchronous>, transform_indices = @transform_8, window_bounds = array<i64: 1, 128>}, {transform_indices = @transform_9, window_bounds = array<i64: 512, 128>}]} {
    %c0 = arith.constant 0 : index
    %c0_0 = arith.constant 0 : index
    %0 = vector.load %arg2[%c0, %c0_0] : memref<512x256xf32, #tpu.memory_space<vmem>>, vector<512x256xf32>
    %1 = arith.truncf %0 : vector<512x256xf32> to vector<512x256xbf16>
    %c0_1 = arith.constant 0 : index
    %c0_2 = arith.constant 0 : index
    %2 = vector.load %arg1[%c0_1, %c0_2] : memref<512x128xbf16, #tpu.memory_space<vmem>>, vector<512x128xbf16>
    %c0_3 = arith.constant 0 : index
    %c0_4 = arith.constant 0 : index
    %3 = vector.load %arg4[%c0_3, %c0_4] : memref<256x256xbf16, #tpu.memory_space<vmem>>, vector<256x256xbf16>
    %cst = arith.constant dense<0.000000e+00> : vector<512x256xf32>
    %4 = tpu.matmul %1, %3, %cst {dimension_numbers = #tpu.dot_dimension_numbers<[1], [0], [0], [1], [0, 0, 1, 1], [], []>} : vector<512x256xbf16>, vector<256x256xbf16>, vector<512x256xf32> -> vector<512x256xf32>
    %c0_5 = arith.constant 0 : index
    %c0_6 = arith.constant 0 : index
    %5 = vector.load %arg3[%c0_5, %c0_6] : memref<128x256xbf16, #tpu.memory_space<vmem>>, vector<128x256xbf16>
    %cst_7 = arith.constant dense<0.000000e+00> : vector<512x256xf32>
    %6 = tpu.matmul %2, %5, %cst_7 {dimension_numbers = #tpu.dot_dimension_numbers<[1], [0], [0], [1], [0, 0, 1, 1], [], []>} : vector<512x128xbf16>, vector<128x256xbf16>, vector<512x256xf32> -> vector<512x256xf32>
    %7 = arith.addf %4, %6 : vector<512x256xf32>
    %c0_8 = arith.constant 0 : index
    %c0_9 = arith.constant 0 : index
    %8 = vector.load %arg5[%c0_8, %c0_9] : memref<1x256xf32, #tpu.memory_space<vmem>>, vector<1x256xf32>
    %9 = vector.broadcast %8 : vector<1x256xf32> to vector<512x256xf32>
    %10 = arith.addf %7, %9 : vector<512x256xf32>
    %cst_10 = arith.constant 0.000000e+00 : f32
    %11 = vector.broadcast %cst_10 : f32 to vector<512x256xf32>
    %12 = arith.maximumf %10, %11 : vector<512x256xf32>
    %13 = arith.truncf %12 : vector<512x256xf32> to vector<512x256xbf16>
    %c0_11 = arith.constant 0 : index
    %c0_12 = arith.constant 0 : index
    %c0_13 = arith.constant 0 : index
    %14 = vector.load %arg6[%c0_11, %c0_12, %c0_13] : memref<3x256x256xbf16, #tpu.memory_space<vmem>>, vector<1x256x256xbf16>
    %15 = vector.shape_cast %14 : vector<1x256x256xbf16> to vector<256x256xbf16>
    %cst_14 = arith.constant dense<0.000000e+00> : vector<512x256xf32>
    %16 = tpu.matmul %13, %15, %cst_14 {dimension_numbers = #tpu.dot_dimension_numbers<[1], [0], [0], [1], [0, 0, 1, 1], [], []>} : vector<512x256xbf16>, vector<256x256xbf16>, vector<512x256xf32> -> vector<512x256xf32>
    %c0_15 = arith.constant 0 : index
    %c0_16 = arith.constant 0 : index
    %17 = vector.load %arg7[%c0_15, %c0_16] : memref<3x256xf32, #tpu.memory_space<vmem>>, vector<1x256xf32>
    %18 = vector.broadcast %17 : vector<1x256xf32> to vector<512x256xf32>
    %19 = arith.addf %16, %18 : vector<512x256xf32>
    %cst_17 = arith.constant 0.000000e+00 : f32
    %20 = vector.broadcast %cst_17 : f32 to vector<512x256xf32>
    %21 = arith.maximumf %19, %20 : vector<512x256xf32>
    %22 = arith.truncf %21 : vector<512x256xf32> to vector<512x256xbf16>
    %c1 = arith.constant 1 : index
    %c0_18 = arith.constant 0 : index
    %c0_19 = arith.constant 0 : index
    %23 = vector.load %arg6[%c1, %c0_18, %c0_19] : memref<3x256x256xbf16, #tpu.memory_space<vmem>>, vector<1x256x256xbf16>
    %24 = vector.shape_cast %23 : vector<1x256x256xbf16> to vector<256x256xbf16>
    %cst_20 = arith.constant dense<0.000000e+00> : vector<512x256xf32>
    %25 = tpu.matmul %22, %24, %cst_20 {dimension_numbers = #tpu.dot_dimension_numbers<[1], [0], [0], [1], [0, 0, 1, 1], [], []>} : vector<512x256xbf16>, vector<256x256xbf16>, vector<512x256xf32> -> vector<512x256xf32>
    %c1_21 = arith.constant 1 : index
    %c0_22 = arith.constant 0 : index
    %26 = vector.load %arg7[%c1_21, %c0_22] : memref<3x256xf32, #tpu.memory_space<vmem>>, vector<1x256xf32>
    %27 = vector.broadcast %26 : vector<1x256xf32> to vector<512x256xf32>
    %28 = arith.addf %25, %27 : vector<512x256xf32>
    %cst_23 = arith.constant 0.000000e+00 : f32
    %29 = vector.broadcast %cst_23 : f32 to vector<512x256xf32>
    %30 = arith.maximumf %28, %29 : vector<512x256xf32>
    %31 = arith.truncf %30 : vector<512x256xf32> to vector<512x256xbf16>
    %c2 = arith.constant 2 : index
    %c0_24 = arith.constant 0 : index
    %c0_25 = arith.constant 0 : index
    %32 = vector.load %arg6[%c2, %c0_24, %c0_25] : memref<3x256x256xbf16, #tpu.memory_space<vmem>>, vector<1x256x256xbf16>
    %33 = vector.shape_cast %32 : vector<1x256x256xbf16> to vector<256x256xbf16>
    %cst_26 = arith.constant dense<0.000000e+00> : vector<512x256xf32>
    %34 = tpu.matmul %31, %33, %cst_26 {dimension_numbers = #tpu.dot_dimension_numbers<[1], [0], [0], [1], [0, 0, 1, 1], [], []>} : vector<512x256xbf16>, vector<256x256xbf16>, vector<512x256xf32> -> vector<512x256xf32>
    %c2_27 = arith.constant 2 : index
    %c0_28 = arith.constant 0 : index
    %35 = vector.load %arg7[%c2_27, %c0_28] : memref<3x256xf32, #tpu.memory_space<vmem>>, vector<1x256xf32>
    %36 = vector.broadcast %35 : vector<1x256xf32> to vector<512x256xf32>
    %37 = arith.addf %34, %36 : vector<512x256xf32>
    %cst_29 = arith.constant 0.000000e+00 : f32
    %38 = vector.broadcast %cst_29 : f32 to vector<512x256xf32>
    %39 = arith.maximumf %37, %38 : vector<512x256xf32>
    %40 = arith.truncf %39 : vector<512x256xf32> to vector<512x256xbf16>
    %c0_30 = arith.constant 0 : index
    %c0_31 = arith.constant 0 : index
    %41 = vector.load %arg8[%c0_30, %c0_31] : memref<256x128xbf16, #tpu.memory_space<vmem>>, vector<256x128xbf16>
    %cst_32 = arith.constant dense<0.000000e+00> : vector<512x128xf32>
    %42 = tpu.matmul %40, %41, %cst_32 {dimension_numbers = #tpu.dot_dimension_numbers<[1], [0], [0], [1], [0, 0, 1, 1], [], []>} : vector<512x256xbf16>, vector<256x128xbf16>, vector<512x128xf32> -> vector<512x128xf32>
    %c0_33 = arith.constant 0 : index
    %c0_34 = arith.constant 0 : index
    %43 = vector.load %arg9[%c0_33, %c0_34] : memref<1x128xf32, #tpu.memory_space<vmem>>, vector<1x128xf32>
    %44 = vector.broadcast %43 : vector<1x128xf32> to vector<512x128xf32>
    %45 = arith.addf %42, %44 : vector<512x128xf32>
    %cst_35 = arith.constant 0.000000e+00 : f32
    %46 = vector.broadcast %cst_35 : f32 to vector<512x128xf32>
    %47 = arith.subf %46, %45 : vector<512x128xf32>
    %48 = math.exp %47 : vector<512x128xf32>
    %cst_36 = arith.constant 1.000000e+00 : f32
    %49 = vector.broadcast %cst_36 : f32 to vector<512x128xf32>
    %50 = arith.addf %49, %48 : vector<512x128xf32>
    %51 = tpu.reciprocal %50 {approx = true} : vector<512x128xf32> -> vector<512x128xf32>
    %52 = arith.truncf %51 : vector<512x128xf32> to vector<512x128xbf16>
    %c0_37 = arith.constant 0 : index
    %c0_38 = arith.constant 0 : index
    %53 = vector.load %arg10[%c0_37, %c0_38] : memref<512x128xbf16, #tpu.memory_space<vmem>>, vector<512x128xbf16>
    tpu.vector_store %arg10[%c0_37, %c0_38], %52 {strides = array<i32>} : memref<512x128xbf16, #tpu.memory_space<vmem>>, vector<512x128xbf16>,
    return
  }
  func.func @transform_0(%arg0: i32) -> (i32, i32) {
    %c0_i32 = arith.constant 0 : i32
    %c0_i32_0 = arith.constant 0 : i32
    return %arg0, %c0_i32 : i32, i32
  }
  func.func @transform_1(%arg0: i32) -> (i32, i32) {
    %c0_i32 = arith.constant 0 : i32
    %c0_i32_0 = arith.constant 0 : i32
    return %arg0, %c0_i32 : i32, i32
  }
  func.func @transform_2(%arg0: i32) -> (i32, i32) {
    %c0_i32 = arith.constant 0 : i32
    %c0_i32_0 = arith.constant 0 : i32
    %c0_i32_1 = arith.constant 0 : i32
    return %c0_i32, %c0_i32_0 : i32, i32
  }
  func.func @transform_3(%arg0: i32) -> (i32, i32) {
    %c0_i32 = arith.constant 0 : i32
    %c0_i32_0 = arith.constant 0 : i32
    %c0_i32_1 = arith.constant 0 : i32
    return %c0_i32, %c0_i32_0 : i32, i32
  }
  func.func @transform_4(%arg0: i32) -> (i32, i32) {
    %c0_i32 = arith.constant 0 : i32
    %c0_i32_0 = arith.constant 0 : i32
    %c0_i32_1 = arith.constant 0 : i32
    return %c0_i32, %c0_i32_0 : i32, i32
  }
  func.func @transform_5(%arg0: i32) -> (i32, i32, i32) {
    %c0_i32 = arith.constant 0 : i32
    %c0_i32_0 = arith.constant 0 : i32
    %c0_i32_1 = arith.constant 0 : i32
    %c0_i32_2 = arith.constant 0 : i32
    return %c0_i32, %c0_i32_0, %c0_i32_1 : i32, i32, i32
  }
  func.func @transform_6(%arg0: i32) -> (i32, i32) {
    %c0_i32 = arith.constant 0 : i32
    %c0_i32_0 = arith.constant 0 : i32
    %c0_i32_1 = arith.constant 0 : i32
    return %c0_i32, %c0_i32_0 : i32, i32
  }
  func.func @transform_7(%arg0: i32) -> (i32, i32) {
    %c0_i32 = arith.constant 0 : i32
    %c0_i32_0 = arith.constant 0 : i32
    %c0_i32_1 = arith.constant 0 : i32
    return %c0_i32, %c0_i32_0 : i32, i32
  }
  func.func @transform_8(%arg0: i32) -> (i32, i32) {
    %c0_i32 = arith.constant 0 : i32
    %c0_i32_0 = arith.constant 0 : i32
    %c0_i32_1 = arith.constant 0 : i32
    return %c0_i32, %c0_i32_0 : i32, i32
  }
  func.func @transform_9(%arg0: i32) -> (i32, i32) {
    %c0_i32 = arith.constant 0 : i32
    %c0_i32_0 = arith.constant 0 : i32
    return %arg0, %c0_i32 : i32, i32
  }
}

</mosaic_0001>

<llo_original>
// kernel: rendering_forward.1
$region0: #{rendering_forward.1}
  #allocation0 [shape = 'u32[]', space=smem, size = 0x4, offset = 0x4, fixed_abs, tag = 'smem constant byte address 0x4 - core index']
  #allocation1 [shape = 'u32[144,128]{1,0:T(1,128)}', space=vmem, size = 0x12000, scoped, tag = 'internal scratch']
  %s0 = inlined_call_operand.vmem [shape: bf16[1024,128], index: 0, kind: input, shape index: {}]
  %s1 = inlined_call_operand.hbm [shape: f32[1024,256], index: 1, kind: input, shape index: {}]
  %s2 = inlined_call_operand.vmem [shape: bf16[128,256], index: 2, kind: input, shape index: {}]
  %s3 = inlined_call_operand.vmem [shape: bf16[256,256], index: 3, kind: input, shape index: {}]
  %s4 = inlined_call_operand.vmem [shape: f32[1,256], index: 4, kind: input, shape index: {}]
  %s5 = inlined_call_operand.vmem [shape: bf16[3,256,256], index: 5, kind: input, shape index: {}]
  %s6 = inlined_call_operand.vmem [shape: f32[3,256], index: 6, kind: input, shape index: {}]
  %s7 = inlined_call_operand.vmem [shape: bf16[256,128], index: 7, kind: input, shape index: {}]
  %s8 = inlined_call_operand.vmem [shape: f32[1,128], index: 8, kind: input, shape index: {}]
  %s9 = inlined_call_operand.vmem [shape: bf16[1024,128], index: 9, kind: output, shape index: {}]
  %s10 = sld [smem:[#allocation0]]
  $region73: #{rendering_forward.1} parent=0
    _
  %s12 = ssub.s32 1, %s10
  %s13 = scalar_select 0, %s12, %s10
  $region1: #{rendering_forward.1} parent=0
    #allocation2 [shape = 'u8[1048576]{0}', space=vmem, size = 0x100000, scoped, tag = 'input window, operand 1']
    #allocation3 [shape = 's32[2]{0}', space=sflag, size = 0x8, scoped, tag = 'scoped memory for rendering_forward.1']
    %14 = vsyncpa [#allocation3], 0
    %s15 = scalar_lea.sflag [#allocation3], 1
    %16 = vsyncpa %s15, 0
    loop: start=0, step=1, limit=4
    $region2: #{rendering_forward.1} parent=1 // loop_pre_header
      _
    $region3: #{rendering_forward.1} parent=1 // loop_header
      %s18 = sphi 0, %s22
      %p19 = scmp.ge.s32.totalorder %s18, 4
      %s28 = sphi 0, %s30
      %s31 = sphi 0, %s28
      %s32 = sphi 0, %s31
      %s48 = sphi 0, %s32
      %s54 = sphi 0, %s56
      %s57 = sphi 0, %s54
      %s58 = sphi 0, %s57
      %s74 = sphi 0, %s58
      %s78 = sphi 0, %s78
      %s80 = sphi 0, %s78
      %s81 = sphi 0, %s80
      %s95 = sphi 0, %s81
      %s99 = sphi 0, %s99
      %s101 = sphi 0, %s99
      %s102 = sphi 0, %s101
      %s116 = sphi 0, %s102
      %s120 = sphi 0, %s120
      %s122 = sphi 0, %s120
      %s123 = sphi 0, %s122
      %s137 = sphi 0, %s123
      %s141 = sphi 0, %s141
      %s143 = sphi 0, %s141
      %s144 = sphi 0, %s143
      %s158 = sphi 0, %s144
      %s162 = sphi 0, %s162
      %s164 = sphi 0, %s162
      %s165 = sphi 0, %s164
      %s179 = sphi 0, %s165
      %s183 = sphi 0, %s183
      %s185 = sphi 0, %s183
      %s186 = sphi 0, %s185
      %s200 = sphi 0, %s186
      %s204 = sphi 0, %s204
      %s206 = sphi 0, %s204
      %s207 = sphi 0, %s206
      %s221 = sphi 0, %s207
      %s227 = sphi 0, %s229
      %s230 = sphi 0, %s227
      %s231 = sphi 0, %s230
      %s247 = sphi 0, %s231
    $region4: #{rendering_forward.1} parent=1 // loop_header_branch
      %21 = sbr.rel (%p19) target = $region8
    $region5: #{rendering_forward.1} parent=1 // loop_body
      %s23 = ssub.s32 %s18, 1
      %s24 = ssub.s32 %s18, 2
      %s25 = sadd.s32 %s18, 1
      %s26 = ssub.s32 %s18, %s25
      %p27 = scmp.eq.s32.totalorder %s26, 0
      %s29 = sadd.s32 %s28, 1
      %s30 = scalar_select %p27, %s28, %s29
      %p33 = pneg %p27
      %p34 = scmp.eq.s32.totalorder %s18, 1
      %p35 = por %p33, %p34
      %p36 = scmp.ne.s32.totalorder %s28, %s31
      %p37 = scmp.eq.s32.totalorder %s18, 0
      %p38 = por %p36, %p37
      %p39 = scmp.ne.s32.totalorder %s28, %s31
      %p40 = scmp.eq.s32.totalorder %s23, 1
      %p41 = por %p39, %p40
      %p42 = scmp.ne.s32.totalorder %s31, %s32
      %p43 = scmp.eq.s32.totalorder %s23, 0
      %p44 = por %p42, %p43
      %p45 = scmp.ne.s32.totalorder %s31, %s32
      %p46 = scmp.eq.s32.totalorder %s24, 1
      %p47 = por %p45, %p46
      %p49 = scmp.ne.s32.totalorder %s32, %s48
      %p50 = scmp.eq.s32.totalorder %s24, 0
      %p51 = por %p49, %p50
      %s52 = ssub.s32 %s18, %s25
      %p53 = scmp.eq.s32.totalorder %s52, 0
      %s55 = sadd.s32 %s54, 1
      %s56 = scalar_select %p53, %s54, %s55
      %p59 = pneg %p53
      %p60 = scmp.eq.s32.totalorder %s18, 1
      %p61 = por %p59, %p60
      %p62 = scmp.ne.s32.totalorder %s54, %s57
      %p63 = scmp.eq.s32.totalorder %s18, 0
      %p64 = por %p62, %p63
      %p65 = scmp.ne.s32.totalorder %s54, %s57
      %p66 = scmp.eq.s32.totalorder %s23, 1
      %p67 = por %p65, %p66
      %p68 = scmp.ne.s32.totalorder %s57, %s58
      %p69 = scmp.eq.s32.totalorder %s23, 0
      %p70 = por %p68, %p69
      %p71 = scmp.ne.s32.totalorder %s57, %s58
      %p72 = scmp.eq.s32.totalorder %s24, 1
      %p73 = por %p71, %p72
      %p75 = scmp.ne.s32.totalorder %s58, %s74
      %p76 = scmp.eq.s32.totalorder %s24, 0
      %p77 = por %p75, %p76
      %s79 = sadd.s32 %s78, 1
      %p82 = scmp.eq.s32.totalorder %s18, 1
      %p83 = scmp.ne.s32.totalorder %s78, %s80
      %p84 = scmp.eq.s32.totalorder %s18, 0
      %p85 = por %p83, %p84
      %p86 = scmp.ne.s32.totalorder %s78, %s80
      %p87 = scmp.eq.s32.totalorder %s23, 1
      %p88 = por %p86, %p87
      %p89 = scmp.ne.s32.totalorder %s80, %s81
      %p90 = scmp.eq.s32.totalorder %s23, 0
      %p91 = por %p89, %p90
      %p92 = scmp.ne.s32.totalorder %s80, %s81
      %p93 = scmp.eq.s32.totalorder %s24, 1
      %p94 = por %p92, %p93
      %p96 = scmp.ne.s32.totalorder %s81, %s95
      %p97 = scmp.eq.s32.totalorder %s24, 0
      %p98 = por %p96, %p97
      %s100 = sadd.s32 %s99, 1
      %p103 = scmp.eq.s32.totalorder %s18, 1
      %p104 = scmp.ne.s32.totalorder %s99, %s101
      %p105 = scmp.eq.s32.totalorder %s18, 0
      %p106 = por %p104, %p105
      %p107 = scmp.ne.s32.totalorder %s99, %s101
      %p108 = scmp.eq.s32.totalorder %s23, 1
      %p109 = por %p107, %p108
      %p110 = scmp.ne.s32.totalorder %s101, %s102
      %p111 = scmp.eq.s32.totalorder %s23, 0
      %p112 = por %p110, %p111
      %p113 = scmp.ne.s32.totalorder %s101, %s102
      %p114 = scmp.eq.s32.totalorder %s24, 1
      %p115 = por %p113, %p114
      %p117 = scmp.ne.s32.totalorder %s102, %s116
      %p118 = scmp.eq.s32.totalorder %s24, 0
      %p119 = por %p117, %p118
      %s121 = sadd.s32 %s120, 1
      %p124 = scmp.eq.s32.totalorder %s18, 1
      %p125 = scmp.ne.s32.totalorder %s120, %s122
      %p126 = scmp.eq.s32.totalorder %s18, 0
      %p127 = por %p125, %p126
      %p128 = scmp.ne.s32.totalorder %s120, %s122
      %p129 = scmp.eq.s32.totalorder %s23, 1
      %p130 = por %p128, %p129
      %p131 = scmp.ne.s32.totalorder %s122, %s123
      %p132 = scmp.eq.s32.totalorder %s23, 0
      %p133 = por %p131, %p132
      %p134 = scmp.ne.s32.totalorder %s122, %s123
      %p135 = scmp.eq.s32.totalorder %s24, 1
      %p136 = por %p134, %p135
      %p138 = scmp.ne.s32.totalorder %s123, %s137
      %p139 = scmp.eq.s32.totalorder %s24, 0
      %p140 = por %p138, %p139
      %s142 = sadd.s32 %s141, 1
      %p145 = scmp.eq.s32.totalorder %s18, 1
      %p146 = scmp.ne.s32.totalorder %s141, %s143
      %p147 = scmp.eq.s32.totalorder %s18, 0
      %p148 = por %p146, %p147
      %p149 = scmp.ne.s32.totalorder %s141, %s143
      %p150 = scmp.eq.s32.totalorder %s23, 1
      %p151 = por %p149, %p150
      %p152 = scmp.ne.s32.totalorder %s143, %s144
      %p153 = scmp.eq.s32.totalorder %s23, 0
      %p154 = por %p152, %p153
      %p155 = scmp.ne.s32.totalorder %s143, %s144
      %p156 = scmp.eq.s32.totalorder %s24, 1
      %p157 = por %p155, %p156
      %p159 = scmp.ne.s32.totalorder %s144, %s158
      %p160 = scmp.eq.s32.totalorder %s24, 0
      %p161 = por %p159, %p160
      %s163 = sadd.s32 %s162, 1
      %p166 = scmp.eq.s32.totalorder %s18, 1
      %p167 = scmp.ne.s32.totalorder %s162, %s164
      %p168 = scmp.eq.s32.totalorder %s18, 0
      %p169 = por %p167, %p168
      %p170 = scmp.ne.s32.totalorder %s162, %s164
      %p171 = scmp.eq.s32.totalorder %s23, 1
      %p172 = por %p170, %p171
      %p173 = scmp.ne.s32.totalorder %s164, %s165
      %p174 = scmp.eq.s32.totalorder %s23, 0
      %p175 = por %p173, %p174
      %p176 = scmp.ne.s32.totalorder %s164, %s165
      %p177 = scmp.eq.s32.totalorder %s24, 1
      %p178 = por %p176, %p177
      %p180 = scmp.ne.s32.totalorder %s165, %s179
      %p181 = scmp.eq.s32.totalorder %s24, 0
      %p182 = por %p180, %p181
      %s184 = sadd.s32 %s183, 1
      %p187 = scmp.eq.s32.totalorder %s18, 1
      %p188 = scmp.ne.s32.totalorder %s183, %s185
      %p189 = scmp.eq.s32.totalorder %s18, 0
      %p190 = por %p188, %p189
      %p191 = scmp.ne.s32.totalorder %s183, %s185
      %p192 = scmp.eq.s32.totalorder %s23, 1
      %p193 = por %p191, %p192
      %p194 = scmp.ne.s32.totalorder %s185, %s186
      %p195 = scmp.eq.s32.totalorder %s23, 0
      %p196 = por %p194, %p195
      %p197 = scmp.ne.s32.totalorder %s185, %s186
      %p198 = scmp.eq.s32.totalorder %s24, 1
      %p199 = por %p197, %p198
      %p201 = scmp.ne.s32.totalorder %s186, %s200
      %p202 = scmp.eq.s32.totalorder %s24, 0
      %p203 = por %p201, %p202
      %s205 = sadd.s32 %s204, 1
      %p208 = scmp.eq.s32.totalorder %s18, 1
      %p209 = scmp.ne.s32.totalorder %s204, %s206
      %p210 = scmp.eq.s32.totalorder %s18, 0
      %p211 = por %p209, %p210
      %p212 = scmp.ne.s32.totalorder %s204, %s206
      %p213 = scmp.eq.s32.totalorder %s23, 1
      %p214 = por %p212, %p213
      %p215 = scmp.ne.s32.totalorder %s206, %s207
      %p216 = scmp.eq.s32.totalorder %s23, 0
      %p217 = por %p215, %p216
      %p218 = scmp.ne.s32.totalorder %s206, %s207
      %p219 = scmp.eq.s32.totalorder %s24, 1
      %p220 = por %p218, %p219
      %p222 = scmp.ne.s32.totalorder %s207, %s221
      %p223 = scmp.eq.s32.totalorder %s24, 0
      %p224 = por %p222, %p223
      %s225 = ssub.s32 %s18, %s25
      %p226 = scmp.eq.s32.totalorder %s225, 0
      %s228 = sadd.s32 %s227, 1
      %s229 = scalar_select %p226, %s227, %s228
      %p232 = pneg %p226
      %p233 = scmp.eq.s32.totalorder %s18, 1
      %p234 = por %p232, %p233
      %p235 = scmp.ne.s32.totalorder %s227, %s230
      %p236 = scmp.eq.s32.totalorder %s18, 0
      %p237 = por %p235, %p236
      %p238 = scmp.ne.s32.totalorder %s227, %s230
      %p239 = scmp.eq.s32.totalorder %s23, 1
      %p240 = por %p238, %p239
      %p241 = scmp.ne.s32.totalorder %s230, %s231
      %p242 = scmp.eq.s32.totalorder %s23, 0
      %p243 = por %p241, %p242
      %p244 = scmp.ne.s32.totalorder %s230, %s231
      %p245 = scmp.eq.s32.totalorder %s24, 1
      %p246 = por %p244, %p245
      %p248 = scmp.ne.s32.totalorder %s231, %s247
      %p249 = scmp.eq.s32.totalorder %s24, 0
      %p250 = por %p248, %p249
      %p251 = scmp.le.s32.totalorder 1, %s18
      %p252 = scmp.lt.s32.totalorder %s18, 3
      %p253 = pnand %p251, %p252
      %p254 = pneg %p253
      // Predicated region
      $region9: #{rendering_forward.1} parent=5 // pred_check
        _
      $region10: #{rendering_forward.1} parent=5 // pred_check_branch
        %256 = sbr.rel (%p253) target = $region12
      $region11: #{rendering_forward.1} parent=5 // pred_region
        %s257 = ssub.s32 %s18, 1
        // Predicated region
        $region13: #{rendering_forward.1} parent=11 // pred_check
          %p258 = pneg %p91
        $region14: #{rendering_forward.1} parent=11 // pred_check_branch
          %260 = sbr.rel (%p258) target = $region16
        $region15: #{rendering_forward.1} parent=11 // pred_region
          _
        $region16: #{rendering_forward.1} parent=11 // pred_fallthru
          _
        // Predicated region
        $region17: #{rendering_forward.1} parent=11 // pred_check
          %p261 = pneg %p112
        $region18: #{rendering_forward.1} parent=11 // pred_check_branch
          %263 = sbr.rel (%p261) target = $region20
        $region19: #{rendering_forward.1} parent=11 // pred_region
          _
        $region20: #{rendering_forward.1} parent=11 // pred_fallthru
          _
        // Predicated region
        $region21: #{rendering_forward.1} parent=11 // pred_check
          %p264 = pneg %p133
        $region22: #{rendering_forward.1} parent=11 // pred_check_branch
          %266 = sbr.rel (%p264) target = $region24
        $region23: #{rendering_forward.1} parent=11 // pred_region
          _
        $region24: #{rendering_forward.1} parent=11 // pred_fallthru
          _
        // Predicated region
        $region25: #{rendering_forward.1} parent=11 // pred_check
          %p267 = pneg %p154
        $region26: #{rendering_forward.1} parent=11 // pred_check_branch
          %269 = sbr.rel (%p267) target = $region28
        $region27: #{rendering_forward.1} parent=11 // pred_region
          _
        $region28: #{rendering_forward.1} parent=11 // pred_fallthru
          _
        // Predicated region
        $region29: #{rendering_forward.1} parent=11 // pred_check
          %p270 = pneg %p175
        $region30: #{rendering_forward.1} parent=11 // pred_check_branch
          %272 = sbr.rel (%p270) target = $region32
        $region31: #{rendering_forward.1} parent=11 // pred_region
          _
        $region32: #{rendering_forward.1} parent=11 // pred_fallthru
          _
        // Predicated region
        $region33: #{rendering_forward.1} parent=11 // pred_check
          %p273 = pneg %p196
        $region34: #{rendering_forward.1} parent=11 // pred_check_branch
          %275 = sbr.rel (%p273) target = $region36
        $region35: #{rendering_forward.1} parent=11 // pred_region
          _
        $region36: #{rendering_forward.1} parent=11 // pred_fallthru
          _
        // Predicated region
        $region37: #{rendering_forward.1} parent=11 // pred_check
          %p276 = pneg %p217
        $region38: #{rendering_forward.1} parent=11 // pred_check_branch
          %278 = sbr.rel (%p276) target = $region40
        $region39: #{rendering_forward.1} parent=11 // pred_region
          _
        $region40: #{rendering_forward.1} parent=11 // pred_fallthru
          _
      $region12: #{rendering_forward.1} parent=5 // pred_fallthru
        _
      %p279 = scmp.lt.s32.totalorder %s18, 2
      // Predicated region
      $region41: #{rendering_forward.1} parent=5 // pred_check
        %p280 = pneg %p279
      $region42: #{rendering_forward.1} parent=5 // pred_check_branch
        %282 = sbr.rel (%p280) target = $region44
      $region43: #{rendering_forward.1} parent=5 // pred_region
        // Predicated region
        $region45: #{rendering_forward.1} parent=43 // pred_check
          %p283 = pneg %p38
        $region46: #{rendering_forward.1} parent=43 // pred_check_branch
          %285 = sbr.rel (%p283) target = $region48
        $region47: #{rendering_forward.1} parent=43 // pred_region
          %s286 = smul.u32 64, %s18
          %p287 = scmp.lt.s32.totalorder %s286, 127
          %s288 = scalar_select %p287, %s286, 127
          %s289 = smul.addr %s288, 4
          %s290 = scalar_lea.vmem %s0, %s289
          %s291 = smul.u32 64, %s18
        $region48: #{rendering_forward.1} parent=43 // pred_fallthru
          _
        // Predicated region
        $region49: #{rendering_forward.1} parent=43 // pred_check
          %p292 = pneg %p64
        $region50: #{rendering_forward.1} parent=43 // pred_check_branch
          %294 = sbr.rel (%p292) target = $region52
        $region51: #{rendering_forward.1} parent=43 // pred_region
          %s295 = sand.u32 %s54, 1
          %s296 = scalar_lea.sflag [#allocation3], %s295
          %s297 = sand.u32 %s54, 1
          %s298 = smul.addr %s297, 1024
          %s299 = scalar_lea.vmem [#allocation2], %s298
          %s300 = smul.u32 64, %s18
          %s302 = ssub.s32 16384, 16384
          %303 = vsyncadd %s296, %s302
          %s304 = smul.addr %s300, 2
          %s305 = smul.addr %s304, 128
          %s306 = scalar_lea.hbm %s1, %s305
          %s307 = sshll.u32 %s299, 4
          %s308 = int_to_ptr.vmem [resolvable:$true] %s307
          %313 = dma.hbm_to_vmem [thread:$0]  %s306, 16384, %s308, %s296, 256, 256, 16
        $region52: #{rendering_forward.1} parent=43 // pred_fallthru
          _
      $region44: #{rendering_forward.1} parent=5 // pred_fallthru
        _
      %p314 = scmp.le.s32.totalorder 1, %s18
      %p315 = scmp.lt.s32.totalorder %s18, 3
      %p316 = pnand %p314, %p315
      %p317 = pneg %p316
      // Predicated region
      $region53: #{rendering_forward.1} parent=5 // pred_check
        _
      $region54: #{rendering_forward.1} parent=5 // pred_check_branch
        %319 = sbr.rel (%p316) target = $region56
      $region55: #{rendering_forward.1} parent=5 // pred_region
        %s320 = ssub.s32 %s18, 1
        %s321 = sand.u32 %s57, 1
        %s322 = scalar_lea.sflag [#allocation3], %s321
        %s323 = sand.u32 %s57, 1
        %s324 = smul.addr %s323, 1024
        %s325 = scalar_lea.vmem [#allocation2], %s324
        // Predicated region
        $region57: #{rendering_forward.1} parent=55 // pred_check
          %p326 = pneg %p70
        $region58: #{rendering_forward.1} parent=55 // pred_check_branch
          %328 = sbr.rel (%p326) target = $region60
        $region59: #{rendering_forward.1} parent=55 // pred_region
          %329 = dma.done %s322, 16384
        $region60: #{rendering_forward.1} parent=55 // pred_fallthru
          _
        %s330 = smul.u32 64, %s23
        %p331 = scmp.lt.s32.totalorder %s330, 127
        %s332 = scalar_select %p331, %s330, 127
        %s333 = smul.addr %s332, 4
        %s334 = scalar_lea.vmem %s0, %s333
        %p335 = pneg %p44
        %p336 = pneg %p41
        %s337 = sand.u32 %s57, 1
        %s338 = scalar_lea.sflag [#allocation3], %s337
        %s339 = sand.u32 %s57, 1
        %s340 = smul.addr %s339, 1024
        %s341 = scalar_lea.vmem [#allocation2], %s340
        %p342 = pneg %p70
        %p343 = pneg %p67
        %p344 = pneg %p91
        %p345 = pneg %p88
        %p346 = pneg %p112
        %p347 = pneg %p109
        %p348 = pneg %p133
        %p349 = pneg %p130
        %p350 = pneg %p154
        %p351 = pneg %p151
        %p352 = pneg %p175
        %p353 = pneg %p172
        %p354 = pneg %p196
        %p355 = pneg %p193
        %p356 = pneg %p217
        %p357 = pneg %p214
        %p358 = pneg %p243
        %p359 = pneg %p240
        %s360 = smul.u32 64, %s23
        %p361 = scmp.lt.s32.totalorder %s360, 127
        %s362 = scalar_select %p361, %s360, 127
        %s363 = smul.addr %s362, 4
        %s364 = scalar_lea.vmem %s9, %s363
        %s365 = smul.u32 64, %s23
        %p366 = scmp.lt.s32.totalorder %s365, 127
        %s367 = scalar_select %p366, %s365, 127
        %s368 = smul.addr %s367, 4
        %s369 = scalar_lea.vmem %s0, %s368
        %s370 = smul.u32 64, %s23
        %s371 = smul.u32 64, %s23
        %s372 = smul.u32 64, %s23
        %p373 = scmp.lt.s32.totalorder %s372, 127
        %s374 = scalar_select %p373, %s372, 127
        %s375 = smul.addr %s374, 4
        %s376 = scalar_lea.vmem %s9, %s375
        %s377 = smul.u32 64, %s23
        %v379 = vld [vmem:[%s325] sm:$0xff]
        %v380 = vld [vmem:[%s325 + $0x8] sm:$0xff]
        %v381 = vld [vmem:[%s325 + $0x10] sm:$0xff]
        %v382 = vld [vmem:[%s325 + $0x18] sm:$0xff]
        %v383 = vld [vmem:[%s325 + $0x20] sm:$0xff]
        %v384 = vld [vmem:[%s325 + $0x28] sm:$0xff]
        %v385 = vld [vmem:[%s325 + $0x30] sm:$0xff]
        %v386 = vld [vmem:[%s325 + $0x38] sm:$0xff]
        %v387 = vld [vmem:[%s325 + $0x40] sm:$0xff]
        %v388 = vld [vmem:[%s325 + $0x48] sm:$0xff]
        %v389 = vld [vmem:[%s325 + $0x50] sm:$0xff]
        %v390 = vld [vmem:[%s325 + $0x58] sm:$0xff]
        %v391 = vld [vmem:[%s325 + $0x60] sm:$0xff]
        %v392 = vld [vmem:[%s325 + $0x68] sm:$0xff]
        %v393 = vld [vmem:[%s325 + $0x70] sm:$0xff]
        %v394 = vld [vmem:[%s325 + $0x78] sm:$0xff]
        %v395 = vld [vmem:[%s325 + $0x80] sm:$0xff]
        %v396 = vld [vmem:[%s325 + $0x88] sm:$0xff]
        %v397 = vld [vmem:[%s325 + $0x90] sm:$0xff]
        %v398 = vld [vmem:[%s325 + $0x98] sm:$0xff]
        %v399 = vld [vmem:[%s325 + $0xa0] sm:$0xff]
        %v400 = vld [vmem:[%s325 + $0xa8] sm:$0xff]
        %v401 = vld [vmem:[%s325 + $0xb0] sm:$0xff]
        %v402 = vld [vmem:[%s325 + $0xb8] sm:$0xff]
        %v403 = vld [vmem:[%s325 + $0xc0] sm:$0xff]
        %v404 = vld [vmem:[%s325 + $0xc8] sm:$0xff]
        %v405 = vld [vmem:[%s325 + $0xd0] sm:$0xff]
        %v406 = vld [vmem:[%s325 + $0xd8] sm:$0xff]
        %v407 = vld [vmem:[%s325 + $0xe0] sm:$0xff]
        %v408 = vld [vmem:[%s325 + $0xe8] sm:$0xff]
        %v409 = vld [vmem:[%s325 + $0xf0] sm:$0xff]
        %v410 = vld [vmem:[%s325 + $0xf8] sm:$0xff]
        %v411 = vld [vmem:[%s325 + $0x100] sm:$0xff]
        %v412 = vld [vmem:[%s325 + $0x108] sm:$0xff]
        %v413 = vld [vmem:[%s325 + $0x110] sm:$0xff]
        %v414 = vld [vmem:[%s325 + $0x118] sm:$0xff]
        %v415 = vld [vmem:[%s325 + $0x120] sm:$0xff]
        %v416 = vld [vmem:[%s325 + $0x128] sm:$0xff]
        %v417 = vld [vmem:[%s325 + $0x130] sm:$0xff]
        %v418 = vld [vmem:[%s325 + $0x138] sm:$0xff]
        %v419 = vld [vmem:[%s325 + $0x140] sm:$0xff]
        %v420 = vld [vmem:[%s325 + $0x148] sm:$0xff]
        %v421 = vld [vmem:[%s325 + $0x150] sm:$0xff]
        %v422 = vld [vmem:[%s325 + $0x158] sm:$0xff]
        %v423 = vld [vmem:[%s325 + $0x160] sm:$0xff]
        %v424 = vld [vmem:[%s325 + $0x168] sm:$0xff]
        %v425 = vld [vmem:[%s325 + $0x170] sm:$0xff]
        %v426 = vld [vmem:[%s325 + $0x178] sm:$0xff]
        %v427 = vld [vmem:[%s325 + $0x180] sm:$0xff]
        %v428 = vld [vmem:[%s325 + $0x188] sm:$0xff]
        %v429 = vld [vmem:[%s325 + $0x190] sm:$0xff]
        %v430 = vld [vmem:[%s325 + $0x198] sm:$0xff]
        %v431 = vld [vmem:[%s325 + $0x1a0] sm:$0xff]
        %v432 = vld [vmem:[%s325 + $0x1a8] sm:$0xff]
        %v433 = vld [vmem:[%s325 + $0x1b0] sm:$0xff]
        %v434 = vld [vmem:[%s325 + $0x1b8] sm:$0xff]
        %v435 = vld [vmem:[%s325 + $0x1c0] sm:$0xff]
        %v436 = vld [vmem:[%s325 + $0x1c8] sm:$0xff]
        %v437 = vld [vmem:[%s325 + $0x1d0] sm:$0xff]
        %v438 = vld [vmem:[%s325 + $0x1d8] sm:$0xff]
        %v439 = vld [vmem:[%s325 + $0x1e0] sm:$0xff]
        %v440 = vld [vmem:[%s325 + $0x1e8] sm:$0xff]
        %v441 = vld [vmem:[%s325 + $0x1f0] sm:$0xff]
        %v442 = vld [vmem:[%s325 + $0x1f8] sm:$0xff]
        %v443 = vld [vmem:[%s325 + $0x200] sm:$0xff]
        %v444 = vld [vmem:[%s325 + $0x208] sm:$0xff]
        %v445 = vld [vmem:[%s325 + $0x210] sm:$0xff]
        %v446 = vld [vmem:[%s325 + $0x218] sm:$0xff]
        %v447 = vld [vmem:[%s325 + $0x220] sm:$0xff]
        %v448 = vld [vmem:[%s325 + $0x228] sm:$0xff]
        %v449 = vld [vmem:[%s325 + $0x230] sm:$0xff]
        %v450 = vld [vmem:[%s325 + $0x238] sm:$0xff]
        %v451 = vld [vmem:[%s325 + $0x240] sm:$0xff]
        %v452 = vld [vmem:[%s325 + $0x248] sm:$0xff]
        %v453 = vld [vmem:[%s325 + $0x250] sm:$0xff]
        %v454 = vld [vmem:[%s325 + $0x258] sm:$0xff]
        %v455 = vld [vmem:[%s325 + $0x260] sm:$0xff]
        %v456 = vld [vmem:[%s325 + $0x268] sm:$0xff]
        %v457 = vld [vmem:[%s325 + $0x270] sm:$0xff]
        %v458 = vld [vmem:[%s325 + $0x278] sm:$0xff]
        %v459 = vld [vmem:[%s325 + $0x280] sm:$0xff]
        %v460 = vld [vmem:[%s325 + $0x288] sm:$0xff]
        %v461 = vld [vmem:[%s325 + $0x290] sm:$0xff]
        %v462 = vld [vmem:[%s325 + $0x298] sm:$0xff]
        %v463 = vld [vmem:[%s325 + $0x2a0] sm:$0xff]
        %v464 = vld [vmem:[%s325 + $0x2a8] sm:$0xff]
        %v465 = vld [vmem:[%s325 + $0x2b0] sm:$0xff]
        %v466 = vld [vmem:[%s325 + $0x2b8] sm:$0xff]
        %v467 = vld [vmem:[%s325 + $0x2c0] sm:$0xff]
        %v468 = vld [vmem:[%s325 + $0x2c8] sm:$0xff]
        %v469 = vld [vmem:[%s325 + $0x2d0] sm:$0xff]
        %v470 = vld [vmem:[%s325 + $0x2d8] sm:$0xff]
        %v471 = vld [vmem:[%s325 + $0x2e0] sm:$0xff]
        %v472 = vld [vmem:[%s325 + $0x2e8] sm:$0xff]
        %v473 = vld [vmem:[%s325 + $0x2f0] sm:$0xff]
        %v474 = vld [vmem:[%s325 + $0x2f8] sm:$0xff]
        %v475 = vld [vmem:[%s325 + $0x300] sm:$0xff]
        %v476 = vld [vmem:[%s325 + $0x308] sm:$0xff]
        %v477 = vld [vmem:[%s325 + $0x310] sm:$0xff]
        %v478 = vld [vmem:[%s325 + $0x318] sm:$0xff]
        %v479 = vld [vmem:[%s325 + $0x320] sm:$0xff]
        %v480 = vld [vmem:[%s325 + $0x328] sm:$0xff]
        %v481 = vld [vmem:[%s325 + $0x330] sm:$0xff]
        %v482 = vld [vmem:[%s325 + $0x338] sm:$0xff]
        %v483 = vld [vmem:[%s325 + $0x340] sm:$0xff]
        %v484 = vld [vmem:[%s325 + $0x348] sm:$0xff]
        %v485 = vld [vmem:[%s325 + $0x350] sm:$0xff]
        %v486 = vld [vmem:[%s325 + $0x358] sm:$0xff]
        %v487 = vld [vmem:[%s325 + $0x360] sm:$0xff]
        %v488 = vld [vmem:[%s325 + $0x368] sm:$0xff]
        %v489 = vld [vmem:[%s325 + $0x370] sm:$0xff]
        %v490 = vld [vmem:[%s325 + $0x378] sm:$0xff]
        %v491 = vld [vmem:[%s325 + $0x380] sm:$0xff]
        %v492 = vld [vmem:[%s325 + $0x388] sm:$0xff]
        %v493 = vld [vmem:[%s325 + $0x390] sm:$0xff]
        %v494 = vld [vmem:[%s325 + $0x398] sm:$0xff]
        %v495 = vld [vmem:[%s325 + $0x3a0] sm:$0xff]
        %v496 = vld [vmem:[%s325 + $0x3a8] sm:$0xff]
        %v497 = vld [vmem:[%s325 + $0x3b0] sm:$0xff]
        %v498 = vld [vmem:[%s325 + $0x3b8] sm:$0xff]
        %v499 = vld [vmem:[%s325 + $0x3c0] sm:$0xff]
        %v500 = vld [vmem:[%s325 + $0x3c8] sm:$0xff]
        %v501 = vld [vmem:[%s325 + $0x3d0] sm:$0xff]
        %v502 = vld [vmem:[%s325 + $0x3d8] sm:$0xff]
        %v503 = vld [vmem:[%s325 + $0x3e0] sm:$0xff]
        %v504 = vld [vmem:[%s325 + $0x3e8] sm:$0xff]
        %v505 = vld [vmem:[%s325 + $0x3f0] sm:$0xff]
        %v506 = vld [vmem:[%s325 + $0x3f8] sm:$0xff]
        %v507 = vpack.c.bf16 %v381, %v379
        %v508 = vpack.c.bf16 %v382, %v380
        %v509 = vpack.c.bf16 %v385, %v383
        %v510 = vpack.c.bf16 %v386, %v384
        %v511 = vpack.c.bf16 %v389, %v387
        %v512 = vpack.c.bf16 %v390, %v388
        %v513 = vpack.c.bf16 %v393, %v391
        %v514 = vpack.c.bf16 %v394, %v392
        %v515 = vpack.c.bf16 %v397, %v395
        %v516 = vpack.c.bf16 %v398, %v396
        %v517 = vpack.c.bf16 %v401, %v399
        %v518 = vpack.c.bf16 %v402, %v400
        %v519 = vpack.c.bf16 %v405, %v403
        %v520 = vpack.c.bf16 %v406, %v404
        %v521 = vpack.c.bf16 %v409, %v407
        %v522 = vpack.c.bf16 %v410, %v408
        %v523 = vpack.c.bf16 %v413, %v411
        %v524 = vpack.c.bf16 %v414, %v412
        %v525 = vpack.c.bf16 %v417, %v415
        %v526 = vpack.c.bf16 %v418, %v416
        %v527 = vpack.c.bf16 %v421, %v419
        %v528 = vpack.c.bf16 %v422, %v420
        %v529 = vpack.c.bf16 %v425, %v423
        %v530 = vpack.c.bf16 %v426, %v424
        %v531 = vpack.c.bf16 %v429, %v427
        %v532 = vpack.c.bf16 %v430, %v428
        %v533 = vpack.c.bf16 %v433, %v431
        %v534 = vpack.c.bf16 %v434, %v432
        %v535 = vpack.c.bf16 %v437, %v435
        %v536 = vpack.c.bf16 %v438, %v436
        %v537 = vpack.c.bf16 %v441, %v439
        %v538 = vpack.c.bf16 %v442, %v440
        %v539 = vpack.c.bf16 %v445, %v443
        %v540 = vpack.c.bf16 %v446, %v444
        %v541 = vpack.c.bf16 %v449, %v447
        %v542 = vpack.c.bf16 %v450, %v448
        %v543 = vpack.c.bf16 %v453, %v451
        %v544 = vpack.c.bf16 %v454, %v452
        %v545 = vpack.c.bf16 %v457, %v455
        %v546 = vpack.c.bf16 %v458, %v456
        %v547 = vpack.c.bf16 %v461, %v459
        %v548 = vpack.c.bf16 %v462, %v460
        %v549 = vpack.c.bf16 %v465, %v463
        %v550 = vpack.c.bf16 %v466, %v464
        %v551 = vpack.c.bf16 %v469, %v467
        %v552 = vpack.c.bf16 %v470, %v468
        %v553 = vpack.c.bf16 %v473, %v471
        %v554 = vpack.c.bf16 %v474, %v472
        %v555 = vpack.c.bf16 %v477, %v475
        %v556 = vpack.c.bf16 %v478, %v476
        %v557 = vpack.c.bf16 %v481, %v479
        %v558 = vpack.c.bf16 %v482, %v480
        %v559 = vpack.c.bf16 %v485, %v483
        %v560 = vpack.c.bf16 %v486, %v484
        %v561 = vpack.c.bf16 %v489, %v487
        %v562 = vpack.c.bf16 %v490, %v488
        %v563 = vpack.c.bf16 %v493, %v491
        %v564 = vpack.c.bf16 %v494, %v492
        %v565 = vpack.c.bf16 %v497, %v495
        %v566 = vpack.c.bf16 %v498, %v496
        %v567 = vpack.c.bf16 %v501, %v499
        %v568 = vpack.c.bf16 %v502, %v500
        %v569 = vpack.c.bf16 %v505, %v503
        %v570 = vpack.c.bf16 %v506, %v504
        %v571 = vld [vmem:[%s369] sm:$0xf]
        %v572 = vld [vmem:[%s369 + $0x4] sm:$0xf]
        %v573 = vld [vmem:[%s369 + $0x8] sm:$0xf]
        %v574 = vld [vmem:[%s369 + $0xc] sm:$0xf]
        %v575 = vld [vmem:[%s369 + $0x10] sm:$0xf]
        %v576 = vld [vmem:[%s369 + $0x14] sm:$0xf]
        %v577 = vld [vmem:[%s369 + $0x18] sm:$0xf]
        %v578 = vld [vmem:[%s369 + $0x1c] sm:$0xf]
        %v579 = vld [vmem:[%s369 + $0x20] sm:$0xf]
        %v580 = vld [vmem:[%s369 + $0x24] sm:$0xf]
        %v581 = vld [vmem:[%s369 + $0x28] sm:$0xf]
        %v582 = vld [vmem:[%s369 + $0x2c] sm:$0xf]
        %v583 = vld [vmem:[%s369 + $0x30] sm:$0xf]
        %v584 = vld [vmem:[%s369 + $0x34] sm:$0xf]
        %v585 = vld [vmem:[%s369 + $0x38] sm:$0xf]
        %v586 = vld [vmem:[%s369 + $0x3c] sm:$0xf]
        %v587 = vld [vmem:[%s369 + $0x40] sm:$0xf]
        %v588 = vld [vmem:[%s369 + $0x44] sm:$0xf]
        %v589 = vld [vmem:[%s369 + $0x48] sm:$0xf]
        %v590 = vld [vmem:[%s369 + $0x4c] sm:$0xf]
        %v591 = vld [vmem:[%s369 + $0x50] sm:$0xf]
        %v592 = vld [vmem:[%s369 + $0x54] sm:$0xf]
        %v593 = vld [vmem:[%s369 + $0x58] sm:$0xf]
        %v594 = vld [vmem:[%s369 + $0x5c] sm:$0xf]
        %v595 = vld [vmem:[%s369 + $0x60] sm:$0xf]
        %v596 = vld [vmem:[%s369 + $0x64] sm:$0xf]
        %v597 = vld [vmem:[%s369 + $0x68] sm:$0xf]
        %v598 = vld [vmem:[%s369 + $0x6c] sm:$0xf]
        %v599 = vld [vmem:[%s369 + $0x70] sm:$0xf]
        %v600 = vld [vmem:[%s369 + $0x74] sm:$0xf]
        %v601 = vld [vmem:[%s369 + $0x78] sm:$0xf]
        %v602 = vld [vmem:[%s369 + $0x7c] sm:$0xf]
        %v603 = vld [vmem:[%s369 + $0x80] sm:$0xf]
        %v604 = vld [vmem:[%s369 + $0x84] sm:$0xf]
        %v605 = vld [vmem:[%s369 + $0x88] sm:$0xf]
        %v606 = vld [vmem:[%s369 + $0x8c] sm:$0xf]
        %v607 = vld [vmem:[%s369 + $0x90] sm:$0xf]
        %v608 = vld [vmem:[%s369 + $0x94] sm:$0xf]
        %v609 = vld [vmem:[%s369 + $0x98] sm:$0xf]
        %v610 = vld [vmem:[%s369 + $0x9c] sm:$0xf]
        %v611 = vld [vmem:[%s369 + $0xa0] sm:$0xf]
        %v612 = vld [vmem:[%s369 + $0xa4] sm:$0xf]
        %v613 = vld [vmem:[%s369 + $0xa8] sm:$0xf]
        %v614 = vld [vmem:[%s369 + $0xac] sm:$0xf]
        %v615 = vld [vmem:[%s369 + $0xb0] sm:$0xf]
        %v616 = vld [vmem:[%s369 + $0xb4] sm:$0xf]
        %v617 = vld [vmem:[%s369 + $0xb8] sm:$0xf]
        %v618 = vld [vmem:[%s369 + $0xbc] sm:$0xf]
        %v619 = vld [vmem:[%s369 + $0xc0] sm:$0xf]
        %v620 = vld [vmem:[%s369 + $0xc4] sm:$0xf]
        %v621 = vld [vmem:[%s369 + $0xc8] sm:$0xf]
        %v622 = vld [vmem:[%s369 + $0xcc] sm:$0xf]
        %v623 = vld [vmem:[%s369 + $0xd0] sm:$0xf]
        %v624 = vld [vmem:[%s369 + $0xd4] sm:$0xf]
        %v625 = vld [vmem:[%s369 + $0xd8] sm:$0xf]
        %v626 = vld [vmem:[%s369 + $0xdc] sm:$0xf]
        %v627 = vld [vmem:[%s369 + $0xe0] sm:$0xf]
        %v628 = vld [vmem:[%s369 + $0xe4] sm:$0xf]
        %v629 = vld [vmem:[%s369 + $0xe8] sm:$0xf]
        %v630 = vld [vmem:[%s369 + $0xec] sm:$0xf]
        %v631 = vld [vmem:[%s369 + $0xf0] sm:$0xf]
        %v632 = vld [vmem:[%s369 + $0xf4] sm:$0xf]
        %v633 = vld [vmem:[%s369 + $0xf8] sm:$0xf]
        %v634 = vld [vmem:[%s369 + $0xfc] sm:$0xf]
        %v635 = vld [vmem:[%s3] sm:$0xff]
        %v636 = vld [vmem:[%s3 + $0x8] sm:$0xff]
        %v637 = vld [vmem:[%s3 + $0x10] sm:$0xff]
        %v638 = vld [vmem:[%s3 + $0x18] sm:$0xff]
        %v639 = vld [vmem:[%s3 + $0x20] sm:$0xff]
        %v640 = vld [vmem:[%s3 + $0x28] sm:$0xff]
        %v641 = vld [vmem:[%s3 + $0x30] sm:$0xff]
        %v642 = vld [vmem:[%s3 + $0x38] sm:$0xff]
        %v643 = vld [vmem:[%s3 + $0x40] sm:$0xff]
        %v644 = vld [vmem:[%s3 + $0x48] sm:$0xff]
        %v645 = vld [vmem:[%s3 + $0x50] sm:$0xff]
        %v646 = vld [vmem:[%s3 + $0x58] sm:$0xff]
        %v647 = vld [vmem:[%s3 + $0x60] sm:$0xff]
        %v648 = vld [vmem:[%s3 + $0x68] sm:$0xff]
        %v649 = vld [vmem:[%s3 + $0x70] sm:$0xff]
        %v650 = vld [vmem:[%s3 + $0x78] sm:$0xff]
        %v651 = vld [vmem:[%s3 + $0x80] sm:$0xff]
        %v652 = vld [vmem:[%s3 + $0x88] sm:$0xff]
        %v653 = vld [vmem:[%s3 + $0x90] sm:$0xff]
        %v654 = vld [vmem:[%s3 + $0x98] sm:$0xff]
        %v655 = vld [vmem:[%s3 + $0xa0] sm:$0xff]
        %v656 = vld [vmem:[%s3 + $0xa8] sm:$0xff]
        %v657 = vld [vmem:[%s3 + $0xb0] sm:$0xff]
        %v658 = vld [vmem:[%s3 + $0xb8] sm:$0xff]
        %v659 = vld [vmem:[%s3 + $0xc0] sm:$0xff]
        %v660 = vld [vmem:[%s3 + $0xc8] sm:$0xff]
        %v661 = vld [vmem:[%s3 + $0xd0] sm:$0xff]
        %v662 = vld [vmem:[%s3 + $0xd8] sm:$0xff]
        %v663 = vld [vmem:[%s3 + $0xe0] sm:$0xff]
        %v664 = vld [vmem:[%s3 + $0xe8] sm:$0xff]
        %v665 = vld [vmem:[%s3 + $0xf0] sm:$0xff]
        %v666 = vld [vmem:[%s3 + $0xf8] sm:$0xff]
        %v667 = vld [vmem:[%s2] sm:$0xff]
        %v668 = vld [vmem:[%s2 + $0x8] sm:$0xff]
        %v669 = vld [vmem:[%s2 + $0x10] sm:$0xff]
        %v670 = vld [vmem:[%s2 + $0x18] sm:$0xff]
        %v671 = vld [vmem:[%s2 + $0x20] sm:$0xff]
        %v672 = vld [vmem:[%s2 + $0x28] sm:$0xff]
        %v673 = vld [vmem:[%s2 + $0x30] sm:$0xff]
        %v674 = vld [vmem:[%s2 + $0x38] sm:$0xff]
        %v675 = vld [vmem:[%s2 + $0x40] sm:$0xff]
        %v676 = vld [vmem:[%s2 + $0x48] sm:$0xff]
        %v677 = vld [vmem:[%s2 + $0x50] sm:$0xff]
        %v678 = vld [vmem:[%s2 + $0x58] sm:$0xff]
        %v679 = vld [vmem:[%s2 + $0x60] sm:$0xff]
        %v680 = vld [vmem:[%s2 + $0x68] sm:$0xff]
        %v681 = vld [vmem:[%s2 + $0x70] sm:$0xff]
        %v682 = vld [vmem:[%s2 + $0x78] sm:$0xff]
        %v747 = vunpack.c.l.b16 %v571
        %v748 = vunpack.c.l.b16 %v572
        %v749 = vunpack.c.l.b16 %v573
        %v750 = vunpack.c.l.b16 %v574
        %v751 = vunpack.c.l.b16 %v575
        %v752 = vunpack.c.l.b16 %v576
        %v753 = vunpack.c.l.b16 %v577
        %v754 = vunpack.c.l.b16 %v578
        %v755 = vunpack.c.l.b16 %v579
        %v756 = vunpack.c.l.b16 %v580
        %v757 = vunpack.c.l.b16 %v581
        %v758 = vunpack.c.l.b16 %v582
        %v759 = vunpack.c.l.b16 %v583
        %v760 = vunpack.c.l.b16 %v584
        %v761 = vunpack.c.l.b16 %v585
        %v762 = vunpack.c.l.b16 %v586
        %v763 = vunpack.c.l.b16 %v587
        %v764 = vunpack.c.l.b16 %v588
        %v765 = vunpack.c.l.b16 %v589
        %v766 = vunpack.c.l.b16 %v590
        %v767 = vunpack.c.l.b16 %v591
        %v768 = vunpack.c.l.b16 %v592
        %v769 = vunpack.c.l.b16 %v593
        %v770 = vunpack.c.l.b16 %v594
        %v771 = vunpack.c.l.b16 %v595
        %v772 = vunpack.c.l.b16 %v596
        %v773 = vunpack.c.l.b16 %v597
        %v774 = vunpack.c.l.b16 %v598
        %v775 = vunpack.c.l.b16 %v599
        %v776 = vunpack.c.l.b16 %v600
        %v777 = vunpack.c.l.b16 %v601
        %v778 = vunpack.c.l.b16 %v602
        %v779 = vunpack.c.l.b16 %v603
        %v780 = vunpack.c.l.b16 %v604
        %v781 = vunpack.c.l.b16 %v605
        %v782 = vunpack.c.l.b16 %v606
        %v783 = vunpack.c.l.b16 %v607
        %v784 = vunpack.c.l.b16 %v608
        %v785 = vunpack.c.l.b16 %v609
        %v786 = vunpack.c.l.b16 %v610
        %v787 = vunpack.c.l.b16 %v611
        %v788 = vunpack.c.l.b16 %v612
        %v789 = vunpack.c.l.b16 %v613
        %v790 = vunpack.c.l.b16 %v614
        %v791 = vunpack.c.l.b16 %v615
        %v792 = vunpack.c.l.b16 %v616
        %v793 = vunpack.c.l.b16 %v617
        %v794 = vunpack.c.l.b16 %v618
        %v795 = vunpack.c.l.b16 %v619
        %v796 = vunpack.c.l.b16 %v620
        %v797 = vunpack.c.l.b16 %v621
        %v798 = vunpack.c.l.b16 %v622
        %v799 = vunpack.c.l.b16 %v623
        %v800 = vunpack.c.l.b16 %v624
        %v801 = vunpack.c.l.b16 %v625
        %v802 = vunpack.c.l.b16 %v626
        %v803 = vunpack.c.l.b16 %v627
        %v804 = vunpack.c.l.b16 %v628
        %v805 = vunpack.c.l.b16 %v629
        %v806 = vunpack.c.l.b16 %v630
        %v807 = vunpack.c.l.b16 %v631
        %v808 = vunpack.c.l.b16 %v632
        %v809 = vunpack.c.l.b16 %v633
        %v810 = vunpack.c.l.b16 %v634
        %v811 = vpack.c.b16 %v748, %v747
        %v812 = vpack.c.b16 %v750, %v749
        %v813 = vpack.c.b16 %v752, %v751
        %v814 = vpack.c.b16 %v754, %v753
        %v815 = vpack.c.b16 %v756, %v755
        %v816 = vpack.c.b16 %v758, %v757
        %v817 = vpack.c.b16 %v760, %v759
        %v818 = vpack.c.b16 %v762, %v761
        %v819 = vpack.c.b16 %v764, %v763
        %v820 = vpack.c.b16 %v766, %v765
        %v821 = vpack.c.b16 %v768, %v767
        %v822 = vpack.c.b16 %v770, %v769
        %v823 = vpack.c.b16 %v772, %v771
        %v824 = vpack.c.b16 %v774, %v773
        %v825 = vpack.c.b16 %v776, %v775
        %v826 = vpack.c.b16 %v778, %v777
        %v827 = vpack.c.b16 %v780, %v779
        %v828 = vpack.c.b16 %v782, %v781
        %v829 = vpack.c.b16 %v784, %v783
        %v830 = vpack.c.b16 %v786, %v785
        %v831 = vpack.c.b16 %v788, %v787
        %v832 = vpack.c.b16 %v790, %v789
        %v833 = vpack.c.b16 %v792, %v791
        %v834 = vpack.c.b16 %v794, %v793
        %v835 = vpack.c.b16 %v796, %v795
        %v836 = vpack.c.b16 %v798, %v797
        %v837 = vpack.c.b16 %v800, %v799
        %v838 = vpack.c.b16 %v802, %v801
        %v839 = vpack.c.b16 %v804, %v803
        %v840 = vpack.c.b16 %v806, %v805
        %v841 = vpack.c.b16 %v808, %v807
        %v842 = vpack.c.b16 %v810, %v809
        %v891 = vunpack.c.l.b16 %v667
        %v892 = vunpack.c.h.b16 %v667
        %v893 = vunpack.c.l.b16 %v668
        %v894 = vunpack.c.h.b16 %v668
        %v895 = vunpack.c.l.b16 %v669
        %v896 = vunpack.c.h.b16 %v669
        %v897 = vunpack.c.l.b16 %v670
        %v898 = vunpack.c.h.b16 %v670
        %v899 = vunpack.c.l.b16 %v671
        %v900 = vunpack.c.h.b16 %v671
        %v901 = vunpack.c.l.b16 %v672
        %v902 = vunpack.c.h.b16 %v672
        %v903 = vunpack.c.l.b16 %v673
        %v904 = vunpack.c.h.b16 %v673
        %v905 = vunpack.c.l.b16 %v674
        %v906 = vunpack.c.h.b16 %v674
        %v907 = vunpack.c.l.b16 %v675
        %v908 = vunpack.c.h.b16 %v675
        %v909 = vunpack.c.l.b16 %v676
        %v910 = vunpack.c.h.b16 %v676
        %v911 = vunpack.c.l.b16 %v677
        %v912 = vunpack.c.h.b16 %v677
        %v913 = vunpack.c.l.b16 %v678
        %v914 = vunpack.c.h.b16 %v678
        %v915 = vunpack.c.l.b16 %v679
        %v916 = vunpack.c.h.b16 %v679
        %v917 = vunpack.c.l.b16 %v680
        %v918 = vunpack.c.h.b16 %v680
        %v919 = vunpack.c.l.b16 %v681
        %v920 = vunpack.c.h.b16 %v681
        %v921 = vunpack.c.l.b16 %v682
        %v922 = vunpack.c.h.b16 %v682
        %v923 = vpack.c.b16 %v893, %v891
        %v924 = vpack.c.b16 %v894, %v892
        %v925 = vpack.c.b16 %v897, %v895
        %v926 = vpack.c.b16 %v898, %v896
        %v927 = vpack.c.b16 %v901, %v899
        %v928 = vpack.c.b16 %v902, %v900
        %v929 = vpack.c.b16 %v905, %v903
        %v930 = vpack.c.b16 %v906, %v904
        %v931 = vpack.c.b16 %v909, %v907
        %v932 = vpack.c.b16 %v910, %v908
        %v933 = vpack.c.b16 %v913, %v911
        %v934 = vpack.c.b16 %v914, %v912
        %v935 = vpack.c.b16 %v917, %v915
        %v936 = vpack.c.b16 %v918, %v916
        %v937 = vpack.c.b16 %v921, %v919
        %v938 = vpack.c.b16 %v922, %v920
        %955 = vmatprep.subr.bf16.mxu0 %v924
        %956 = vmatpush1.bf16.msra.mxu0 %v923
        %957 = vmatprep.subr.bf16.mxu0 %v926
        %958 = vmatpush1.bf16.msra.mxu0 %v925
        %959 = vmatprep.subr.bf16.mxu0 %v928
        %960 = vmatpush1.bf16.msra.mxu0 %v927
        %961 = vmatprep.subr.bf16.mxu0 %v930
        %962 = vmatpush1.bf16.msra.mxu0 %v929
        %963 = vmatprep.subr.bf16.mxu0 %v932
        %964 = vmatpush1.bf16.msra.mxu0 %v931
        %965 = vmatprep.subr.bf16.mxu0 %v934
        %966 = vmatpush1.bf16.msra.mxu0 %v933
        %967 = vmatprep.subr.bf16.mxu0 %v936
        %968 = vmatpush1.bf16.msra.mxu0 %v935
        %969 = vmatprep.subr.bf16.mxu0 %v938
        %970 = vmatpush1.bf16.msra.mxu0 %v937
        %971 = vmatprep.subr.bf16.mxu0 0
        %972 = vmatpush1.bf16.msra.mxu0 0
        %973 = vmatprep.subr.bf16.mxu0 0
        %974 = vmatpush1.bf16.msra.mxu0 0
        %975 = vmatprep.subr.bf16.mxu0 0
        %976 = vmatpush1.bf16.msra.mxu0 0
        %977 = vmatprep.subr.bf16.mxu0 0
        %978 = vmatpush1.bf16.msra.mxu0 0
        %979 = vmatprep.subr.bf16.mxu0 0
        %980 = vmatpush1.bf16.msra.mxu0 0
        %981 = vmatprep.subr.bf16.mxu0 0
        %982 = vmatpush1.bf16.msra.mxu0 0
        %983 = vmatprep.subr.bf16.mxu0 0
        %984 = vmatpush1.bf16.msra.mxu0 0
        %985 = vmatprep.subr.bf16.mxu0 0
        %986 = vmatpush1.bf16.msra.mxu0 0
        %987 = vmatprep.mubr.bf16.mxu0 0
        %988 = vmatmul.mubr.bf16.gmra.mrb[0].mxu0 %v811
        %v989 = vpop.f32.mrb[0].mxu0
        %v990 = vadd.f32 0.0, %v989
        %v991 = vpop.f32.mrb[0].mxu0
        %v992 = vadd.f32 0.0, %v991
        %v993 = vpop.f32.mrb[0].mxu0
        %v994 = vadd.f32 0.0, %v993
        %v995 = vpop.f32.mrb[0].mxu0
        %v996 = vadd.f32 0.0, %v995
        %997 = vmatprep.mubr.bf16.mxu0 0
        %998 = vmatmul.mubr.bf16.gmra.mrb[0].mxu0 %v812
        %v999 = vpop.f32.mrb[0].mxu0
        %v1000 = vadd.f32 0.0, %v999
        %v1001 = vpop.f32.mrb[0].mxu0
        %v1002 = vadd.f32 0.0, %v1001
        %v1003 = vpop.f32.mrb[0].mxu0
        %v1004 = vadd.f32 0.0, %v1003
        %v1005 = vpop.f32.mrb[0].mxu0
        %v1006 = vadd.f32 0.0, %v1005
        %1007 = vmatprep.mubr.bf16.mxu0 0
        %1008 = vmatmul.mubr.bf16.gmra.mrb[0].mxu0 %v813
        %v1009 = vpop.f32.mrb[0].mxu0
        %v1010 = vadd.f32 0.0, %v1009
        %v1011 = vpop.f32.mrb[0].mxu0
        %v1012 = vadd.f32 0.0, %v1011
        %v1013 = vpop.f32.mrb[0].mxu0
        %v1014 = vadd.f32 0.0, %v1013
        %v1015 = vpop.f32.mrb[0].mxu0
        %v1016 = vadd.f32 0.0, %v1015
        %1017 = vmatprep.mubr.bf16.mxu0 0
        %1018 = vmatmul.mubr.bf16.gmra.mrb[0].mxu0 %v814
        %v1019 = vpop.f32.mrb[0].mxu0
        %v1020 = vadd.f32 0.0, %v1019
        %v1021 = vpop.f32.mrb[0].mxu0
        %v1022 = vadd.f32 0.0, %v1021
        %v1023 = vpop.f32.mrb[0].mxu0
        %v1024 = vadd.f32 0.0, %v1023
        %v1025 = vpop.f32.mrb[0].mxu0
        %v1026 = vadd.f32 0.0, %v1025
        %1027 = vmatprep.mubr.bf16.mxu0 0
        %1028 = vmatmul.mubr.bf16.gmra.mrb[0].mxu0 %v815
        %v1029 = vpop.f32.mrb[0].mxu0
        %v1030 = vadd.f32 0.0, %v1029
        %v1031 = vpop.f32.mrb[0].mxu0
        %v1032 = vadd.f32 0.0, %v1031
        %v1033 = vpop.f32.mrb[0].mxu0
        %v1034 = vadd.f32 0.0, %v1033
        %v1035 = vpop.f32.mrb[0].mxu0
        %v1036 = vadd.f32 0.0, %v1035
        %1037 = vmatprep.mubr.bf16.mxu0 0
        %1038 = vmatmul.mubr.bf16.gmra.mrb[0].mxu0 %v816
        %v1039 = vpop.f32.mrb[0].mxu0
        %v1040 = vadd.f32 0.0, %v1039
        %v1041 = vpop.f32.mrb[0].mxu0
        %v1042 = vadd.f32 0.0, %v1041
        %v1043 = vpop.f32.mrb[0].mxu0
        %v1044 = vadd.f32 0.0, %v1043
        %v1045 = vpop.f32.mrb[0].mxu0
        %v1046 = vadd.f32 0.0, %v1045
        %1047 = vmatprep.mubr.bf16.mxu0 0
        %1048 = vmatmul.mubr.bf16.gmra.mrb[0].mxu0 %v817
        %v1049 = vpop.f32.mrb[0].mxu0
        %v1050 = vadd.f32 0.0, %v1049
        %v1051 = vpop.f32.mrb[0].mxu0
        %v1052 = vadd.f32 0.0, %v1051
        %v1053 = vpop.f32.mrb[0].mxu0
        %v1054 = vadd.f32 0.0, %v1053
        %v1055 = vpop.f32.mrb[0].mxu0
        %v1056 = vadd.f32 0.0, %v1055
        %1057 = vmatprep.mubr.bf16.mxu0 0
        %1058 = vmatmul.mubr.bf16.gmra.mrb[0].mxu0 %v818
        %v1059 = vpop.f32.mrb[0].mxu0
        %v1060 = vadd.f32 0.0, %v1059
        %v1061 = vpop.f32.mrb[0].mxu0
        %v1062 = vadd.f32 0.0, %v1061
        %v1063 = vpop.f32.mrb[0].mxu0
        %v1064 = vadd.f32 0.0, %v1063
        %v1065 = vpop.f32.mrb[0].mxu0
        %v1066 = vadd.f32 0.0, %v1065
        %1067 = vmatprep.mubr.bf16.mxu0 0
        %1068 = vmatmul.mubr.bf16.gmra.mrb[0].mxu0 %v819
        %v1069 = vpop.f32.mrb[0].mxu0
        %v1070 = vadd.f32 0.0, %v1069
        %v1071 = vpop.f32.mrb[0].mxu0
        %v1072 = vadd.f32 0.0, %v1071
        %v1073 = vpop.f32.mrb[0].mxu0
        %v1074 = vadd.f32 0.0, %v1073
        %v1075 = vpop.f32.mrb[0].mxu0
        %v1076 = vadd.f32 0.0, %v1075
        %1077 = vmatprep.mubr.bf16.mxu0 0
        %1078 = vmatmul.mubr.bf16.gmra.mrb[0].mxu0 %v820
        %v1079 = vpop.f32.mrb[0].mxu0
        %v1080 = vadd.f32 0.0, %v1079
        %v1081 = vpop.f32.mrb[0].mxu0
        %v1082 = vadd.f32 0.0, %v1081
        %v1083 = vpop.f32.mrb[0].mxu0
        %v1084 = vadd.f32 0.0, %v1083
        %v1085 = vpop.f32.mrb[0].mxu0
        %v1086 = vadd.f32 0.0, %v1085
        %1087 = vmatprep.mubr.bf16.mxu0 0
        %1088 = vmatmul.mubr.bf16.gmra.mrb[0].mxu0 %v821
        %v1089 = vpop.f32.mrb[0].mxu0
        %v1090 = vadd.f32 0.0, %v1089
        %v1091 = vpop.f32.mrb[0].mxu0
        %v1092 = vadd.f32 0.0, %v1091
        %v1093 = vpop.f32.mrb[0].mxu0
        %v1094 = vadd.f32 0.0, %v1093
        %v1095 = vpop.f32.mrb[0].mxu0
        %v1096 = vadd.f32 0.0, %v1095
        %1097 = vmatprep.mubr.bf16.mxu0 0
        %1098 = vmatmul.mubr.bf16.gmra.mrb[0].mxu0 %v822
        %v1099 = vpop.f32.mrb[0].mxu0
        %v1100 = vadd.f32 0.0, %v1099
        %v1101 = vpop.f32.mrb[0].mxu0
        %v1102 = vadd.f32 0.0, %v1101
        %v1103 = vpop.f32.mrb[0].mxu0
        %v1104 = vadd.f32 0.0, %v1103
        %v1105 = vpop.f32.mrb[0].mxu0
        %v1106 = vadd.f32 0.0, %v1105
        %1107 = vmatprep.mubr.bf16.mxu0 0
        %1108 = vmatmul.mubr.bf16.gmra.mrb[0].mxu0 %v823
        %v1109 = vpop.f32.mrb[0].mxu0
        %v1110 = vadd.f32 0.0, %v1109
        %v1111 = vpop.f32.mrb[0].mxu0
        %v1112 = vadd.f32 0.0, %v1111
        %v1113 = vpop.f32.mrb[0].mxu0
        %v1114 = vadd.f32 0.0, %v1113
        %v1115 = vpop.f32.mrb[0].mxu0
        %v1116 = vadd.f32 0.0, %v1115
        %1117 = vmatprep.mubr.bf16.mxu0 0
        %1118 = vmatmul.mubr.bf16.gmra.mrb[0].mxu0 %v824
        %v1119 = vpop.f32.mrb[0].mxu0
        %v1120 = vadd.f32 0.0, %v1119
        %v1121 = vpop.f32.mrb[0].mxu0
        %v1122 = vadd.f32 0.0, %v1121
        %v1123 = vpop.f32.mrb[0].mxu0
        %v1124 = vadd.f32 0.0, %v1123
        %v1125 = vpop.f32.mrb[0].mxu0
        %v1126 = vadd.f32 0.0, %v1125
        %1127 = vmatprep.mubr.bf16.mxu0 0
        %1128 = vmatmul.mubr.bf16.gmra.mrb[0].mxu0 %v825
        %v1129 = vpop.f32.mrb[0].mxu0
        %v1130 = vadd.f32 0.0, %v1129
        %v1131 = vpop.f32.mrb[0].mxu0
        %v1132 = vadd.f32 0.0, %v1131
        %v1133 = vpop.f32.mrb[0].mxu0
        %v1134 = vadd.f32 0.0, %v1133
        %v1135 = vpop.f32.mrb[0].mxu0
        %v1136 = vadd.f32 0.0, %v1135
        %1137 = vmatprep.mubr.bf16.mxu0 0
        %1138 = vmatmul.mubr.bf16.gmra.mrb[0].mxu0 %v826
        %v1139 = vpop.f32.mrb[0].mxu0
        %v1140 = vadd.f32 0.0, %v1139
        %v1141 = vpop.f32.mrb[0].mxu0
        %v1142 = vadd.f32 0.0, %v1141
        %v1143 = vpop.f32.mrb[0].mxu0
        %v1144 = vadd.f32 0.0, %v1143
        %v1145 = vpop.f32.mrb[0].mxu0
        %v1146 = vadd.f32 0.0, %v1145
        %1147 = vmatprep.mubr.bf16.mxu0 0
        %1148 = vmatmul.mubr.bf16.gmra.mrb[0].mxu0 %v827
        %v1149 = vpop.f32.mrb[0].mxu0
        %v1150 = vadd.f32 0.0, %v1149
        %v1151 = vpop.f32.mrb[0].mxu0
        %v1152 = vadd.f32 0.0, %v1151
        %v1153 = vpop.f32.mrb[0].mxu0
        %v1154 = vadd.f32 0.0, %v1153
        %v1155 = vpop.f32.mrb[0].mxu0
        %v1156 = vadd.f32 0.0, %v1155
        %1157 = vmatprep.mubr.bf16.mxu0 0
        %1158 = vmatmul.mubr.bf16.gmra.mrb[0].mxu0 %v828
        %v1159 = vpop.f32.mrb[0].mxu0
        %v1160 = vadd.f32 0.0, %v1159
        %v1161 = vpop.f32.mrb[0].mxu0
        %v1162 = vadd.f32 0.0, %v1161
        %v1163 = vpop.f32.mrb[0].mxu0
        %v1164 = vadd.f32 0.0, %v1163
        %v1165 = vpop.f32.mrb[0].mxu0
        %v1166 = vadd.f32 0.0, %v1165
        %1167 = vmatprep.mubr.bf16.mxu0 0
        %1168 = vmatmul.mubr.bf16.gmra.mrb[0].mxu0 %v829
        %v1169 = vpop.f32.mrb[0].mxu0
        %v1170 = vadd.f32 0.0, %v1169
        %v1171 = vpop.f32.mrb[0].mxu0
        %v1172 = vadd.f32 0.0, %v1171
        %v1173 = vpop.f32.mrb[0].mxu0
        %v1174 = vadd.f32 0.0, %v1173
        %v1175 = vpop.f32.mrb[0].mxu0
        %v1176 = vadd.f32 0.0, %v1175
        %1177 = vmatprep.mubr.bf16.mxu0 0
        %1178 = vmatmul.mubr.bf16.gmra.mrb[0].mxu0 %v830
        %v1179 = vpop.f32.mrb[0].mxu0
        %v1180 = vadd.f32 0.0, %v1179
        %v1181 = vpop.f32.mrb[0].mxu0
        %v1182 = vadd.f32 0.0, %v1181
        %v1183 = vpop.f32.mrb[0].mxu0
        %v1184 = vadd.f32 0.0, %v1183
        %v1185 = vpop.f32.mrb[0].mxu0
        %v1186 = vadd.f32 0.0, %v1185
        %1187 = vmatprep.mubr.bf16.mxu0 0
        %1188 = vmatmul.mubr.bf16.gmra.mrb[0].mxu0 %v831
        %v1189 = vpop.f32.mrb[0].mxu0
        %v1190 = vadd.f32 0.0, %v1189
        %v1191 = vpop.f32.mrb[0].mxu0
        %v1192 = vadd.f32 0.0, %v1191
        %v1193 = vpop.f32.mrb[0].mxu0
        %v1194 = vadd.f32 0.0, %v1193
        %v1195 = vpop.f32.mrb[0].mxu0
        %v1196 = vadd.f32 0.0, %v1195
        %1197 = vmatprep.mubr.bf16.mxu0 0
        %1198 = vmatmul.mubr.bf16.gmra.mrb[0].mxu0 %v832
        %v1199 = vpop.f32.mrb[0].mxu0
        %v1200 = vadd.f32 0.0, %v1199
        %v1201 = vpop.f32.mrb[0].mxu0
        %v1202 = vadd.f32 0.0, %v1201
        %v1203 = vpop.f32.mrb[0].mxu0
        %v1204 = vadd.f32 0.0, %v1203
        %v1205 = vpop.f32.mrb[0].mxu0
        %v1206 = vadd.f32 0.0, %v1205
        %1207 = vmatprep.mubr.bf16.mxu0 0
        %1208 = vmatmul.mubr.bf16.gmra.mrb[0].mxu0 %v833
        %v1209 = vpop.f32.mrb[0].mxu0
        %v1210 = vadd.f32 0.0, %v1209
        %v1211 = vpop.f32.mrb[0].mxu0
        %v1212 = vadd.f32 0.0, %v1211
        %v1213 = vpop.f32.mrb[0].mxu0
        %v1214 = vadd.f32 0.0, %v1213
        %v1215 = vpop.f32.mrb[0].mxu0
        %v1216 = vadd.f32 0.0, %v1215
        %1217 = vmatprep.mubr.bf16.mxu0 0
        %1218 = vmatmul.mubr.bf16.gmra.mrb[0].mxu0 %v834
        %v1219 = vpop.f32.mrb[0].mxu0
        %v1220 = vadd.f32 0.0, %v1219
        %v1221 = vpop.f32.mrb[0].mxu0
        %v1222 = vadd.f32 0.0, %v1221
        %v1223 = vpop.f32.mrb[0].mxu0
        %v1224 = vadd.f32 0.0, %v1223
        %v1225 = vpop.f32.mrb[0].mxu0
        %v1226 = vadd.f32 0.0, %v1225
        %1227 = vmatprep.mubr.bf16.mxu0 0
        %1228 = vmatmul.mubr.bf16.gmra.mrb[0].mxu0 %v835
        %v1229 = vpop.f32.mrb[0].mxu0
        %v1230 = vadd.f32 0.0, %v1229
        %v1231 = vpop.f32.mrb[0].mxu0
        %v1232 = vadd.f32 0.0, %v1231
        %v1233 = vpop.f32.mrb[0].mxu0
        %v1234 = vadd.f32 0.0, %v1233
        %v1235 = vpop.f32.mrb[0].mxu0
        %v1236 = vadd.f32 0.0, %v1235
        %1237 = vmatprep.mubr.bf16.mxu0 0
        %1238 = vmatmul.mubr.bf16.gmra.mrb[0].mxu0 %v836
        %v1239 = vpop.f32.mrb[0].mxu0
        %v1240 = vadd.f32 0.0, %v1239
        %v1241 = vpop.f32.mrb[0].mxu0
        %v1242 = vadd.f32 0.0, %v1241
        %v1243 = vpop.f32.mrb[0].mxu0
        %v1244 = vadd.f32 0.0, %v1243
        %v1245 = vpop.f32.mrb[0].mxu0
        %v1246 = vadd.f32 0.0, %v1245
        %1247 = vmatprep.mubr.bf16.mxu0 0
        %1248 = vmatmul.mubr.bf16.gmra.mrb[0].mxu0 %v837
        %v1249 = vpop.f32.mrb[0].mxu0
        %v1250 = vadd.f32 0.0, %v1249
        %v1251 = vpop.f32.mrb[0].mxu0
        %v1252 = vadd.f32 0.0, %v1251
        %v1253 = vpop.f32.mrb[0].mxu0
        %v1254 = vadd.f32 0.0, %v1253
        %v1255 = vpop.f32.mrb[0].mxu0
        %v1256 = vadd.f32 0.0, %v1255
        %1257 = vmatprep.mubr.bf16.mxu0 0
        %1258 = vmatmul.mubr.bf16.gmra.mrb[0].mxu0 %v838
        %v1259 = vpop.f32.mrb[0].mxu0
        %v1260 = vadd.f32 0.0, %v1259
        %v1261 = vpop.f32.mrb[0].mxu0
        %v1262 = vadd.f32 0.0, %v1261
        %v1263 = vpop.f32.mrb[0].mxu0
        %v1264 = vadd.f32 0.0, %v1263
        %v1265 = vpop.f32.mrb[0].mxu0
        %v1266 = vadd.f32 0.0, %v1265
        %1267 = vmatprep.mubr.bf16.mxu0 0
        %1268 = vmatmul.mubr.bf16.gmra.mrb[0].mxu0 %v839
        %v1269 = vpop.f32.mrb[0].mxu0
        %v1270 = vadd.f32 0.0, %v1269
        %v1271 = vpop.f32.mrb[0].mxu0
        %v1272 = vadd.f32 0.0, %v1271
        %v1273 = vpop.f32.mrb[0].mxu0
        %v1274 = vadd.f32 0.0, %v1273
        %v1275 = vpop.f32.mrb[0].mxu0
        %v1276 = vadd.f32 0.0, %v1275
        %1277 = vmatprep.mubr.bf16.mxu0 0
        %1278 = vmatmul.mubr.bf16.gmra.mrb[0].mxu0 %v840
        %v1279 = vpop.f32.mrb[0].mxu0
        %v1280 = vadd.f32 0.0, %v1279
        %v1281 = vpop.f32.mrb[0].mxu0
        %v1282 = vadd.f32 0.0, %v1281
        %v1283 = vpop.f32.mrb[0].mxu0
        %v1284 = vadd.f32 0.0, %v1283
        %v1285 = vpop.f32.mrb[0].mxu0
        %v1286 = vadd.f32 0.0, %v1285
        %1287 = vmatprep.mubr.bf16.mxu0 0
        %1288 = vmatmul.mubr.bf16.gmra.mrb[0].mxu0 %v841
        %v1289 = vpop.f32.mrb[0].mxu0
        %v1290 = vadd.f32 0.0, %v1289
        %v1291 = vpop.f32.mrb[0].mxu0
        %v1292 = vadd.f32 0.0, %v1291
        %v1293 = vpop.f32.mrb[0].mxu0
        %v1294 = vadd.f32 0.0, %v1293
        %v1295 = vpop.f32.mrb[0].mxu0
        %v1296 = vadd.f32 0.0, %v1295
        %1297 = vmatprep.mubr.bf16.mxu0 0
        %1298 = vmatmul.mubr.bf16.gmra.mrb[0].mxu0 %v842
        %v1299 = vpop.f32.mrb[0].mxu0
        %v1300 = vadd.f32 0.0, %v1299
        %v1301 = vpop.f32.mrb[0].mxu0
        %v1302 = vadd.f32 0.0, %v1301
        %v1303 = vpop.f32.mrb[0].mxu0
        %v1304 = vadd.f32 0.0, %v1303
        %v1305 = vpop.f32.mrb[0].mxu0
        %v1306 = vadd.f32 0.0, %v1305
        %1307 = vdwg.mxu0
        %v1340 = vunpack.c.l.b16 %v635
        %v1341 = vunpack.c.h.b16 %v635
        %v1342 = vunpack.c.l.b16 %v636
        %v1343 = vunpack.c.h.b16 %v636
        %v1344 = vunpack.c.l.b16 %v637
        %v1345 = vunpack.c.h.b16 %v637
        %v1346 = vunpack.c.l.b16 %v638
        %v1347 = vunpack.c.h.b16 %v638
        %v1348 = vunpack.c.l.b16 %v639
        %v1349 = vunpack.c.h.b16 %v639
        %v1350 = vunpack.c.l.b16 %v640
        %v1351 = vunpack.c.h.b16 %v640
        %v1352 = vunpack.c.l.b16 %v641
        %v1353 = vunpack.c.h.b16 %v641
        %v1354 = vunpack.c.l.b16 %v642
        %v1355 = vunpack.c.h.b16 %v642
        %v1356 = vunpack.c.l.b16 %v643
        %v1357 = vunpack.c.h.b16 %v643
        %v1358 = vunpack.c.l.b16 %v644
        %v1359 = vunpack.c.h.b16 %v644
        %v1360 = vunpack.c.l.b16 %v645
        %v1361 = vunpack.c.h.b16 %v645
        %v1362 = vunpack.c.l.b16 %v646
        %v1363 = vunpack.c.h.b16 %v646
        %v1364 = vunpack.c.l.b16 %v647
        %v1365 = vunpack.c.h.b16 %v647
        %v1366 = vunpack.c.l.b16 %v648
        %v1367 = vunpack.c.h.b16 %v648
        %v1368 = vunpack.c.l.b16 %v649
        %v1369 = vunpack.c.h.b16 %v649
        %v1370 = vunpack.c.l.b16 %v650
        %v1371 = vunpack.c.h.b16 %v650
        %v1372 = vunpack.c.l.b16 %v651
        %v1373 = vunpack.c.h.b16 %v651
        %v1374 = vunpack.c.l.b16 %v652
        %v1375 = vunpack.c.h.b16 %v652
        %v1376 = vunpack.c.l.b16 %v653
        %v1377 = vunpack.c.h.b16 %v653
        %v1378 = vunpack.c.l.b16 %v654
        %v1379 = vunpack.c.h.b16 %v654
        %v1380 = vunpack.c.l.b16 %v655
        %v1381 = vunpack.c.h.b16 %v655
        %v1382 = vunpack.c.l.b16 %v656
        %v1383 = vunpack.c.h.b16 %v656
        %v1384 = vunpack.c.l.b16 %v657
        %v1385 = vunpack.c.h.b16 %v657
        %v1386 = vunpack.c.l.b16 %v658
        %v1387 = vunpack.c.h.b16 %v658
        %v1388 = vunpack.c.l.b16 %v659
        %v1389 = vunpack.c.h.b16 %v659
        %v1390 = vunpack.c.l.b16 %v660
        %v1391 = vunpack.c.h.b16 %v660
        %v1392 = vunpack.c.l.b16 %v661
        %v1393 = vunpack.c.h.b16 %v661
        %v1394 = vunpack.c.l.b16 %v662
        %v1395 = vunpack.c.h.b16 %v662
        %v1396 = vunpack.c.l.b16 %v663
        %v1397 = vunpack.c.h.b16 %v663
        %v1398 = vunpack.c.l.b16 %v664
        %v1399 = vunpack.c.h.b16 %v664
        %v1400 = vunpack.c.l.b16 %v665
        %v1401 = vunpack.c.h.b16 %v665
        %v1402 = vunpack.c.l.b16 %v666
        %v1403 = vunpack.c.h.b16 %v666
        %v1404 = vpack.c.b16 %v1342, %v1340
        %v1405 = vpack.c.b16 %v1343, %v1341
        %v1406 = vpack.c.b16 %v1346, %v1344
        %v1407 = vpack.c.b16 %v1347, %v1345
        %v1408 = vpack.c.b16 %v1350, %v1348
        %v1409 = vpack.c.b16 %v1351, %v1349
        %v1410 = vpack.c.b16 %v1354, %v1352
        %v1411 = vpack.c.b16 %v1355, %v1353
        %v1412 = vpack.c.b16 %v1358, %v1356
        %v1413 = vpack.c.b16 %v1359, %v1357
        %v1414 = vpack.c.b16 %v1362, %v1360
        %v1415 = vpack.c.b16 %v1363, %v1361
        %v1416 = vpack.c.b16 %v1366, %v1364
        %v1417 = vpack.c.b16 %v1367, %v1365
        %v1418 = vpack.c.b16 %v1370, %v1368
        %v1419 = vpack.c.b16 %v1371, %v1369
        %v1420 = vpack.c.b16 %v1374, %v1372
        %v1421 = vpack.c.b16 %v1375, %v1373
        %v1422 = vpack.c.b16 %v1378, %v1376
        %v1423 = vpack.c.b16 %v1379, %v1377
        %v1424 = vpack.c.b16 %v1382, %v1380
        %v1425 = vpack.c.b16 %v1383, %v1381
        %v1426 = vpack.c.b16 %v1386, %v1384
        %v1427 = vpack.c.b16 %v1387, %v1385
        %v1428 = vpack.c.b16 %v1390, %v1388
        %v1429 = vpack.c.b16 %v1391, %v1389
        %v1430 = vpack.c.b16 %v1394, %v1392
        %v1431 = vpack.c.b16 %v1395, %v1393
        %v1432 = vpack.c.b16 %v1398, %v1396
        %v1433 = vpack.c.b16 %v1399, %v1397
        %v1434 = vpack.c.b16 %v1402, %v1400
        %v1435 = vpack.c.b16 %v1403, %v1401
        %1468 = vmatprep.subr.bf16.mxu0 %v1405
        %1469 = vmatpush1.bf16.msra.mxu0 %v1404
        %1470 = vmatprep.subr.bf16.mxu0 %v1407
        %1471 = vmatpush1.bf16.msra.mxu0 %v1406
        %1472 = vmatprep.subr.bf16.mxu0 %v1409
        %1473 = vmatpush1.bf16.msra.mxu0 %v1408
        %1474 = vmatprep.subr.bf16.mxu0 %v1411
        %1475 = vmatpush1.bf16.msra.mxu0 %v1410
        %1476 = vmatprep.subr.bf16.mxu0 %v1413
        %1477 = vmatpush1.bf16.msra.mxu0 %v1412
        %1478 = vmatprep.subr.bf16.mxu0 %v1415
        %1479 = vmatpush1.bf16.msra.mxu0 %v1414
        %1480 = vmatprep.subr.bf16.mxu0 %v1417
        %1481 = vmatpush1.bf16.msra.mxu0 %v1416
        %1482 = vmatprep.subr.bf16.mxu0 %v1419
        %1483 = vmatpush1.bf16.msra.mxu0 %v1418
        %1484 = vmatprep.subr.bf16.mxu0 %v1421
        %1485 = vmatpush1.bf16.msra.mxu0 %v1420
        %1486 = vmatprep.subr.bf16.mxu0 %v1423
        %1487 = vmatpush1.bf16.msra.mxu0 %v1422
        %1488 = vmatprep.subr.bf16.mxu0 %v1425
        %1489 = vmatpush1.bf16.msra.mxu0 %v1424
        %1490 = vmatprep.subr.bf16.mxu0 %v1427
        %1491 = vmatpush1.bf16.msra.mxu0 %v1426
        %1492 = vmatprep.subr.bf16.mxu0 %v1429
        %1493 = vmatpush1.bf16.msra.mxu0 %v1428
        %1494 = vmatprep.subr.bf16.mxu0 %v1431
        %1495 = vmatpush1.bf16.msra.mxu0 %v1430
        %1496 = vmatprep.subr.bf16.mxu0 %v1433
        %1497 = vmatpush1.bf16.msra.mxu0 %v1432
        %1498 = vmatprep.subr.bf16.mxu0 %v1435
        %1499 = vmatpush1.bf16.msra.mxu0 %v1434
        %1500 = vmatprep.mubr.bf16.mxu0 %v508
        %1501 = vmatmul.mubr.bf16.gmra.mrb[0].mxu0 %v507
        %v1502 = vpop.f32.mrb[0].mxu0
        %v1503 = vadd.f32 %v990, %v1502
        %v1504 = vpop.f32.mrb[0].mxu0
        %v1505 = vadd.f32 %v992, %v1504
        %v1506 = vpop.f32.mrb[0].mxu0
        %v1507 = vadd.f32 %v994, %v1506
        %v1508 = vpop.f32.mrb[0].mxu0
        %v1509 = vadd.f32 %v996, %v1508
        %1510 = vmatprep.mubr.bf16.mxu0 %v510
        %1511 = vmatmul.mubr.bf16.gmra.mrb[0].mxu0 %v509
        %v1512 = vpop.f32.mrb[0].mxu0
        %v1513 = vadd.f32 %v1000, %v1512
        %v1514 = vpop.f32.mrb[0].mxu0
        %v1515 = vadd.f32 %v1002, %v1514
        %v1516 = vpop.f32.mrb[0].mxu0
        %v1517 = vadd.f32 %v1004, %v1516
        %v1518 = vpop.f32.mrb[0].mxu0
        %v1519 = vadd.f32 %v1006, %v1518
        %1520 = vmatprep.mubr.bf16.mxu0 %v512
        %1521 = vmatmul.mubr.bf16.gmra.mrb[0].mxu0 %v511
        %v1522 = vpop.f32.mrb[0].mxu0
        %v1523 = vadd.f32 %v1010, %v1522
        %v1524 = vpop.f32.mrb[0].mxu0
        %v1525 = vadd.f32 %v1012, %v1524
        %v1526 = vpop.f32.mrb[0].mxu0
        %v1527 = vadd.f32 %v1014, %v1526
        %v1528 = vpop.f32.mrb[0].mxu0
        %v1529 = vadd.f32 %v1016, %v1528
        %1530 = vmatprep.mubr.bf16.mxu0 %v514
        %1531 = vmatmul.mubr.bf16.gmra.mrb[0].mxu0 %v513
        %v1532 = vpop.f32.mrb[0].mxu0
        %v1533 = vadd.f32 %v1020, %v1532
        %v1534 = vpop.f32.mrb[0].mxu0
        %v1535 = vadd.f32 %v1022, %v1534
        %v1536 = vpop.f32.mrb[0].mxu0
        %v1537 = vadd.f32 %v1024, %v1536
        %v1538 = vpop.f32.mrb[0].mxu0
        %v1539 = vadd.f32 %v1026, %v1538
        %1540 = vmatprep.mubr.bf16.mxu0 %v516
        %1541 = vmatmul.mubr.bf16.gmra.mrb[0].mxu0 %v515
        %v1542 = vpop.f32.mrb[0].mxu0
        %v1543 = vadd.f32 %v1030, %v1542
        %v1544 = vpop.f32.mrb[0].mxu0
        %v1545 = vadd.f32 %v1032, %v1544
        %v1546 = vpop.f32.mrb[0].mxu0
        %v1547 = vadd.f32 %v1034, %v1546
        %v1548 = vpop.f32.mrb[0].mxu0
        %v1549 = vadd.f32 %v1036, %v1548
        %1550 = vmatprep.mubr.bf16.mxu0 %v518
        %1551 = vmatmul.mubr.bf16.gmra.mrb[0].mxu0 %v517
        %v1552 = vpop.f32.mrb[0].mxu0
        %v1553 = vadd.f32 %v1040, %v1552
        %v1554 = vpop.f32.mrb[0].mxu0
        %v1555 = vadd.f32 %v1042, %v1554
        %v1556 = vpop.f32.mrb[0].mxu0
        %v1557 = vadd.f32 %v1044, %v1556
        %v1558 = vpop.f32.mrb[0].mxu0
        %v1559 = vadd.f32 %v1046, %v1558
        %1560 = vmatprep.mubr.bf16.mxu0 %v520
        %1561 = vmatmul.mubr.bf16.gmra.mrb[0].mxu0 %v519
        %v1562 = vpop.f32.mrb[0].mxu0
        %v1563 = vadd.f32 %v1050, %v1562
        %v1564 = vpop.f32.mrb[0].mxu0
        %v1565 = vadd.f32 %v1052, %v1564
        %v1566 = vpop.f32.mrb[0].mxu0
        %v1567 = vadd.f32 %v1054, %v1566
        %v1568 = vpop.f32.mrb[0].mxu0
        %v1569 = vadd.f32 %v1056, %v1568
        %1570 = vmatprep.mubr.bf16.mxu0 %v522
        %1571 = vmatmul.mubr.bf16.gmra.mrb[0].mxu0 %v521
        %v1572 = vpop.f32.mrb[0].mxu0
        %v1573 = vadd.f32 %v1060, %v1572
        %v1574 = vpop.f32.mrb[0].mxu0
        %v1575 = vadd.f32 %v1062, %v1574
        %v1576 = vpop.f32.mrb[0].mxu0
        %v1577 = vadd.f32 %v1064, %v1576
        %v1578 = vpop.f32.mrb[0].mxu0
        %v1579 = vadd.f32 %v1066, %v1578
        %1580 = vmatprep.mubr.bf16.mxu0 %v524
        %1581 = vmatmul.mubr.bf16.gmra.mrb[0].mxu0 %v523
        %v1582 = vpop.f32.mrb[0].mxu0
        %v1583 = vadd.f32 %v1070, %v1582
        %v1584 = vpop.f32.mrb[0].mxu0
        %v1585 = vadd.f32 %v1072, %v1584
        %v1586 = vpop.f32.mrb[0].mxu0
        %v1587 = vadd.f32 %v1074, %v1586
        %v1588 = vpop.f32.mrb[0].mxu0
        %v1589 = vadd.f32 %v1076, %v1588
        %1590 = vmatprep.mubr.bf16.mxu0 %v526
        %1591 = vmatmul.mubr.bf16.gmra.mrb[0].mxu0 %v525
        %v1592 = vpop.f32.mrb[0].mxu0
        %v1593 = vadd.f32 %v1080, %v1592
        %v1594 = vpop.f32.mrb[0].mxu0
        %v1595 = vadd.f32 %v1082, %v1594
        %v1596 = vpop.f32.mrb[0].mxu0
        %v1597 = vadd.f32 %v1084, %v1596
        %v1598 = vpop.f32.mrb[0].mxu0
        %v1599 = vadd.f32 %v1086, %v1598
        %1600 = vmatprep.mubr.bf16.mxu0 %v528
        %1601 = vmatmul.mubr.bf16.gmra.mrb[0].mxu0 %v527
        %v1602 = vpop.f32.mrb[0].mxu0
        %v1603 = vadd.f32 %v1090, %v1602
        %v1604 = vpop.f32.mrb[0].mxu0
        %v1605 = vadd.f32 %v1092, %v1604
        %v1606 = vpop.f32.mrb[0].mxu0
        %v1607 = vadd.f32 %v1094, %v1606
        %v1608 = vpop.f32.mrb[0].mxu0
        %v1609 = vadd.f32 %v1096, %v1608
        %1610 = vmatprep.mubr.bf16.mxu0 %v530
        %1611 = vmatmul.mubr.bf16.gmra.mrb[0].mxu0 %v529
        %v1612 = vpop.f32.mrb[0].mxu0
        %v1613 = vadd.f32 %v1100, %v1612
        %v1614 = vpop.f32.mrb[0].mxu0
        %v1615 = vadd.f32 %v1102, %v1614
        %v1616 = vpop.f32.mrb[0].mxu0
        %v1617 = vadd.f32 %v1104, %v1616
        %v1618 = vpop.f32.mrb[0].mxu0
        %v1619 = vadd.f32 %v1106, %v1618
        %1620 = vmatprep.mubr.bf16.mxu0 %v532
        %1621 = vmatmul.mubr.bf16.gmra.mrb[0].mxu0 %v531
        %v1622 = vpop.f32.mrb[0].mxu0
        %v1623 = vadd.f32 %v1110, %v1622
        %v1624 = vpop.f32.mrb[0].mxu0
        %v1625 = vadd.f32 %v1112, %v1624
        %v1626 = vpop.f32.mrb[0].mxu0
        %v1627 = vadd.f32 %v1114, %v1626
        %v1628 = vpop.f32.mrb[0].mxu0
        %v1629 = vadd.f32 %v1116, %v1628
        %1630 = vmatprep.mubr.bf16.mxu0 %v534
        %1631 = vmatmul.mubr.bf16.gmra.mrb[0].mxu0 %v533
        %v1632 = vpop.f32.mrb[0].mxu0
        %v1633 = vadd.f32 %v1120, %v1632
        %v1634 = vpop.f32.mrb[0].mxu0
        %v1635 = vadd.f32 %v1122, %v1634
        %v1636 = vpop.f32.mrb[0].mxu0
        %v1637 = vadd.f32 %v1124, %v1636
        %v1638 = vpop.f32.mrb[0].mxu0
        %v1639 = vadd.f32 %v1126, %v1638
        %1640 = vmatprep.mubr.bf16.mxu0 %v536
        %1641 = vmatmul.mubr.bf16.gmra.mrb[0].mxu0 %v535
        %v1642 = vpop.f32.mrb[0].mxu0
        %v1643 = vadd.f32 %v1130, %v1642
        %v1644 = vpop.f32.mrb[0].mxu0
        %v1645 = vadd.f32 %v1132, %v1644
        %v1646 = vpop.f32.mrb[0].mxu0
        %v1647 = vadd.f32 %v1134, %v1646
        %v1648 = vpop.f32.mrb[0].mxu0
        %v1649 = vadd.f32 %v1136, %v1648
        %1650 = vmatprep.mubr.bf16.mxu0 %v538
        %1651 = vmatmul.mubr.bf16.gmra.mrb[0].mxu0 %v537
        %v1652 = vpop.f32.mrb[0].mxu0
        %v1653 = vadd.f32 %v1140, %v1652
        %v1654 = vpop.f32.mrb[0].mxu0
        %v1655 = vadd.f32 %v1142, %v1654
        %v1656 = vpop.f32.mrb[0].mxu0
        %v1657 = vadd.f32 %v1144, %v1656
        %v1658 = vpop.f32.mrb[0].mxu0
        %v1659 = vadd.f32 %v1146, %v1658
        %1660 = vmatprep.mubr.bf16.mxu0 %v540
        %1661 = vmatmul.mubr.bf16.gmra.mrb[0].mxu0 %v539
        %v1662 = vpop.f32.mrb[0].mxu0
        %v1663 = vadd.f32 %v1150, %v1662
        %v1664 = vpop.f32.mrb[0].mxu0
        %v1665 = vadd.f32 %v1152, %v1664
        %v1666 = vpop.f32.mrb[0].mxu0
        %v1667 = vadd.f32 %v1154, %v1666
        %v1668 = vpop.f32.mrb[0].mxu0
        %v1669 = vadd.f32 %v1156, %v1668
        %1670 = vmatprep.mubr.bf16.mxu0 %v542
        %1671 = vmatmul.mubr.bf16.gmra.mrb[0].mxu0 %v541
        %v1672 = vpop.f32.mrb[0].mxu0
        %v1673 = vadd.f32 %v1160, %v1672
        %v1674 = vpop.f32.mrb[0].mxu0
        %v1675 = vadd.f32 %v1162, %v1674
        %v1676 = vpop.f32.mrb[0].mxu0
        %v1677 = vadd.f32 %v1164, %v1676
        %v1678 = vpop.f32.mrb[0].mxu0
        %v1679 = vadd.f32 %v1166, %v1678
        %1680 = vmatprep.mubr.bf16.mxu0 %v544
        %1681 = vmatmul.mubr.bf16.gmra.mrb[0].mxu0 %v543
        %v1682 = vpop.f32.mrb[0].mxu0
        %v1683 = vadd.f32 %v1170, %v1682
        %v1684 = vpop.f32.mrb[0].mxu0
        %v1685 = vadd.f32 %v1172, %v1684
        %v1686 = vpop.f32.mrb[0].mxu0
        %v1687 = vadd.f32 %v1174, %v1686
        %v1688 = vpop.f32.mrb[0].mxu0
        %v1689 = vadd.f32 %v1176, %v1688
        %1690 = vmatprep.mubr.bf16.mxu0 %v546
        %1691 = vmatmul.mubr.bf16.gmra.mrb[0].mxu0 %v545
        %v1692 = vpop.f32.mrb[0].mxu0
        %v1693 = vadd.f32 %v1180, %v1692
        %v1694 = vpop.f32.mrb[0].mxu0
        %v1695 = vadd.f32 %v1182, %v1694
        %v1696 = vpop.f32.mrb[0].mxu0
        %v1697 = vadd.f32 %v1184, %v1696
        %v1698 = vpop.f32.mrb[0].mxu0
        %v1699 = vadd.f32 %v1186, %v1698
        %1700 = vmatprep.mubr.bf16.mxu0 %v548
        %1701 = vmatmul.mubr.bf16.gmra.mrb[0].mxu0 %v547
        %v1702 = vpop.f32.mrb[0].mxu0
        %v1703 = vadd.f32 %v1190, %v1702
        %v1704 = vpop.f32.mrb[0].mxu0
        %v1705 = vadd.f32 %v1192, %v1704
        %v1706 = vpop.f32.mrb[0].mxu0
        %v1707 = vadd.f32 %v1194, %v1706
        %v1708 = vpop.f32.mrb[0].mxu0
        %v1709 = vadd.f32 %v1196, %v1708
        %1710 = vmatprep.mubr.bf16.mxu0 %v550
        %1711 = vmatmul.mubr.bf16.gmra.mrb[0].mxu0 %v549
        %v1712 = vpop.f32.mrb[0].mxu0
        %v1713 = vadd.f32 %v1200, %v1712
        %v1714 = vpop.f32.mrb[0].mxu0
        %v1715 = vadd.f32 %v1202, %v1714
        %v1716 = vpop.f32.mrb[0].mxu0
        %v1717 = vadd.f32 %v1204, %v1716
        %v1718 = vpop.f32.mrb[0].mxu0
        %v1719 = vadd.f32 %v1206, %v1718
        %1720 = vmatprep.mubr.bf16.mxu0 %v552
        %1721 = vmatmul.mubr.bf16.gmra.mrb[0].mxu0 %v551
        %v1722 = vpop.f32.mrb[0].mxu0
        %v1723 = vadd.f32 %v1210, %v1722
        %v1724 = vpop.f32.mrb[0].mxu0
        %v1725 = vadd.f32 %v1212, %v1724
        %v1726 = vpop.f32.mrb[0].mxu0
        %v1727 = vadd.f32 %v1214, %v1726
        %v1728 = vpop.f32.mrb[0].mxu0
        %v1729 = vadd.f32 %v1216, %v1728
        %1730 = vmatprep.mubr.bf16.mxu0 %v554
        %1731 = vmatmul.mubr.bf16.gmra.mrb[0].mxu0 %v553
        %v1732 = vpop.f32.mrb[0].mxu0
        %v1733 = vadd.f32 %v1220, %v1732
        %v1734 = vpop.f32.mrb[0].mxu0
        %v1735 = vadd.f32 %v1222, %v1734
        %v1736 = vpop.f32.mrb[0].mxu0
        %v1737 = vadd.f32 %v1224, %v1736
        %v1738 = vpop.f32.mrb[0].mxu0
        %v1739 = vadd.f32 %v1226, %v1738
        %1740 = vmatprep.mubr.bf16.mxu0 %v556
        %1741 = vmatmul.mubr.bf16.gmra.mrb[0].mxu0 %v555
        %v1742 = vpop.f32.mrb[0].mxu0
        %v1743 = vadd.f32 %v1230, %v1742
        %v1744 = vpop.f32.mrb[0].mxu0
        %v1745 = vadd.f32 %v1232, %v1744
        %v1746 = vpop.f32.mrb[0].mxu0
        %v1747 = vadd.f32 %v1234, %v1746
        %v1748 = vpop.f32.mrb[0].mxu0
        %v1749 = vadd.f32 %v1236, %v1748
        %1750 = vmatprep.mubr.bf16.mxu0 %v558
        %1751 = vmatmul.mubr.bf16.gmra.mrb[0].mxu0 %v557
        %v1752 = vpop.f32.mrb[0].mxu0
        %v1753 = vadd.f32 %v1240, %v1752
        %v1754 = vpop.f32.mrb[0].mxu0
        %v1755 = vadd.f32 %v1242, %v1754
        %v1756 = vpop.f32.mrb[0].mxu0
        %v1757 = vadd.f32 %v1244, %v1756
        %v1758 = vpop.f32.mrb[0].mxu0
        %v1759 = vadd.f32 %v1246, %v1758
        %1760 = vmatprep.mubr.bf16.mxu0 %v560
        %1761 = vmatmul.mubr.bf16.gmra.mrb[0].mxu0 %v559
        %v1762 = vpop.f32.mrb[0].mxu0
        %v1763 = vadd.f32 %v1250, %v1762
        %v1764 = vpop.f32.mrb[0].mxu0
        %v1765 = vadd.f32 %v1252, %v1764
        %v1766 = vpop.f32.mrb[0].mxu0
        %v1767 = vadd.f32 %v1254, %v1766
        %v1768 = vpop.f32.mrb[0].mxu0
        %v1769 = vadd.f32 %v1256, %v1768
        %1770 = vmatprep.mubr.bf16.mxu0 %v562
        %1771 = vmatmul.mubr.bf16.gmra.mrb[0].mxu0 %v561
        %v1772 = vpop.f32.mrb[0].mxu0
        %v1773 = vadd.f32 %v1260, %v1772
        %v1774 = vpop.f32.mrb[0].mxu0
        %v1775 = vadd.f32 %v1262, %v1774
        %v1776 = vpop.f32.mrb[0].mxu0
        %v1777 = vadd.f32 %v1264, %v1776
        %v1778 = vpop.f32.mrb[0].mxu0
        %v1779 = vadd.f32 %v1266, %v1778
        %1780 = vmatprep.mubr.bf16.mxu0 %v564
        %1781 = vmatmul.mubr.bf16.gmra.mrb[0].mxu0 %v563
        %v1782 = vpop.f32.mrb[0].mxu0
        %v1783 = vadd.f32 %v1270, %v1782
        %v1784 = vpop.f32.mrb[0].mxu0
        %v1785 = vadd.f32 %v1272, %v1784
        %v1786 = vpop.f32.mrb[0].mxu0
        %v1787 = vadd.f32 %v1274, %v1786
        %v1788 = vpop.f32.mrb[0].mxu0
        %v1789 = vadd.f32 %v1276, %v1788
        %1790 = vmatprep.mubr.bf16.mxu0 %v566
        %1791 = vmatmul.mubr.bf16.gmra.mrb[0].mxu0 %v565
        %v1792 = vpop.f32.mrb[0].mxu0
        %v1793 = vadd.f32 %v1280, %v1792
        %v1794 = vpop.f32.mrb[0].mxu0
        %v1795 = vadd.f32 %v1282, %v1794
        %v1796 = vpop.f32.mrb[0].mxu0
        %v1797 = vadd.f32 %v1284, %v1796
        %v1798 = vpop.f32.mrb[0].mxu0
        %v1799 = vadd.f32 %v1286, %v1798
        %1800 = vmatprep.mubr.bf16.mxu0 %v568
        %1801 = vmatmul.mubr.bf16.gmra.mrb[0].mxu0 %v567
        %v1802 = vpop.f32.mrb[0].mxu0
        %v1803 = vadd.f32 %v1290, %v1802
        %v1804 = vpop.f32.mrb[0].mxu0
        %v1805 = vadd.f32 %v1292, %v1804
        %v1806 = vpop.f32.mrb[0].mxu0
        %v1807 = vadd.f32 %v1294, %v1806
        %v1808 = vpop.f32.mrb[0].mxu0
        %v1809 = vadd.f32 %v1296, %v1808
        %1810 = vmatprep.mubr.bf16.mxu0 %v570
        %1811 = vmatmul.mubr.bf16.gmra.mrb[0].mxu0 %v569
        %v1812 = vpop.f32.mrb[0].mxu0
        %v1813 = vadd.f32 %v1300, %v1812
        %v1814 = vpop.f32.mrb[0].mxu0
        %v1815 = vadd.f32 %v1302, %v1814
        %v1816 = vpop.f32.mrb[0].mxu0
        %v1817 = vadd.f32 %v1304, %v1816
        %v1818 = vpop.f32.mrb[0].mxu0
        %v1819 = vadd.f32 %v1306, %v1818
        %1820 = vdwg.mxu0
        %v1821 = vld [vmem:[%s4] sm:$0x3]
        %v1823 = vlaneseq
        %v1824 = vshrl.u32 %v1823, 7
        %v1825 = vsub.s32 0, %v1824
        %v1826 = vrot.slane %v1821, %v1825
        %v1827 = vlaneseq
        %v1828 = vshrl.u32 %v1827, 7
        %v1829 = vsub.s32 1, %v1828
        %v1830 = vrot.slane %v1821, %v1829
        %v1833 = vadd.f32 %v1503, %v1826
        %v1834 = vadd.f32 %v1505, %v1830
        %v1835 = vadd.f32 %v1507, %v1826
        %v1836 = vadd.f32 %v1509, %v1830
        %v1837 = vadd.f32 %v1513, %v1826
        %v1838 = vadd.f32 %v1515, %v1830
        %v1839 = vadd.f32 %v1517, %v1826
        %v1840 = vadd.f32 %v1519, %v1830
        %v1841 = vadd.f32 %v1523, %v1826
        %v1842 = vadd.f32 %v1525, %v1830
        %v1843 = vadd.f32 %v1527, %v1826
        %v1844 = vadd.f32 %v1529, %v1830
        %v1845 = vadd.f32 %v1533, %v1826
        %v1846 = vadd.f32 %v1535, %v1830
        %v1847 = vadd.f32 %v1537, %v1826
        %v1848 = vadd.f32 %v1539, %v1830
        %v1849 = vadd.f32 %v1543, %v1826
        %v1850 = vadd.f32 %v1545, %v1830
        %v1851 = vadd.f32 %v1547, %v1826
        %v1852 = vadd.f32 %v1549, %v1830
        %v1853 = vadd.f32 %v1553, %v1826
        %v1854 = vadd.f32 %v1555, %v1830
        %v1855 = vadd.f32 %v1557, %v1826
        %v1856 = vadd.f32 %v1559, %v1830
        %v1857 = vadd.f32 %v1563, %v1826
        %v1858 = vadd.f32 %v1565, %v1830
        %v1859 = vadd.f32 %v1567, %v1826
        %v1860 = vadd.f32 %v1569, %v1830
        %v1861 = vadd.f32 %v1573, %v1826
        %v1862 = vadd.f32 %v1575, %v1830
        %v1863 = vadd.f32 %v1577, %v1826
        %v1864 = vadd.f32 %v1579, %v1830
        %v1865 = vadd.f32 %v1583, %v1826
        %v1866 = vadd.f32 %v1585, %v1830
        %v1867 = vadd.f32 %v1587, %v1826
        %v1868 = vadd.f32 %v1589, %v1830
        %v1869 = vadd.f32 %v1593, %v1826
        %v1870 = vadd.f32 %v1595, %v1830
        %v1871 = vadd.f32 %v1597, %v1826
        %v1872 = vadd.f32 %v1599, %v1830
        %v1873 = vadd.f32 %v1603, %v1826
        %v1874 = vadd.f32 %v1605, %v1830
        %v1875 = vadd.f32 %v1607, %v1826
        %v1876 = vadd.f32 %v1609, %v1830
        %v1877 = vadd.f32 %v1613, %v1826
        %v1878 = vadd.f32 %v1615, %v1830
        %v1879 = vadd.f32 %v1617, %v1826
        %v1880 = vadd.f32 %v1619, %v1830
        %v1881 = vadd.f32 %v1623, %v1826
        %v1882 = vadd.f32 %v1625, %v1830
        %v1883 = vadd.f32 %v1627, %v1826
        %v1884 = vadd.f32 %v1629, %v1830
        %v1885 = vadd.f32 %v1633, %v1826
        %v1886 = vadd.f32 %v1635, %v1830
        %v1887 = vadd.f32 %v1637, %v1826
        %v1888 = vadd.f32 %v1639, %v1830
        %v1889 = vadd.f32 %v1643, %v1826
        %v1890 = vadd.f32 %v1645, %v1830
        %v1891 = vadd.f32 %v1647, %v1826
        %v1892 = vadd.f32 %v1649, %v1830
        %v1893 = vadd.f32 %v1653, %v1826
        %v1894 = vadd.f32 %v1655, %v1830
        %v1895 = vadd.f32 %v1657, %v1826
        %v1896 = vadd.f32 %v1659, %v1830
        %v1897 = vadd.f32 %v1663, %v1826
        %v1898 = vadd.f32 %v1665, %v1830
        %v1899 = vadd.f32 %v1667, %v1826
        %v1900 = vadd.f32 %v1669, %v1830
        %v1901 = vadd.f32 %v1673, %v1826
        %v1902 = vadd.f32 %v1675, %v1830
        %v1903 = vadd.f32 %v1677, %v1826
        %v1904 = vadd.f32 %v1679, %v1830
        %v1905 = vadd.f32 %v1683, %v1826
        %v1906 = vadd.f32 %v1685, %v1830
        %v1907 = vadd.f32 %v1687, %v1826
        %v1908 = vadd.f32 %v1689, %v1830
        %v1909 = vadd.f32 %v1693, %v1826
        %v1910 = vadd.f32 %v1695, %v1830
        %v1911 = vadd.f32 %v1697, %v1826
        %v1912 = vadd.f32 %v1699, %v1830
        %v1913 = vadd.f32 %v1703, %v1826
        %v1914 = vadd.f32 %v1705, %v1830
        %v1915 = vadd.f32 %v1707, %v1826
        %v1916 = vadd.f32 %v1709, %v1830
        %v1917 = vadd.f32 %v1713, %v1826
        %v1918 = vadd.f32 %v1715, %v1830
        %v1919 = vadd.f32 %v1717, %v1826
        %v1920 = vadd.f32 %v1719, %v1830
        %v1921 = vadd.f32 %v1723, %v1826
        %v1922 = vadd.f32 %v1725, %v1830
        %v1923 = vadd.f32 %v1727, %v1826
        %v1924 = vadd.f32 %v1729, %v1830
        %v1925 = vadd.f32 %v1733, %v1826
        %v1926 = vadd.f32 %v1735, %v1830
        %v1927 = vadd.f32 %v1737, %v1826
        %v1928 = vadd.f32 %v1739, %v1830
        %v1929 = vadd.f32 %v1743, %v1826
        %v1930 = vadd.f32 %v1745, %v1830
        %v1931 = vadd.f32 %v1747, %v1826
        %v1932 = vadd.f32 %v1749, %v1830
        %v1933 = vadd.f32 %v1753, %v1826
        %v1934 = vadd.f32 %v1755, %v1830
        %v1935 = vadd.f32 %v1757, %v1826
        %v1936 = vadd.f32 %v1759, %v1830
        %v1937 = vadd.f32 %v1763, %v1826
        %v1938 = vadd.f32 %v1765, %v1830
        %v1939 = vadd.f32 %v1767, %v1826
        %v1940 = vadd.f32 %v1769, %v1830
        %v1941 = vadd.f32 %v1773, %v1826
        %v1942 = vadd.f32 %v1775, %v1830
        %v1943 = vadd.f32 %v1777, %v1826
        %v1944 = vadd.f32 %v1779, %v1830
        %v1945 = vadd.f32 %v1783, %v1826
        %v1946 = vadd.f32 %v1785, %v1830
        %v1947 = vadd.f32 %v1787, %v1826
        %v1948 = vadd.f32 %v1789, %v1830
        %v1949 = vadd.f32 %v1793, %v1826
        %v1950 = vadd.f32 %v1795, %v1830
        %v1951 = vadd.f32 %v1797, %v1826
        %v1952 = vadd.f32 %v1799, %v1830
        %v1953 = vadd.f32 %v1803, %v1826
        %v1954 = vadd.f32 %v1805, %v1830
        %v1955 = vadd.f32 %v1807, %v1826
        %v1956 = vadd.f32 %v1809, %v1830
        %v1957 = vadd.f32 %v1813, %v1826
        %v1958 = vadd.f32 %v1815, %v1830
        %v1959 = vadd.f32 %v1817, %v1826
        %v1960 = vadd.f32 %v1819, %v1830
        %v1961 = vmax.f32 %v1833, 0.0
        %v1962 = vmax.f32 %v1834, 0.0
        %v1963 = vmax.f32 %v1835, 0.0
        %v1964 = vmax.f32 %v1836, 0.0
        %v1965 = vmax.f32 %v1837, 0.0
        %v1966 = vmax.f32 %v1838, 0.0
        %v1967 = vmax.f32 %v1839, 0.0
        %v1968 = vmax.f32 %v1840, 0.0
        %v1969 = vmax.f32 %v1841, 0.0
        %v1970 = vmax.f32 %v1842, 0.0
        %v1971 = vmax.f32 %v1843, 0.0
        %v1972 = vmax.f32 %v1844, 0.0
        %v1973 = vmax.f32 %v1845, 0.0
        %v1974 = vmax.f32 %v1846, 0.0
        %v1975 = vmax.f32 %v1847, 0.0
        %v1976 = vmax.f32 %v1848, 0.0
        %v1977 = vmax.f32 %v1849, 0.0
        %v1978 = vmax.f32 %v1850, 0.0
        %v1979 = vmax.f32 %v1851, 0.0
        %v1980 = vmax.f32 %v1852, 0.0
        %v1981 = vmax.f32 %v1853, 0.0
        %v1982 = vmax.f32 %v1854, 0.0
        %v1983 = vmax.f32 %v1855, 0.0
        %v1984 = vmax.f32 %v1856, 0.0
        %v1985 = vmax.f32 %v1857, 0.0
        %v1986 = vmax.f32 %v1858, 0.0
        %v1987 = vmax.f32 %v1859, 0.0
        %v1988 = vmax.f32 %v1860, 0.0
        %v1989 = vmax.f32 %v1861, 0.0
        %v1990 = vmax.f32 %v1862, 0.0
        %v1991 = vmax.f32 %v1863, 0.0
        %v1992 = vmax.f32 %v1864, 0.0
        %v1993 = vmax.f32 %v1865, 0.0
        %v1994 = vmax.f32 %v1866, 0.0
        %v1995 = vmax.f32 %v1867, 0.0
        %v1996 = vmax.f32 %v1868, 0.0
        %v1997 = vmax.f32 %v1869, 0.0
        %v1998 = vmax.f32 %v1870, 0.0
        %v1999 = vmax.f32 %v1871, 0.0
        %v2000 = vmax.f32 %v1872, 0.0
        %v2001 = vmax.f32 %v1873, 0.0
        %v2002 = vmax.f32 %v1874, 0.0
        %v2003 = vmax.f32 %v1875, 0.0
        %v2004 = vmax.f32 %v1876, 0.0
        %v2005 = vmax.f32 %v1877, 0.0
        %v2006 = vmax.f32 %v1878, 0.0
        %v2007 = vmax.f32 %v1879, 0.0
        %v2008 = vmax.f32 %v1880, 0.0
        %v2009 = vmax.f32 %v1881, 0.0
        %v2010 = vmax.f32 %v1882, 0.0
        %v2011 = vmax.f32 %v1883, 0.0
        %v2012 = vmax.f32 %v1884, 0.0
        %v2013 = vmax.f32 %v1885, 0.0
        %v2014 = vmax.f32 %v1886, 0.0
        %v2015 = vmax.f32 %v1887, 0.0
        %v2016 = vmax.f32 %v1888, 0.0
        %v2017 = vmax.f32 %v1889, 0.0
        %v2018 = vmax.f32 %v1890, 0.0
        %v2019 = vmax.f32 %v1891, 0.0
        %v2020 = vmax.f32 %v1892, 0.0
        %v2021 = vmax.f32 %v1893, 0.0
        %v2022 = vmax.f32 %v1894, 0.0
        %v2023 = vmax.f32 %v1895, 0.0
        %v2024 = vmax.f32 %v1896, 0.0
        %v2025 = vmax.f32 %v1897, 0.0
        %v2026 = vmax.f32 %v1898, 0.0
        %v2027 = vmax.f32 %v1899, 0.0
        %v2028 = vmax.f32 %v1900, 0.0
        %v2029 = vmax.f32 %v1901, 0.0
        %v2030 = vmax.f32 %v1902, 0.0
        %v2031 = vmax.f32 %v1903, 0.0
        %v2032 = vmax.f32 %v1904, 0.0
        %v2033 = vmax.f32 %v1905, 0.0
        %v2034 = vmax.f32 %v1906, 0.0
        %v2035 = vmax.f32 %v1907, 0.0
        %v2036 = vmax.f32 %v1908, 0.0
        %v2037 = vmax.f32 %v1909, 0.0
        %v2038 = vmax.f32 %v1910, 0.0
        %v2039 = vmax.f32 %v1911, 0.0
        %v2040 = vmax.f32 %v1912, 0.0
        %v2041 = vmax.f32 %v1913, 0.0
        %v2042 = vmax.f32 %v1914, 0.0
        %v2043 = vmax.f32 %v1915, 0.0
        %v2044 = vmax.f32 %v1916, 0.0
        %v2045 = vmax.f32 %v1917, 0.0
        %v2046 = vmax.f32 %v1918, 0.0
        %v2047 = vmax.f32 %v1919, 0.0
        %v2048 = vmax.f32 %v1920, 0.0
        %v2049 = vmax.f32 %v1921, 0.0
        %v2050 = vmax.f32 %v1922, 0.0
        %v2051 = vmax.f32 %v1923, 0.0
        %v2052 = vmax.f32 %v1924, 0.0
        %v2053 = vmax.f32 %v1925, 0.0
        %v2054 = vmax.f32 %v1926, 0.0
        %v2055 = vmax.f32 %v1927, 0.0
        %v2056 = vmax.f32 %v1928, 0.0
        %v2057 = vmax.f32 %v1929, 0.0
        %v2058 = vmax.f32 %v1930, 0.0
        %v2059 = vmax.f32 %v1931, 0.0
        %v2060 = vmax.f32 %v1932, 0.0
        %v2061 = vmax.f32 %v1933, 0.0
        %v2062 = vmax.f32 %v1934, 0.0
        %v2063 = vmax.f32 %v1935, 0.0
        %v2064 = vmax.f32 %v1936, 0.0
        %v2065 = vmax.f32 %v1937, 0.0
        %v2066 = vmax.f32 %v1938, 0.0
        %v2067 = vmax.f32 %v1939, 0.0
        %v2068 = vmax.f32 %v1940, 0.0
        %v2069 = vmax.f32 %v1941, 0.0
        %v2070 = vmax.f32 %v1942, 0.0
        %v2071 = vmax.f32 %v1943, 0.0
        %v2072 = vmax.f32 %v1944, 0.0
        %v2073 = vmax.f32 %v1945, 0.0
        %v2074 = vmax.f32 %v1946, 0.0
        %v2075 = vmax.f32 %v1947, 0.0
        %v2076 = vmax.f32 %v1948, 0.0
        %v2077 = vmax.f32 %v1949, 0.0
        %v2078 = vmax.f32 %v1950, 0.0
        %v2079 = vmax.f32 %v1951, 0.0
        %v2080 = vmax.f32 %v1952, 0.0
        %v2081 = vmax.f32 %v1953, 0.0
        %v2082 = vmax.f32 %v1954, 0.0
        %v2083 = vmax.f32 %v1955, 0.0
        %v2084 = vmax.f32 %v1956, 0.0
        %v2085 = vmax.f32 %v1957, 0.0
        %v2086 = vmax.f32 %v1958, 0.0
        %v2087 = vmax.f32 %v1959, 0.0
        %v2088 = vmax.f32 %v1960, 0.0
        %v2089 = vpack.c.bf16 %v1963, %v1961
        %v2090 = vpack.c.bf16 %v1964, %v1962
        %v2091 = vpack.c.bf16 %v1967, %v1965
        %v2092 = vpack.c.bf16 %v1968, %v1966
        %v2093 = vpack.c.bf16 %v1971, %v1969
        %v2094 = vpack.c.bf16 %v1972, %v1970
        %v2095 = vpack.c.bf16 %v1975, %v1973
        %v2096 = vpack.c.bf16 %v1976, %v1974
        %v2097 = vpack.c.bf16 %v1979, %v1977
        %v2098 = vpack.c.bf16 %v1980, %v1978
        %v2099 = vpack.c.bf16 %v1983, %v1981
        %v2100 = vpack.c.bf16 %v1984, %v1982
        %v2101 = vpack.c.bf16 %v1987, %v1985
        %v2102 = vpack.c.bf16 %v1988, %v1986
        %v2103 = vpack.c.bf16 %v1991, %v1989
        %v2104 = vpack.c.bf16 %v1992, %v1990
        %v2105 = vpack.c.bf16 %v1995, %v1993
        %v2106 = vpack.c.bf16 %v1996, %v1994
        %v2107 = vpack.c.bf16 %v1999, %v1997
        %v2108 = vpack.c.bf16 %v2000, %v1998
        %v2109 = vpack.c.bf16 %v2003, %v2001
        %v2110 = vpack.c.bf16 %v2004, %v2002
        %v2111 = vpack.c.bf16 %v2007, %v2005
        %v2112 = vpack.c.bf16 %v2008, %v2006
        %v2113 = vpack.c.bf16 %v2011, %v2009
        %v2114 = vpack.c.bf16 %v2012, %v2010
        %v2115 = vpack.c.bf16 %v2015, %v2013
        %v2116 = vpack.c.bf16 %v2016, %v2014
        %v2117 = vpack.c.bf16 %v2019, %v2017
        %v2118 = vpack.c.bf16 %v2020, %v2018
        %v2119 = vpack.c.bf16 %v2023, %v2021
        %v2120 = vpack.c.bf16 %v2024, %v2022
        %v2121 = vpack.c.bf16 %v2027, %v2025
        %v2122 = vpack.c.bf16 %v2028, %v2026
        %v2123 = vpack.c.bf16 %v2031, %v2029
        %v2124 = vpack.c.bf16 %v2032, %v2030
        %v2125 = vpack.c.bf16 %v2035, %v2033
        %v2126 = vpack.c.bf16 %v2036, %v2034
        %v2127 = vpack.c.bf16 %v2039, %v2037
        %v2128 = vpack.c.bf16 %v2040, %v2038
        %v2129 = vpack.c.bf16 %v2043, %v2041
        %v2130 = vpack.c.bf16 %v2044, %v2042
        %v2131 = vpack.c.bf16 %v2047, %v2045
        %v2132 = vpack.c.bf16 %v2048, %v2046
        %v2133 = vpack.c.bf16 %v2051, %v2049
        %v2134 = vpack.c.bf16 %v2052, %v2050
        %v2135 = vpack.c.bf16 %v2055, %v2053
        %v2136 = vpack.c.bf16 %v2056, %v2054
        %v2137 = vpack.c.bf16 %v2059, %v2057
        %v2138 = vpack.c.bf16 %v2060, %v2058
        %v2139 = vpack.c.bf16 %v2063, %v2061
        %v2140 = vpack.c.bf16 %v2064, %v2062
        %v2141 = vpack.c.bf16 %v2067, %v2065
        %v2142 = vpack.c.bf16 %v2068, %v2066
        %v2143 = vpack.c.bf16 %v2071, %v2069
        %v2144 = vpack.c.bf16 %v2072, %v2070
        %v2145 = vpack.c.bf16 %v2075, %v2073
        %v2146 = vpack.c.bf16 %v2076, %v2074
        %v2147 = vpack.c.bf16 %v2079, %v2077
        %v2148 = vpack.c.bf16 %v2080, %v2078
        %v2149 = vpack.c.bf16 %v2083, %v2081
        %v2150 = vpack.c.bf16 %v2084, %v2082
        %v2151 = vpack.c.bf16 %v2087, %v2085
        %v2152 = vpack.c.bf16 %v2088, %v2086
        %v2153 = vld [vmem:[%s5] sm:$0xff]
        %v2154 = vld [vmem:[%s5 + $0x8] sm:$0xff]
        %v2155 = vld [vmem:[%s5 + $0x10] sm:$0xff]
        %v2156 = vld [vmem:[%s5 + $0x18] sm:$0xff]
        %v2157 = vld [vmem:[%s5 + $0x20] sm:$0xff]
        %v2158 = vld [vmem:[%s5 + $0x28] sm:$0xff]
        %v2159 = vld [vmem:[%s5 + $0x30] sm:$0xff]
        %v2160 = vld [vmem:[%s5 + $0x38] sm:$0xff]
        %v2161 = vld [vmem:[%s5 + $0x40] sm:$0xff]
        %v2162 = vld [vmem:[%s5 + $0x48] sm:$0xff]
        %v2163 = vld [vmem:[%s5 + $0x50] sm:$0xff]
        %v2164 = vld [vmem:[%s5 + $0x58] sm:$0xff]
        %v2165 = vld [vmem:[%s5 + $0x60] sm:$0xff]
        %v2166 = vld [vmem:[%s5 + $0x68] sm:$0xff]
        %v2167 = vld [vmem:[%s5 + $0x70] sm:$0xff]
        %v2168 = vld [vmem:[%s5 + $0x78] sm:$0xff]
        %v2169 = vld [vmem:[%s5 + $0x80] sm:$0xff]
        %v2170 = vld [vmem:[%s5 + $0x88] sm:$0xff]
        %v2171 = vld [vmem:[%s5 + $0x90] sm:$0xff]
        %v2172 = vld [vmem:[%s5 + $0x98] sm:$0xff]
        %v2173 = vld [vmem:[%s5 + $0xa0] sm:$0xff]
        %v2174 = vld [vmem:[%s5 + $0xa8] sm:$0xff]
        %v2175 = vld [vmem:[%s5 + $0xb0] sm:$0xff]
        %v2176 = vld [vmem:[%s5 + $0xb8] sm:$0xff]
        %v2177 = vld [vmem:[%s5 + $0xc0] sm:$0xff]
        %v2178 = vld [vmem:[%s5 + $0xc8] sm:$0xff]
        %v2179 = vld [vmem:[%s5 + $0xd0] sm:$0xff]
        %v2180 = vld [vmem:[%s5 + $0xd8] sm:$0xff]
        %v2181 = vld [vmem:[%s5 + $0xe0] sm:$0xff]
        %v2182 = vld [vmem:[%s5 + $0xe8] sm:$0xff]
        %v2183 = vld [vmem:[%s5 + $0xf0] sm:$0xff]
        %v2184 = vld [vmem:[%s5 + $0xf8] sm:$0xff]
        %v2185 = vld [vmem:[%s6] ss:$4 sm:$0x3]
        %v2187 = vlaneseq
        %v2188 = vshrl.u32 %v2187, 7
        %v2189 = vsub.s32 0, %v2188
        %v2190 = vrot.slane %v2185, %v2189
        %v2191 = vlaneseq
        %v2192 = vshrl.u32 %v2191, 7
        %v2193 = vsub.s32 1, %v2192
        %v2194 = vrot.slane %v2185, %v2193
        %v2229 = vunpack.c.l.b16 %v2153
        %v2230 = vunpack.c.h.b16 %v2153
        %v2231 = vunpack.c.l.b16 %v2154
        %v2232 = vunpack.c.h.b16 %v2154
        %v2233 = vunpack.c.l.b16 %v2155
        %v2234 = vunpack.c.h.b16 %v2155
        %v2235 = vunpack.c.l.b16 %v2156
        %v2236 = vunpack.c.h.b16 %v2156
        %v2237 = vunpack.c.l.b16 %v2157
        %v2238 = vunpack.c.h.b16 %v2157
        %v2239 = vunpack.c.l.b16 %v2158
        %v2240 = vunpack.c.h.b16 %v2158
        %v2241 = vunpack.c.l.b16 %v2159
        %v2242 = vunpack.c.h.b16 %v2159
        %v2243 = vunpack.c.l.b16 %v2160
        %v2244 = vunpack.c.h.b16 %v2160
        %v2245 = vunpack.c.l.b16 %v2161
        %v2246 = vunpack.c.h.b16 %v2161
        %v2247 = vunpack.c.l.b16 %v2162
        %v2248 = vunpack.c.h.b16 %v2162
        %v2249 = vunpack.c.l.b16 %v2163
        %v2250 = vunpack.c.h.b16 %v2163
        %v2251 = vunpack.c.l.b16 %v2164
        %v2252 = vunpack.c.h.b16 %v2164
        %v2253 = vunpack.c.l.b16 %v2165
        %v2254 = vunpack.c.h.b16 %v2165
        %v2255 = vunpack.c.l.b16 %v2166
        %v2256 = vunpack.c.h.b16 %v2166
        %v2257 = vunpack.c.l.b16 %v2167
        %v2258 = vunpack.c.h.b16 %v2167
        %v2259 = vunpack.c.l.b16 %v2168
        %v2260 = vunpack.c.h.b16 %v2168
        %v2261 = vunpack.c.l.b16 %v2169
        %v2262 = vunpack.c.h.b16 %v2169
        %v2263 = vunpack.c.l.b16 %v2170
        %v2264 = vunpack.c.h.b16 %v2170
        %v2265 = vunpack.c.l.b16 %v2171
        %v2266 = vunpack.c.h.b16 %v2171
        %v2267 = vunpack.c.l.b16 %v2172
        %v2268 = vunpack.c.h.b16 %v2172
        %v2269 = vunpack.c.l.b16 %v2173
        %v2270 = vunpack.c.h.b16 %v2173
        %v2271 = vunpack.c.l.b16 %v2174
        %v2272 = vunpack.c.h.b16 %v2174
        %v2273 = vunpack.c.l.b16 %v2175
        %v2274 = vunpack.c.h.b16 %v2175
        %v2275 = vunpack.c.l.b16 %v2176
        %v2276 = vunpack.c.h.b16 %v2176
        %v2277 = vunpack.c.l.b16 %v2177
        %v2278 = vunpack.c.h.b16 %v2177
        %v2279 = vunpack.c.l.b16 %v2178
        %v2280 = vunpack.c.h.b16 %v2178
        %v2281 = vunpack.c.l.b16 %v2179
        %v2282 = vunpack.c.h.b16 %v2179
        %v2283 = vunpack.c.l.b16 %v2180
        %v2284 = vunpack.c.h.b16 %v2180
        %v2285 = vunpack.c.l.b16 %v2181
        %v2286 = vunpack.c.h.b16 %v2181
        %v2287 = vunpack.c.l.b16 %v2182
        %v2288 = vunpack.c.h.b16 %v2182
        %v2289 = vunpack.c.l.b16 %v2183
        %v2290 = vunpack.c.h.b16 %v2183
        %v2291 = vunpack.c.l.b16 %v2184
        %v2292 = vunpack.c.h.b16 %v2184
        %v2293 = vpack.c.b16 %v2231, %v2229
        %v2294 = vpack.c.b16 %v2232, %v2230
        %v2295 = vpack.c.b16 %v2235, %v2233
        %v2296 = vpack.c.b16 %v2236, %v2234
        %v2297 = vpack.c.b16 %v2239, %v2237
        %v2298 = vpack.c.b16 %v2240, %v2238
        %v2299 = vpack.c.b16 %v2243, %v2241
        %v2300 = vpack.c.b16 %v2244, %v2242
        %v2301 = vpack.c.b16 %v2247, %v2245
        %v2302 = vpack.c.b16 %v2248, %v2246
        %v2303 = vpack.c.b16 %v2251, %v2249
        %v2304 = vpack.c.b16 %v2252, %v2250
        %v2305 = vpack.c.b16 %v2255, %v2253
        %v2306 = vpack.c.b16 %v2256, %v2254
        %v2307 = vpack.c.b16 %v2259, %v2257
        %v2308 = vpack.c.b16 %v2260, %v2258
        %v2309 = vpack.c.b16 %v2263, %v2261
        %v2310 = vpack.c.b16 %v2264, %v2262
        %v2311 = vpack.c.b16 %v2267, %v2265
        %v2312 = vpack.c.b16 %v2268, %v2266
        %v2313 = vpack.c.b16 %v2271, %v2269
        %v2314 = vpack.c.b16 %v2272, %v2270
        %v2315 = vpack.c.b16 %v2275, %v2273
        %v2316 = vpack.c.b16 %v2276, %v2274
        %v2317 = vpack.c.b16 %v2279, %v2277
        %v2318 = vpack.c.b16 %v2280, %v2278
        %v2319 = vpack.c.b16 %v2283, %v2281
        %v2320 = vpack.c.b16 %v2284, %v2282
        %v2321 = vpack.c.b16 %v2287, %v2285
        %v2322 = vpack.c.b16 %v2288, %v2286
        %v2323 = vpack.c.b16 %v2291, %v2289
        %v2324 = vpack.c.b16 %v2292, %v2290
        %2357 = vmatprep.subr.bf16.mxu0 %v2294
        %2358 = vmatpush1.bf16.msra.mxu0 %v2293
        %2359 = vmatprep.subr.bf16.mxu0 %v2296
        %2360 = vmatpush1.bf16.msra.mxu0 %v2295
        %2361 = vmatprep.subr.bf16.mxu0 %v2298
        %2362 = vmatpush1.bf16.msra.mxu0 %v2297
        %2363 = vmatprep.subr.bf16.mxu0 %v2300
        %2364 = vmatpush1.bf16.msra.mxu0 %v2299
        %2365 = vmatprep.subr.bf16.mxu0 %v2302
        %2366 = vmatpush1.bf16.msra.mxu0 %v2301
        %2367 = vmatprep.subr.bf16.mxu0 %v2304
        %2368 = vmatpush1.bf16.msra.mxu0 %v2303
        %2369 = vmatprep.subr.bf16.mxu0 %v2306
        %2370 = vmatpush1.bf16.msra.mxu0 %v2305
        %2371 = vmatprep.subr.bf16.mxu0 %v2308
        %2372 = vmatpush1.bf16.msra.mxu0 %v2307
        %2373 = vmatprep.subr.bf16.mxu0 %v2310
        %2374 = vmatpush1.bf16.msra.mxu0 %v2309
        %2375 = vmatprep.subr.bf16.mxu0 %v2312
        %2376 = vmatpush1.bf16.msra.mxu0 %v2311
        %2377 = vmatprep.subr.bf16.mxu0 %v2314
        %2378 = vmatpush1.bf16.msra.mxu0 %v2313
        %2379 = vmatprep.subr.bf16.mxu0 %v2316
        %2380 = vmatpush1.bf16.msra.mxu0 %v2315
        %2381 = vmatprep.subr.bf16.mxu0 %v2318
        %2382 = vmatpush1.bf16.msra.mxu0 %v2317
        %2383 = vmatprep.subr.bf16.mxu0 %v2320
        %2384 = vmatpush1.bf16.msra.mxu0 %v2319
        %2385 = vmatprep.subr.bf16.mxu0 %v2322
        %2386 = vmatpush1.bf16.msra.mxu0 %v2321
        %2387 = vmatprep.subr.bf16.mxu0 %v2324
        %2388 = vmatpush1.bf16.msra.mxu0 %v2323
        %2389 = vmatprep.mubr.bf16.mxu0 %v2090
        %2390 = vmatmul.mubr.bf16.gmra.mrb[0].mxu0 %v2089
        %v2391 = vpop.f32.mrb[0].mxu0
        %v2392 = vadd.f32 %v2190, %v2391
        %v2393 = vpop.f32.mrb[0].mxu0
        %v2394 = vadd.f32 %v2194, %v2393
        %v2395 = vpop.f32.mrb[0].mxu0
        %v2396 = vadd.f32 %v2190, %v2395
        %v2397 = vpop.f32.mrb[0].mxu0
        %v2398 = vadd.f32 %v2194, %v2397
        %2399 = vmatprep.mubr.bf16.mxu0 %v2092
        %2400 = vmatmul.mubr.bf16.gmra.mrb[0].mxu0 %v2091
        %v2401 = vpop.f32.mrb[0].mxu0
        %v2402 = vadd.f32 %v2190, %v2401
        %v2403 = vpop.f32.mrb[0].mxu0
        %v2404 = vadd.f32 %v2194, %v2403
        %v2405 = vpop.f32.mrb[0].mxu0
        %v2406 = vadd.f32 %v2190, %v2405
        %v2407 = vpop.f32.mrb[0].mxu0
        %v2408 = vadd.f32 %v2194, %v2407
        %2409 = vmatprep.mubr.bf16.mxu0 %v2094
        %2410 = vmatmul.mubr.bf16.gmra.mrb[0].mxu0 %v2093
        %v2411 = vpop.f32.mrb[0].mxu0
        %v2412 = vadd.f32 %v2190, %v2411
        %v2413 = vpop.f32.mrb[0].mxu0
        %v2414 = vadd.f32 %v2194, %v2413
        %v2415 = vpop.f32.mrb[0].mxu0
        %v2416 = vadd.f32 %v2190, %v2415
        %v2417 = vpop.f32.mrb[0].mxu0
        %v2418 = vadd.f32 %v2194, %v2417
        %2419 = vmatprep.mubr.bf16.mxu0 %v2096
        %2420 = vmatmul.mubr.bf16.gmra.mrb[0].mxu0 %v2095
        %v2421 = vpop.f32.mrb[0].mxu0
        %v2422 = vadd.f32 %v2190, %v2421
        %v2423 = vpop.f32.mrb[0].mxu0
        %v2424 = vadd.f32 %v2194, %v2423
        %v2425 = vpop.f32.mrb[0].mxu0
        %v2426 = vadd.f32 %v2190, %v2425
        %v2427 = vpop.f32.mrb[0].mxu0
        %v2428 = vadd.f32 %v2194, %v2427
        %2429 = vmatprep.mubr.bf16.mxu0 %v2098
        %2430 = vmatmul.mubr.bf16.gmra.mrb[0].mxu0 %v2097
        %v2431 = vpop.f32.mrb[0].mxu0
        %v2432 = vadd.f32 %v2190, %v2431
        %v2433 = vpop.f32.mrb[0].mxu0
        %v2434 = vadd.f32 %v2194, %v2433
        %v2435 = vpop.f32.mrb[0].mxu0
        %v2436 = vadd.f32 %v2190, %v2435
        %v2437 = vpop.f32.mrb[0].mxu0
        %v2438 = vadd.f32 %v2194, %v2437
        %2439 = vmatprep.mubr.bf16.mxu0 %v2100
        %2440 = vmatmul.mubr.bf16.gmra.mrb[0].mxu0 %v2099
        %v2441 = vpop.f32.mrb[0].mxu0
        %v2442 = vadd.f32 %v2190, %v2441
        %v2443 = vpop.f32.mrb[0].mxu0
        %v2444 = vadd.f32 %v2194, %v2443
        %v2445 = vpop.f32.mrb[0].mxu0
        %v2446 = vadd.f32 %v2190, %v2445
        %v2447 = vpop.f32.mrb[0].mxu0
        %v2448 = vadd.f32 %v2194, %v2447
        %2449 = vmatprep.mubr.bf16.mxu0 %v2102
        %2450 = vmatmul.mubr.bf16.gmra.mrb[0].mxu0 %v2101
        %v2451 = vpop.f32.mrb[0].mxu0
        %v2452 = vadd.f32 %v2190, %v2451
        %v2453 = vpop.f32.mrb[0].mxu0
        %v2454 = vadd.f32 %v2194, %v2453
        %v2455 = vpop.f32.mrb[0].mxu0
        %v2456 = vadd.f32 %v2190, %v2455
        %v2457 = vpop.f32.mrb[0].mxu0
        %v2458 = vadd.f32 %v2194, %v2457
        %2459 = vmatprep.mubr.bf16.mxu0 %v2104
        %2460 = vmatmul.mubr.bf16.gmra.mrb[0].mxu0 %v2103
        %v2461 = vpop.f32.mrb[0].mxu0
        %v2462 = vadd.f32 %v2190, %v2461
        %v2463 = vpop.f32.mrb[0].mxu0
        %v2464 = vadd.f32 %v2194, %v2463
        %v2465 = vpop.f32.mrb[0].mxu0
        %v2466 = vadd.f32 %v2190, %v2465
        %v2467 = vpop.f32.mrb[0].mxu0
        %v2468 = vadd.f32 %v2194, %v2467
        %2469 = vmatprep.mubr.bf16.mxu0 %v2106
        %2470 = vmatmul.mubr.bf16.gmra.mrb[0].mxu0 %v2105
        %v2471 = vpop.f32.mrb[0].mxu0
        %v2472 = vadd.f32 %v2190, %v2471
        %v2473 = vpop.f32.mrb[0].mxu0
        %v2474 = vadd.f32 %v2194, %v2473
        %v2475 = vpop.f32.mrb[0].mxu0
        %v2476 = vadd.f32 %v2190, %v2475
        %v2477 = vpop.f32.mrb[0].mxu0
        %v2478 = vadd.f32 %v2194, %v2477
        %2479 = vmatprep.mubr.bf16.mxu0 %v2108
        %2480 = vmatmul.mubr.bf16.gmra.mrb[0].mxu0 %v2107
        %v2481 = vpop.f32.mrb[0].mxu0
        %v2482 = vadd.f32 %v2190, %v2481
        %v2483 = vpop.f32.mrb[0].mxu0
        %v2484 = vadd.f32 %v2194, %v2483
        %v2485 = vpop.f32.mrb[0].mxu0
        %v2486 = vadd.f32 %v2190, %v2485
        %v2487 = vpop.f32.mrb[0].mxu0
        %v2488 = vadd.f32 %v2194, %v2487
        %2489 = vmatprep.mubr.bf16.mxu0 %v2110
        %2490 = vmatmul.mubr.bf16.gmra.mrb[0].mxu0 %v2109
        %v2491 = vpop.f32.mrb[0].mxu0
        %v2492 = vadd.f32 %v2190, %v2491
        %v2493 = vpop.f32.mrb[0].mxu0
        %v2494 = vadd.f32 %v2194, %v2493
        %v2495 = vpop.f32.mrb[0].mxu0
        %v2496 = vadd.f32 %v2190, %v2495
        %v2497 = vpop.f32.mrb[0].mxu0
        %v2498 = vadd.f32 %v2194, %v2497
        %2499 = vmatprep.mubr.bf16.mxu0 %v2112
        %2500 = vmatmul.mubr.bf16.gmra.mrb[0].mxu0 %v2111
        %v2501 = vpop.f32.mrb[0].mxu0
        %v2502 = vadd.f32 %v2190, %v2501
        %v2503 = vpop.f32.mrb[0].mxu0
        %v2504 = vadd.f32 %v2194, %v2503
        %v2505 = vpop.f32.mrb[0].mxu0
        %v2506 = vadd.f32 %v2190, %v2505
        %v2507 = vpop.f32.mrb[0].mxu0
        %v2508 = vadd.f32 %v2194, %v2507
        %2509 = vmatprep.mubr.bf16.mxu0 %v2114
        %2510 = vmatmul.mubr.bf16.gmra.mrb[0].mxu0 %v2113
        %v2511 = vpop.f32.mrb[0].mxu0
        %v2512 = vadd.f32 %v2190, %v2511
        %v2513 = vpop.f32.mrb[0].mxu0
        %v2514 = vadd.f32 %v2194, %v2513
        %v2515 = vpop.f32.mrb[0].mxu0
        %v2516 = vadd.f32 %v2190, %v2515
        %v2517 = vpop.f32.mrb[0].mxu0
        %v2518 = vadd.f32 %v2194, %v2517
        %2519 = vmatprep.mubr.bf16.mxu0 %v2116
        %2520 = vmatmul.mubr.bf16.gmra.mrb[0].mxu0 %v2115
        %v2521 = vpop.f32.mrb[0].mxu0
        %v2522 = vadd.f32 %v2190, %v2521
        %v2523 = vpop.f32.mrb[0].mxu0
        %v2524 = vadd.f32 %v2194, %v2523
        %v2525 = vpop.f32.mrb[0].mxu0
        %v2526 = vadd.f32 %v2190, %v2525
        %v2527 = vpop.f32.mrb[0].mxu0
        %v2528 = vadd.f32 %v2194, %v2527
        %2529 = vmatprep.mubr.bf16.mxu0 %v2118
        %2530 = vmatmul.mubr.bf16.gmra.mrb[0].mxu0 %v2117
        %v2531 = vpop.f32.mrb[0].mxu0
        %v2532 = vadd.f32 %v2190, %v2531
        %v2533 = vpop.f32.mrb[0].mxu0
        %v2534 = vadd.f32 %v2194, %v2533
        %v2535 = vpop.f32.mrb[0].mxu0
        %v2536 = vadd.f32 %v2190, %v2535
        %v2537 = vpop.f32.mrb[0].mxu0
        %v2538 = vadd.f32 %v2194, %v2537
        %2539 = vmatprep.mubr.bf16.mxu0 %v2120
        %2540 = vmatmul.mubr.bf16.gmra.mrb[0].mxu0 %v2119
        %v2541 = vpop.f32.mrb[0].mxu0
        %v2542 = vadd.f32 %v2190, %v2541
        %v2543 = vpop.f32.mrb[0].mxu0
        %v2544 = vadd.f32 %v2194, %v2543
        %v2545 = vpop.f32.mrb[0].mxu0
        %v2546 = vadd.f32 %v2190, %v2545
        %v2547 = vpop.f32.mrb[0].mxu0
        %v2548 = vadd.f32 %v2194, %v2547
        %2549 = vmatprep.mubr.bf16.mxu0 %v2122
        %2550 = vmatmul.mubr.bf16.gmra.mrb[0].mxu0 %v2121
        %v2551 = vpop.f32.mrb[0].mxu0
        %v2552 = vadd.f32 %v2190, %v2551
        %v2553 = vpop.f32.mrb[0].mxu0
        %v2554 = vadd.f32 %v2194, %v2553
        %v2555 = vpop.f32.mrb[0].mxu0
        %v2556 = vadd.f32 %v2190, %v2555
        %v2557 = vpop.f32.mrb[0].mxu0
        %v2558 = vadd.f32 %v2194, %v2557
        %2559 = vmatprep.mubr.bf16.mxu0 %v2124
        %2560 = vmatmul.mubr.bf16.gmra.mrb[0].mxu0 %v2123
        %v2561 = vpop.f32.mrb[0].mxu0
        %v2562 = vadd.f32 %v2190, %v2561
        %v2563 = vpop.f32.mrb[0].mxu0
        %v2564 = vadd.f32 %v2194, %v2563
        %v2565 = vpop.f32.mrb[0].mxu0
        %v2566 = vadd.f32 %v2190, %v2565
        %v2567 = vpop.f32.mrb[0].mxu0
        %v2568 = vadd.f32 %v2194, %v2567
        %2569 = vmatprep.mubr.bf16.mxu0 %v2126
        %2570 = vmatmul.mubr.bf16.gmra.mrb[0].mxu0 %v2125
        %v2571 = vpop.f32.mrb[0].mxu0
        %v2572 = vadd.f32 %v2190, %v2571
        %v2573 = vpop.f32.mrb[0].mxu0
        %v2574 = vadd.f32 %v2194, %v2573
        %v2575 = vpop.f32.mrb[0].mxu0
        %v2576 = vadd.f32 %v2190, %v2575
        %v2577 = vpop.f32.mrb[0].mxu0
        %v2578 = vadd.f32 %v2194, %v2577
        %2579 = vmatprep.mubr.bf16.mxu0 %v2128
        %2580 = vmatmul.mubr.bf16.gmra.mrb[0].mxu0 %v2127
        %v2581 = vpop.f32.mrb[0].mxu0
        %v2582 = vadd.f32 %v2190, %v2581
        %v2583 = vpop.f32.mrb[0].mxu0
        %v2584 = vadd.f32 %v2194, %v2583
        %v2585 = vpop.f32.mrb[0].mxu0
        %v2586 = vadd.f32 %v2190, %v2585
        %v2587 = vpop.f32.mrb[0].mxu0
        %v2588 = vadd.f32 %v2194, %v2587
        %2589 = vmatprep.mubr.bf16.mxu0 %v2130
        %2590 = vmatmul.mubr.bf16.gmra.mrb[0].mxu0 %v2129
        %v2591 = vpop.f32.mrb[0].mxu0
        %v2592 = vadd.f32 %v2190, %v2591
        %v2593 = vpop.f32.mrb[0].mxu0
        %v2594 = vadd.f32 %v2194, %v2593
        %v2595 = vpop.f32.mrb[0].mxu0
        %v2596 = vadd.f32 %v2190, %v2595
        %v2597 = vpop.f32.mrb[0].mxu0
        %v2598 = vadd.f32 %v2194, %v2597
        %2599 = vmatprep.mubr.bf16.mxu0 %v2132
        %2600 = vmatmul.mubr.bf16.gmra.mrb[0].mxu0 %v2131
        %v2601 = vpop.f32.mrb[0].mxu0
        %v2602 = vadd.f32 %v2190, %v2601
        %v2603 = vpop.f32.mrb[0].mxu0
        %v2604 = vadd.f32 %v2194, %v2603
        %v2605 = vpop.f32.mrb[0].mxu0
        %v2606 = vadd.f32 %v2190, %v2605
        %v2607 = vpop.f32.mrb[0].mxu0
        %v2608 = vadd.f32 %v2194, %v2607
        %2609 = vmatprep.mubr.bf16.mxu0 %v2134
        %2610 = vmatmul.mubr.bf16.gmra.mrb[0].mxu0 %v2133
        %v2611 = vpop.f32.mrb[0].mxu0
        %v2612 = vadd.f32 %v2190, %v2611
        %v2613 = vpop.f32.mrb[0].mxu0
        %v2614 = vadd.f32 %v2194, %v2613
        %v2615 = vpop.f32.mrb[0].mxu0
        %v2616 = vadd.f32 %v2190, %v2615
        %v2617 = vpop.f32.mrb[0].mxu0
        %v2618 = vadd.f32 %v2194, %v2617
        %2619 = vmatprep.mubr.bf16.mxu0 %v2136
        %2620 = vmatmul.mubr.bf16.gmra.mrb[0].mxu0 %v2135
        %v2621 = vpop.f32.mrb[0].mxu0
        %v2622 = vadd.f32 %v2190, %v2621
        %v2623 = vpop.f32.mrb[0].mxu0
        %v2624 = vadd.f32 %v2194, %v2623
        %v2625 = vpop.f32.mrb[0].mxu0
        %v2626 = vadd.f32 %v2190, %v2625
        %v2627 = vpop.f32.mrb[0].mxu0
        %v2628 = vadd.f32 %v2194, %v2627
        %2629 = vmatprep.mubr.bf16.mxu0 %v2138
        %2630 = vmatmul.mubr.bf16.gmra.mrb[0].mxu0 %v2137
        %v2631 = vpop.f32.mrb[0].mxu0
        %v2632 = vadd.f32 %v2190, %v2631
        %v2633 = vpop.f32.mrb[0].mxu0
        %v2634 = vadd.f32 %v2194, %v2633
        %v2635 = vpop.f32.mrb[0].mxu0
        %v2636 = vadd.f32 %v2190, %v2635
        %v2637 = vpop.f32.mrb[0].mxu0
        %v2638 = vadd.f32 %v2194, %v2637
        %2639 = vmatprep.mubr.bf16.mxu0 %v2140
        %2640 = vmatmul.mubr.bf16.gmra.mrb[0].mxu0 %v2139
        %v2641 = vpop.f32.mrb[0].mxu0
        %v2642 = vadd.f32 %v2190, %v2641
        %v2643 = vpop.f32.mrb[0].mxu0
        %v2644 = vadd.f32 %v2194, %v2643
        %v2645 = vpop.f32.mrb[0].mxu0
        %v2646 = vadd.f32 %v2190, %v2645
        %v2647 = vpop.f32.mrb[0].mxu0
        %v2648 = vadd.f32 %v2194, %v2647
        %2649 = vmatprep.mubr.bf16.mxu0 %v2142
        %2650 = vmatmul.mubr.bf16.gmra.mrb[0].mxu0 %v2141
        %v2651 = vpop.f32.mrb[0].mxu0
        %v2652 = vadd.f32 %v2190, %v2651
        %v2653 = vpop.f32.mrb[0].mxu0
        %v2654 = vadd.f32 %v2194, %v2653
        %v2655 = vpop.f32.mrb[0].mxu0
        %v2656 = vadd.f32 %v2190, %v2655
        %v2657 = vpop.f32.mrb[0].mxu0
        %v2658 = vadd.f32 %v2194, %v2657
        %2659 = vmatprep.mubr.bf16.mxu0 %v2144
        %2660 = vmatmul.mubr.bf16.gmra.mrb[0].mxu0 %v2143
        %v2661 = vpop.f32.mrb[0].mxu0
        %v2662 = vadd.f32 %v2190, %v2661
        %v2663 = vpop.f32.mrb[0].mxu0
        %v2664 = vadd.f32 %v2194, %v2663
        %v2665 = vpop.f32.mrb[0].mxu0
        %v2666 = vadd.f32 %v2190, %v2665
        %v2667 = vpop.f32.mrb[0].mxu0
        %v2668 = vadd.f32 %v2194, %v2667
        %2669 = vmatprep.mubr.bf16.mxu0 %v2146
        %2670 = vmatmul.mubr.bf16.gmra.mrb[0].mxu0 %v2145
        %v2671 = vpop.f32.mrb[0].mxu0
        %v2672 = vadd.f32 %v2190, %v2671
        %v2673 = vpop.f32.mrb[0].mxu0
        %v2674 = vadd.f32 %v2194, %v2673
        %v2675 = vpop.f32.mrb[0].mxu0
        %v2676 = vadd.f32 %v2190, %v2675
        %v2677 = vpop.f32.mrb[0].mxu0
        %v2678 = vadd.f32 %v2194, %v2677
        %2679 = vmatprep.mubr.bf16.mxu0 %v2148
        %2680 = vmatmul.mubr.bf16.gmra.mrb[0].mxu0 %v2147
        %v2681 = vpop.f32.mrb[0].mxu0
        %v2682 = vadd.f32 %v2190, %v2681
        %v2683 = vpop.f32.mrb[0].mxu0
        %v2684 = vadd.f32 %v2194, %v2683
        %v2685 = vpop.f32.mrb[0].mxu0
        %v2686 = vadd.f32 %v2190, %v2685
        %v2687 = vpop.f32.mrb[0].mxu0
        %v2688 = vadd.f32 %v2194, %v2687
        %2689 = vmatprep.mubr.bf16.mxu0 %v2150
        %2690 = vmatmul.mubr.bf16.gmra.mrb[0].mxu0 %v2149
        %v2691 = vpop.f32.mrb[0].mxu0
        %v2692 = vadd.f32 %v2190, %v2691
        %v2693 = vpop.f32.mrb[0].mxu0
        %v2694 = vadd.f32 %v2194, %v2693
        %v2695 = vpop.f32.mrb[0].mxu0
        %v2696 = vadd.f32 %v2190, %v2695
        %v2697 = vpop.f32.mrb[0].mxu0
        %v2698 = vadd.f32 %v2194, %v2697
        %2699 = vmatprep.mubr.bf16.mxu0 %v2152
        %2700 = vmatmul.mubr.bf16.gmra.mrb[0].mxu0 %v2151
        %v2701 = vpop.f32.mrb[0].mxu0
        %v2702 = vadd.f32 %v2190, %v2701
        %v2703 = vpop.f32.mrb[0].mxu0
        %v2704 = vadd.f32 %v2194, %v2703
        %v2705 = vpop.f32.mrb[0].mxu0
        %v2706 = vadd.f32 %v2190, %v2705
        %v2707 = vpop.f32.mrb[0].mxu0
        %v2708 = vadd.f32 %v2194, %v2707
        %2709 = vdwg.mxu0
        %v2710 = vmax.f32 %v2392, 0.0
        %v2711 = vmax.f32 %v2394, 0.0
        %v2712 = vmax.f32 %v2396, 0.0
        %v2713 = vmax.f32 %v2398, 0.0
        %v2714 = vmax.f32 %v2402, 0.0
        %v2715 = vmax.f32 %v2404, 0.0
        %v2716 = vmax.f32 %v2406, 0.0
        %v2717 = vmax.f32 %v2408, 0.0
        %v2718 = vmax.f32 %v2412, 0.0
        %v2719 = vmax.f32 %v2414, 0.0
        %v2720 = vmax.f32 %v2416, 0.0
        %v2721 = vmax.f32 %v2418, 0.0
        %v2722 = vmax.f32 %v2422, 0.0
        %v2723 = vmax.f32 %v2424, 0.0
        %v2724 = vmax.f32 %v2426, 0.0
        %v2725 = vmax.f32 %v2428, 0.0
        %v2726 = vmax.f32 %v2432, 0.0
        %v2727 = vmax.f32 %v2434, 0.0
        %v2728 = vmax.f32 %v2436, 0.0
        %v2729 = vmax.f32 %v2438, 0.0
        %v2730 = vmax.f32 %v2442, 0.0
        %v2731 = vmax.f32 %v2444, 0.0
        %v2732 = vmax.f32 %v2446, 0.0
        %v2733 = vmax.f32 %v2448, 0.0
        %v2734 = vmax.f32 %v2452, 0.0
        %v2735 = vmax.f32 %v2454, 0.0
        %v2736 = vmax.f32 %v2456, 0.0
        %v2737 = vmax.f32 %v2458, 0.0
        %v2738 = vmax.f32 %v2462, 0.0
        %v2739 = vmax.f32 %v2464, 0.0
        %v2740 = vmax.f32 %v2466, 0.0
        %v2741 = vmax.f32 %v2468, 0.0
        %v2742 = vmax.f32 %v2472, 0.0
        %v2743 = vmax.f32 %v2474, 0.0
        %v2744 = vmax.f32 %v2476, 0.0
        %v2745 = vmax.f32 %v2478, 0.0
        %v2746 = vmax.f32 %v2482, 0.0
        %v2747 = vmax.f32 %v2484, 0.0
        %v2748 = vmax.f32 %v2486, 0.0
        %v2749 = vmax.f32 %v2488, 0.0
        %v2750 = vmax.f32 %v2492, 0.0
        %v2751 = vmax.f32 %v2494, 0.0
        %v2752 = vmax.f32 %v2496, 0.0
        %v2753 = vmax.f32 %v2498, 0.0
        %v2754 = vmax.f32 %v2502, 0.0
        %v2755 = vmax.f32 %v2504, 0.0
        %v2756 = vmax.f32 %v2506, 0.0
        %v2757 = vmax.f32 %v2508, 0.0
        %v2758 = vmax.f32 %v2512, 0.0
        %v2759 = vmax.f32 %v2514, 0.0
        %v2760 = vmax.f32 %v2516, 0.0
        %v2761 = vmax.f32 %v2518, 0.0
        %v2762 = vmax.f32 %v2522, 0.0
        %v2763 = vmax.f32 %v2524, 0.0
        %v2764 = vmax.f32 %v2526, 0.0
        %v2765 = vmax.f32 %v2528, 0.0
        %v2766 = vmax.f32 %v2532, 0.0
        %v2767 = vmax.f32 %v2534, 0.0
        %v2768 = vmax.f32 %v2536, 0.0
        %v2769 = vmax.f32 %v2538, 0.0
        %v2770 = vmax.f32 %v2542, 0.0
        %v2771 = vmax.f32 %v2544, 0.0
        %v2772 = vmax.f32 %v2546, 0.0
        %v2773 = vmax.f32 %v2548, 0.0
        %v2774 = vmax.f32 %v2552, 0.0
        %v2775 = vmax.f32 %v2554, 0.0
        %v2776 = vmax.f32 %v2556, 0.0
        %v2777 = vmax.f32 %v2558, 0.0
        %v2778 = vmax.f32 %v2562, 0.0
        %v2779 = vmax.f32 %v2564, 0.0
        %v2780 = vmax.f32 %v2566, 0.0
        %v2781 = vmax.f32 %v2568, 0.0
        %v2782 = vmax.f32 %v2572, 0.0
        %v2783 = vmax.f32 %v2574, 0.0
        %v2784 = vmax.f32 %v2576, 0.0
        %v2785 = vmax.f32 %v2578, 0.0
        %v2786 = vmax.f32 %v2582, 0.0
        %v2787 = vmax.f32 %v2584, 0.0
        %v2788 = vmax.f32 %v2586, 0.0
        %v2789 = vmax.f32 %v2588, 0.0
        %v2790 = vmax.f32 %v2592, 0.0
        %v2791 = vmax.f32 %v2594, 0.0
        %v2792 = vmax.f32 %v2596, 0.0
        %v2793 = vmax.f32 %v2598, 0.0
        %v2794 = vmax.f32 %v2602, 0.0
        %v2795 = vmax.f32 %v2604, 0.0
        %v2796 = vmax.f32 %v2606, 0.0
        %v2797 = vmax.f32 %v2608, 0.0
        %v2798 = vmax.f32 %v2612, 0.0
        %v2799 = vmax.f32 %v2614, 0.0
        %v2800 = vmax.f32 %v2616, 0.0
        %v2801 = vmax.f32 %v2618, 0.0
        %v2802 = vmax.f32 %v2622, 0.0
        %v2803 = vmax.f32 %v2624, 0.0
        %v2804 = vmax.f32 %v2626, 0.0
        %v2805 = vmax.f32 %v2628, 0.0
        %v2806 = vmax.f32 %v2632, 0.0
        %v2807 = vmax.f32 %v2634, 0.0
        %v2808 = vmax.f32 %v2636, 0.0
        %v2809 = vmax.f32 %v2638, 0.0
        %v2810 = vmax.f32 %v2642, 0.0
        %v2811 = vmax.f32 %v2644, 0.0
        %v2812 = vmax.f32 %v2646, 0.0
        %v2813 = vmax.f32 %v2648, 0.0
        %v2814 = vmax.f32 %v2652, 0.0
        %v2815 = vmax.f32 %v2654, 0.0
        %v2816 = vmax.f32 %v2656, 0.0
        %v2817 = vmax.f32 %v2658, 0.0
        %v2818 = vmax.f32 %v2662, 0.0
        %v2819 = vmax.f32 %v2664, 0.0
        %v2820 = vmax.f32 %v2666, 0.0
        %v2821 = vmax.f32 %v2668, 0.0
        %v2822 = vmax.f32 %v2672, 0.0
        %v2823 = vmax.f32 %v2674, 0.0
        %v2824 = vmax.f32 %v2676, 0.0
        %v2825 = vmax.f32 %v2678, 0.0
        %v2826 = vmax.f32 %v2682, 0.0
        %v2827 = vmax.f32 %v2684, 0.0
        %v2828 = vmax.f32 %v2686, 0.0
        %v2829 = vmax.f32 %v2688, 0.0
        %v2830 = vmax.f32 %v2692, 0.0
        %v2831 = vmax.f32 %v2694, 0.0
        %v2832 = vmax.f32 %v2696, 0.0
        %v2833 = vmax.f32 %v2698, 0.0
        %v2834 = vmax.f32 %v2702, 0.0
        %v2835 = vmax.f32 %v2704, 0.0
        %v2836 = vmax.f32 %v2706, 0.0
        %v2837 = vmax.f32 %v2708, 0.0
        %v2838 = vpack.c.bf16 %v2712, %v2710
        %v2839 = vpack.c.bf16 %v2713, %v2711
        %v2840 = vpack.c.bf16 %v2716, %v2714
        %v2841 = vpack.c.bf16 %v2717, %v2715
        %v2842 = vpack.c.bf16 %v2720, %v2718
        %v2843 = vpack.c.bf16 %v2721, %v2719
        %v2844 = vpack.c.bf16 %v2724, %v2722
        %v2845 = vpack.c.bf16 %v2725, %v2723
        %v2846 = vpack.c.bf16 %v2728, %v2726
        %v2847 = vpack.c.bf16 %v2729, %v2727
        %v2848 = vpack.c.bf16 %v2732, %v2730
        %v2849 = vpack.c.bf16 %v2733, %v2731
        %v2850 = vpack.c.bf16 %v2736, %v2734
        %v2851 = vpack.c.bf16 %v2737, %v2735
        %v2852 = vpack.c.bf16 %v2740, %v2738
        %v2853 = vpack.c.bf16 %v2741, %v2739
        %v2854 = vpack.c.bf16 %v2744, %v2742
        %v2855 = vpack.c.bf16 %v2745, %v2743
        %v2856 = vpack.c.bf16 %v2748, %v2746
        %v2857 = vpack.c.bf16 %v2749, %v2747
        %v2858 = vpack.c.bf16 %v2752, %v2750
        %v2859 = vpack.c.bf16 %v2753, %v2751
        %v2860 = vpack.c.bf16 %v2756, %v2754
        %v2861 = vpack.c.bf16 %v2757, %v2755
        %v2862 = vpack.c.bf16 %v2760, %v2758
        %v2863 = vpack.c.bf16 %v2761, %v2759
        %v2864 = vpack.c.bf16 %v2764, %v2762
        %v2865 = vpack.c.bf16 %v2765, %v2763
        %v2866 = vpack.c.bf16 %v2768, %v2766
        %v2867 = vpack.c.bf16 %v2769, %v2767
        %v2868 = vpack.c.bf16 %v2772, %v2770
        %v2869 = vpack.c.bf16 %v2773, %v2771
        %v2870 = vpack.c.bf16 %v2776, %v2774
        %v2871 = vpack.c.bf16 %v2777, %v2775
        %v2872 = vpack.c.bf16 %v2780, %v2778
        %v2873 = vpack.c.bf16 %v2781, %v2779
        %v2874 = vpack.c.bf16 %v2784, %v2782
        %v2875 = vpack.c.bf16 %v2785, %v2783
        %v2876 = vpack.c.bf16 %v2788, %v2786
        %v2877 = vpack.c.bf16 %v2789, %v2787
        %v2878 = vpack.c.bf16 %v2792, %v2790
        %v2879 = vpack.c.bf16 %v2793, %v2791
        %v2880 = vpack.c.bf16 %v2796, %v2794
        %v2881 = vpack.c.bf16 %v2797, %v2795
        %v2882 = vpack.c.bf16 %v2800, %v2798
        %v2883 = vpack.c.bf16 %v2801, %v2799
        %v2884 = vpack.c.bf16 %v2804, %v2802
        %v2885 = vpack.c.bf16 %v2805, %v2803
        %v2886 = vpack.c.bf16 %v2808, %v2806
        %v2887 = vpack.c.bf16 %v2809, %v2807
        %v2888 = vpack.c.bf16 %v2812, %v2810
        %v2889 = vpack.c.bf16 %v2813, %v2811
        %v2890 = vpack.c.bf16 %v2816, %v2814
        %v2891 = vpack.c.bf16 %v2817, %v2815
        %v2892 = vpack.c.bf16 %v2820, %v2818
        %v2893 = vpack.c.bf16 %v2821, %v2819
        %v2894 = vpack.c.bf16 %v2824, %v2822
        %v2895 = vpack.c.bf16 %v2825, %v2823
        %v2896 = vpack.c.bf16 %v2828, %v2826
        %v2897 = vpack.c.bf16 %v2829, %v2827
        %v2898 = vpack.c.bf16 %v2832, %v2830
        %v2899 = vpack.c.bf16 %v2833, %v2831
        %v2900 = vpack.c.bf16 %v2836, %v2834
        %v2901 = vpack.c.bf16 %v2837, %v2835
        %s2902 = scalar_lea.vmem %s5, 256
        %v2903 = vld [vmem:[%s2902] sm:$0xff]
        %v2904 = vld [vmem:[%s2902 + $0x8] sm:$0xff]
        %v2905 = vld [vmem:[%s2902 + $0x10] sm:$0xff]
        %v2906 = vld [vmem:[%s2902 + $0x18] sm:$0xff]
        %v2907 = vld [vmem:[%s2902 + $0x20] sm:$0xff]
        %v2908 = vld [vmem:[%s2902 + $0x28] sm:$0xff]
        %v2909 = vld [vmem:[%s2902 + $0x30] sm:$0xff]
        %v2910 = vld [vmem:[%s2902 + $0x38] sm:$0xff]
        %v2911 = vld [vmem:[%s2902 + $0x40] sm:$0xff]
        %v2912 = vld [vmem:[%s2902 + $0x48] sm:$0xff]
        %v2913 = vld [vmem:[%s2902 + $0x50] sm:$0xff]
        %v2914 = vld [vmem:[%s2902 + $0x58] sm:$0xff]
        %v2915 = vld [vmem:[%s2902 + $0x60] sm:$0xff]
        %v2916 = vld [vmem:[%s2902 + $0x68] sm:$0xff]
        %v2917 = vld [vmem:[%s2902 + $0x70] sm:$0xff]
        %v2918 = vld [vmem:[%s2902 + $0x78] sm:$0xff]
        %v2919 = vld [vmem:[%s2902 + $0x80] sm:$0xff]
        %v2920 = vld [vmem:[%s2902 + $0x88] sm:$0xff]
        %v2921 = vld [vmem:[%s2902 + $0x90] sm:$0xff]
        %v2922 = vld [vmem:[%s2902 + $0x98] sm:$0xff]
        %v2923 = vld [vmem:[%s2902 + $0xa0] sm:$0xff]
        %v2924 = vld [vmem:[%s2902 + $0xa8] sm:$0xff]
        %v2925 = vld [vmem:[%s2902 + $0xb0] sm:$0xff]
        %v2926 = vld [vmem:[%s2902 + $0xb8] sm:$0xff]
        %v2927 = vld [vmem:[%s2902 + $0xc0] sm:$0xff]
        %v2928 = vld [vmem:[%s2902 + $0xc8] sm:$0xff]
        %v2929 = vld [vmem:[%s2902 + $0xd0] sm:$0xff]
        %v2930 = vld [vmem:[%s2902 + $0xd8] sm:$0xff]
        %v2931 = vld [vmem:[%s2902 + $0xe0] sm:$0xff]
        %v2932 = vld [vmem:[%s2902 + $0xe8] sm:$0xff]
        %v2933 = vld [vmem:[%s2902 + $0xf0] sm:$0xff]
        %v2934 = vld [vmem:[%s2902 + $0xf8] sm:$0xff]
        %s2935 = scalar_lea.vmem %s6, 1
        %v2936 = vld [vmem:[%s2935] ss:$4 sm:$0x3]
        %v2938 = vlaneseq
        %v2939 = vshrl.u32 %v2938, 7
        %v2940 = vsub.s32 0, %v2939
        %v2941 = vrot.slane %v2936, %v2940
        %v2942 = vlaneseq
        %v2943 = vshrl.u32 %v2942, 7
        %v2944 = vsub.s32 1, %v2943
        %v2945 = vrot.slane %v2936, %v2944
        %v2980 = vunpack.c.l.b16 %v2903
        %v2981 = vunpack.c.h.b16 %v2903
        %v2982 = vunpack.c.l.b16 %v2904
        %v2983 = vunpack.c.h.b16 %v2904
        %v2984 = vunpack.c.l.b16 %v2905
        %v2985 = vunpack.c.h.b16 %v2905
        %v2986 = vunpack.c.l.b16 %v2906
        %v2987 = vunpack.c.h.b16 %v2906
        %v2988 = vunpack.c.l.b16 %v2907
        %v2989 = vunpack.c.h.b16 %v2907
        %v2990 = vunpack.c.l.b16 %v2908
        %v2991 = vunpack.c.h.b16 %v2908
        %v2992 = vunpack.c.l.b16 %v2909
        %v2993 = vunpack.c.h.b16 %v2909
        %v2994 = vunpack.c.l.b16 %v2910
        %v2995 = vunpack.c.h.b16 %v2910
        %v2996 = vunpack.c.l.b16 %v2911
        %v2997 = vunpack.c.h.b16 %v2911
        %v2998 = vunpack.c.l.b16 %v2912
        %v2999 = vunpack.c.h.b16 %v2912
        %v3000 = vunpack.c.l.b16 %v2913
        %v3001 = vunpack.c.h.b16 %v2913
        %v3002 = vunpack.c.l.b16 %v2914
        %v3003 = vunpack.c.h.b16 %v2914
        %v3004 = vunpack.c.l.b16 %v2915
        %v3005 = vunpack.c.h.b16 %v2915
        %v3006 = vunpack.c.l.b16 %v2916
        %v3007 = vunpack.c.h.b16 %v2916
        %v3008 = vunpack.c.l.b16 %v2917
        %v3009 = vunpack.c.h.b16 %v2917
        %v3010 = vunpack.c.l.b16 %v2918
        %v3011 = vunpack.c.h.b16 %v2918
        %v3012 = vunpack.c.l.b16 %v2919
        %v3013 = vunpack.c.h.b16 %v2919
        %v3014 = vunpack.c.l.b16 %v2920
        %v3015 = vunpack.c.h.b16 %v2920
        %v3016 = vunpack.c.l.b16 %v2921
        %v3017 = vunpack.c.h.b16 %v2921
        %v3018 = vunpack.c.l.b16 %v2922
        %v3019 = vunpack.c.h.b16 %v2922
        %v3020 = vunpack.c.l.b16 %v2923
        %v3021 = vunpack.c.h.b16 %v2923
        %v3022 = vunpack.c.l.b16 %v2924
        %v3023 = vunpack.c.h.b16 %v2924
        %v3024 = vunpack.c.l.b16 %v2925
        %v3025 = vunpack.c.h.b16 %v2925
        %v3026 = vunpack.c.l.b16 %v2926
        %v3027 = vunpack.c.h.b16 %v2926
        %v3028 = vunpack.c.l.b16 %v2927
        %v3029 = vunpack.c.h.b16 %v2927
        %v3030 = vunpack.c.l.b16 %v2928
        %v3031 = vunpack.c.h.b16 %v2928
        %v3032 = vunpack.c.l.b16 %v2929
        %v3033 = vunpack.c.h.b16 %v2929
        %v3034 = vunpack.c.l.b16 %v2930
        %v3035 = vunpack.c.h.b16 %v2930
        %v3036 = vunpack.c.l.b16 %v2931
        %v3037 = vunpack.c.h.b16 %v2931
        %v3038 = vunpack.c.l.b16 %v2932
        %v3039 = vunpack.c.h.b16 %v2932
        %v3040 = vunpack.c.l.b16 %v2933
        %v3041 = vunpack.c.h.b16 %v2933
        %v3042 = vunpack.c.l.b16 %v2934
        %v3043 = vunpack.c.h.b16 %v2934
        %v3044 = vpack.c.b16 %v2982, %v2980
        %v3045 = vpack.c.b16 %v2983, %v2981
        %v3046 = vpack.c.b16 %v2986, %v2984
        %v3047 = vpack.c.b16 %v2987, %v2985
        %v3048 = vpack.c.b16 %v2990, %v2988
        %v3049 = vpack.c.b16 %v2991, %v2989
        %v3050 = vpack.c.b16 %v2994, %v2992
        %v3051 = vpack.c.b16 %v2995, %v2993
        %v3052 = vpack.c.b16 %v2998, %v2996
        %v3053 = vpack.c.b16 %v2999, %v2997
        %v3054 = vpack.c.b16 %v3002, %v3000
        %v3055 = vpack.c.b16 %v3003, %v3001
        %v3056 = vpack.c.b16 %v3006, %v3004
        %v3057 = vpack.c.b16 %v3007, %v3005
        %v3058 = vpack.c.b16 %v3010, %v3008
        %v3059 = vpack.c.b16 %v3011, %v3009
        %v3060 = vpack.c.b16 %v3014, %v3012
        %v3061 = vpack.c.b16 %v3015, %v3013
        %v3062 = vpack.c.b16 %v3018, %v3016
        %v3063 = vpack.c.b16 %v3019, %v3017
        %v3064 = vpack.c.b16 %v3022, %v3020
        %v3065 = vpack.c.b16 %v3023, %v3021
        %v3066 = vpack.c.b16 %v3026, %v3024
        %v3067 = vpack.c.b16 %v3027, %v3025
        %v3068 = vpack.c.b16 %v3030, %v3028
        %v3069 = vpack.c.b16 %v3031, %v3029
        %v3070 = vpack.c.b16 %v3034, %v3032
        %v3071 = vpack.c.b16 %v3035, %v3033
        %v3072 = vpack.c.b16 %v3038, %v3036
        %v3073 = vpack.c.b16 %v3039, %v3037
        %v3074 = vpack.c.b16 %v3042, %v3040
        %v3075 = vpack.c.b16 %v3043, %v3041
        %3108 = vmatprep.subr.bf16.mxu0 %v3045
        %3109 = vmatpush1.bf16.msra.mxu0 %v3044
        %3110 = vmatprep.subr.bf16.mxu0 %v3047
        %3111 = vmatpush1.bf16.msra.mxu0 %v3046
        %3112 = vmatprep.subr.bf16.mxu0 %v3049
        %3113 = vmatpush1.bf16.msra.mxu0 %v3048
        %3114 = vmatprep.subr.bf16.mxu0 %v3051
        %3115 = vmatpush1.bf16.msra.mxu0 %v3050
        %3116 = vmatprep.subr.bf16.mxu0 %v3053
        %3117 = vmatpush1.bf16.msra.mxu0 %v3052
        %3118 = vmatprep.subr.bf16.mxu0 %v3055
        %3119 = vmatpush1.bf16.msra.mxu0 %v3054
        %3120 = vmatprep.subr.bf16.mxu0 %v3057
        %3121 = vmatpush1.bf16.msra.mxu0 %v3056
        %3122 = vmatprep.subr.bf16.mxu0 %v3059
        %3123 = vmatpush1.bf16.msra.mxu0 %v3058
        %3124 = vmatprep.subr.bf16.mxu0 %v3061
        %3125 = vmatpush1.bf16.msra.mxu0 %v3060
        %3126 = vmatprep.subr.bf16.mxu0 %v3063
        %3127 = vmatpush1.bf16.msra.mxu0 %v3062
        %3128 = vmatprep.subr.bf16.mxu0 %v3065
        %3129 = vmatpush1.bf16.msra.mxu0 %v3064
        %3130 = vmatprep.subr.bf16.mxu0 %v3067
        %3131 = vmatpush1.bf16.msra.mxu0 %v3066
        %3132 = vmatprep.subr.bf16.mxu0 %v3069
        %3133 = vmatpush1.bf16.msra.mxu0 %v3068
        %3134 = vmatprep.subr.bf16.mxu0 %v3071
        %3135 = vmatpush1.bf16.msra.mxu0 %v3070
        %3136 = vmatprep.subr.bf16.mxu0 %v3073
        %3137 = vmatpush1.bf16.msra.mxu0 %v3072
        %3138 = vmatprep.subr.bf16.mxu0 %v3075
        %3139 = vmatpush1.bf16.msra.mxu0 %v3074
        %3140 = vmatprep.mubr.bf16.mxu0 %v2839
        %3141 = vmatmul.mubr.bf16.gmra.mrb[0].mxu0 %v2838
        %v3142 = vpop.f32.mrb[0].mxu0
        %v3143 = vadd.f32 %v2941, %v3142
        %v3144 = vpop.f32.mrb[0].mxu0
        %v3145 = vadd.f32 %v2945, %v3144
        %v3146 = vpop.f32.mrb[0].mxu0
        %v3147 = vadd.f32 %v2941, %v3146
        %v3148 = vpop.f32.mrb[0].mxu0
        %v3149 = vadd.f32 %v2945, %v3148
        %3150 = vmatprep.mubr.bf16.mxu0 %v2841
        %3151 = vmatmul.mubr.bf16.gmra.mrb[0].mxu0 %v2840
        %v3152 = vpop.f32.mrb[0].mxu0
        %v3153 = vadd.f32 %v2941, %v3152
        %v3154 = vpop.f32.mrb[0].mxu0
        %v3155 = vadd.f32 %v2945, %v3154
        %v3156 = vpop.f32.mrb[0].mxu0
        %v3157 = vadd.f32 %v2941, %v3156
        %v3158 = vpop.f32.mrb[0].mxu0
        %v3159 = vadd.f32 %v2945, %v3158
        %3160 = vmatprep.mubr.bf16.mxu0 %v2843
        %3161 = vmatmul.mubr.bf16.gmra.mrb[0].mxu0 %v2842
        %v3162 = vpop.f32.mrb[0].mxu0
        %v3163 = vadd.f32 %v2941, %v3162
        %v3164 = vpop.f32.mrb[0].mxu0
        %v3165 = vadd.f32 %v2945, %v3164
        %v3166 = vpop.f32.mrb[0].mxu0
        %v3167 = vadd.f32 %v2941, %v3166
        %v3168 = vpop.f32.mrb[0].mxu0
        %v3169 = vadd.f32 %v2945, %v3168
        %3170 = vmatprep.mubr.bf16.mxu0 %v2845
        %3171 = vmatmul.mubr.bf16.gmra.mrb[0].mxu0 %v2844
        %v3172 = vpop.f32.mrb[0].mxu0
        %v3173 = vadd.f32 %v2941, %v3172
        %v3174 = vpop.f32.mrb[0].mxu0
        %v3175 = vadd.f32 %v2945, %v3174
        %v3176 = vpop.f32.mrb[0].mxu0
        %v3177 = vadd.f32 %v2941, %v3176
        %v3178 = vpop.f32.mrb[0].mxu0
        %v3179 = vadd.f32 %v2945, %v3178
        %3180 = vmatprep.mubr.bf16.mxu0 %v2847
        %3181 = vmatmul.mubr.bf16.gmra.mrb[0].mxu0 %v2846
        %v3182 = vpop.f32.mrb[0].mxu0
        %v3183 = vadd.f32 %v2941, %v3182
        %v3184 = vpop.f32.mrb[0].mxu0
        %v3185 = vadd.f32 %v2945, %v3184
        %v3186 = vpop.f32.mrb[0].mxu0
        %v3187 = vadd.f32 %v2941, %v3186
        %v3188 = vpop.f32.mrb[0].mxu0
        %v3189 = vadd.f32 %v2945, %v3188
        %3190 = vmatprep.mubr.bf16.mxu0 %v2849
        %3191 = vmatmul.mubr.bf16.gmra.mrb[0].mxu0 %v2848
        %v3192 = vpop.f32.mrb[0].mxu0
        %v3193 = vadd.f32 %v2941, %v3192
        %v3194 = vpop.f32.mrb[0].mxu0
        %v3195 = vadd.f32 %v2945, %v3194
        %v3196 = vpop.f32.mrb[0].mxu0
        %v3197 = vadd.f32 %v2941, %v3196
        %v3198 = vpop.f32.mrb[0].mxu0
        %v3199 = vadd.f32 %v2945, %v3198
        %3200 = vmatprep.mubr.bf16.mxu0 %v2851
        %3201 = vmatmul.mubr.bf16.gmra.mrb[0].mxu0 %v2850
        %v3202 = vpop.f32.mrb[0].mxu0
        %v3203 = vadd.f32 %v2941, %v3202
        %v3204 = vpop.f32.mrb[0].mxu0
        %v3205 = vadd.f32 %v2945, %v3204
        %v3206 = vpop.f32.mrb[0].mxu0
        %v3207 = vadd.f32 %v2941, %v3206
        %v3208 = vpop.f32.mrb[0].mxu0
        %v3209 = vadd.f32 %v2945, %v3208
        %3210 = vmatprep.mubr.bf16.mxu0 %v2853
        %3211 = vmatmul.mubr.bf16.gmra.mrb[0].mxu0 %v2852
        %v3212 = vpop.f32.mrb[0].mxu0
        %v3213 = vadd.f32 %v2941, %v3212
        %v3214 = vpop.f32.mrb[0].mxu0
        %v3215 = vadd.f32 %v2945, %v3214
        %v3216 = vpop.f32.mrb[0].mxu0
        %v3217 = vadd.f32 %v2941, %v3216
        %v3218 = vpop.f32.mrb[0].mxu0
        %v3219 = vadd.f32 %v2945, %v3218
        %3220 = vmatprep.mubr.bf16.mxu0 %v2855
        %3221 = vmatmul.mubr.bf16.gmra.mrb[0].mxu0 %v2854
        %v3222 = vpop.f32.mrb[0].mxu0
        %v3223 = vadd.f32 %v2941, %v3222
        %v3224 = vpop.f32.mrb[0].mxu0
        %v3225 = vadd.f32 %v2945, %v3224
        %v3226 = vpop.f32.mrb[0].mxu0
        %v3227 = vadd.f32 %v2941, %v3226
        %v3228 = vpop.f32.mrb[0].mxu0
        %v3229 = vadd.f32 %v2945, %v3228
        %3230 = vmatprep.mubr.bf16.mxu0 %v2857
        %3231 = vmatmul.mubr.bf16.gmra.mrb[0].mxu0 %v2856
        %v3232 = vpop.f32.mrb[0].mxu0
        %v3233 = vadd.f32 %v2941, %v3232
        %v3234 = vpop.f32.mrb[0].mxu0
        %v3235 = vadd.f32 %v2945, %v3234
        %v3236 = vpop.f32.mrb[0].mxu0
        %v3237 = vadd.f32 %v2941, %v3236
        %v3238 = vpop.f32.mrb[0].mxu0
        %v3239 = vadd.f32 %v2945, %v3238
        %3240 = vmatprep.mubr.bf16.mxu0 %v2859
        %3241 = vmatmul.mubr.bf16.gmra.mrb[0].mxu0 %v2858
        %v3242 = vpop.f32.mrb[0].mxu0
        %v3243 = vadd.f32 %v2941, %v3242
        %v3244 = vpop.f32.mrb[0].mxu0
        %v3245 = vadd.f32 %v2945, %v3244
        %v3246 = vpop.f32.mrb[0].mxu0
        %v3247 = vadd.f32 %v2941, %v3246
        %v3248 = vpop.f32.mrb[0].mxu0
        %v3249 = vadd.f32 %v2945, %v3248
        %3250 = vmatprep.mubr.bf16.mxu0 %v2861
        %3251 = vmatmul.mubr.bf16.gmra.mrb[0].mxu0 %v2860
        %v3252 = vpop.f32.mrb[0].mxu0
        %v3253 = vadd.f32 %v2941, %v3252
        %v3254 = vpop.f32.mrb[0].mxu0
        %v3255 = vadd.f32 %v2945, %v3254
        %v3256 = vpop.f32.mrb[0].mxu0
        %v3257 = vadd.f32 %v2941, %v3256
        %v3258 = vpop.f32.mrb[0].mxu0
        %v3259 = vadd.f32 %v2945, %v3258
        %3260 = vmatprep.mubr.bf16.mxu0 %v2863
        %3261 = vmatmul.mubr.bf16.gmra.mrb[0].mxu0 %v2862
        %v3262 = vpop.f32.mrb[0].mxu0
        %v3263 = vadd.f32 %v2941, %v3262
        %v3264 = vpop.f32.mrb[0].mxu0
        %v3265 = vadd.f32 %v2945, %v3264
        %v3266 = vpop.f32.mrb[0].mxu0
        %v3267 = vadd.f32 %v2941, %v3266
        %v3268 = vpop.f32.mrb[0].mxu0
        %v3269 = vadd.f32 %v2945, %v3268
        %3270 = vmatprep.mubr.bf16.mxu0 %v2865
        %3271 = vmatmul.mubr.bf16.gmra.mrb[0].mxu0 %v2864
        %v3272 = vpop.f32.mrb[0].mxu0
        %v3273 = vadd.f32 %v2941, %v3272
        %v3274 = vpop.f32.mrb[0].mxu0
        %v3275 = vadd.f32 %v2945, %v3274
        %v3276 = vpop.f32.mrb[0].mxu0
        %v3277 = vadd.f32 %v2941, %v3276
        %v3278 = vpop.f32.mrb[0].mxu0
        %v3279 = vadd.f32 %v2945, %v3278
        %3280 = vmatprep.mubr.bf16.mxu0 %v2867
        %3281 = vmatmul.mubr.bf16.gmra.mrb[0].mxu0 %v2866
        %v3282 = vpop.f32.mrb[0].mxu0
        %v3283 = vadd.f32 %v2941, %v3282
        %v3284 = vpop.f32.mrb[0].mxu0
        %v3285 = vadd.f32 %v2945, %v3284
        %v3286 = vpop.f32.mrb[0].mxu0
        %v3287 = vadd.f32 %v2941, %v3286
        %v3288 = vpop.f32.mrb[0].mxu0
        %v3289 = vadd.f32 %v2945, %v3288
        %3290 = vmatprep.mubr.bf16.mxu0 %v2869
        %3291 = vmatmul.mubr.bf16.gmra.mrb[0].mxu0 %v2868
        %v3292 = vpop.f32.mrb[0].mxu0
        %v3293 = vadd.f32 %v2941, %v3292
        %v3294 = vpop.f32.mrb[0].mxu0
        %v3295 = vadd.f32 %v2945, %v3294
        %v3296 = vpop.f32.mrb[0].mxu0
        %v3297 = vadd.f32 %v2941, %v3296
        %v3298 = vpop.f32.mrb[0].mxu0
        %v3299 = vadd.f32 %v2945, %v3298
        %3300 = vmatprep.mubr.bf16.mxu0 %v2871
        %3301 = vmatmul.mubr.bf16.gmra.mrb[0].mxu0 %v2870
        %v3302 = vpop.f32.mrb[0].mxu0
        %v3303 = vadd.f32 %v2941, %v3302
        %v3304 = vpop.f32.mrb[0].mxu0
        %v3305 = vadd.f32 %v2945, %v3304
        %v3306 = vpop.f32.mrb[0].mxu0
        %v3307 = vadd.f32 %v2941, %v3306
        %v3308 = vpop.f32.mrb[0].mxu0
        %v3309 = vadd.f32 %v2945, %v3308
        %3310 = vmatprep.mubr.bf16.mxu0 %v2873
        %3311 = vmatmul.mubr.bf16.gmra.mrb[0].mxu0 %v2872
        %v3312 = vpop.f32.mrb[0].mxu0
        %v3313 = vadd.f32 %v2941, %v3312
        %v3314 = vpop.f32.mrb[0].mxu0
        %v3315 = vadd.f32 %v2945, %v3314
        %v3316 = vpop.f32.mrb[0].mxu0
        %v3317 = vadd.f32 %v2941, %v3316
        %v3318 = vpop.f32.mrb[0].mxu0
        %v3319 = vadd.f32 %v2945, %v3318
        %3320 = vmatprep.mubr.bf16.mxu0 %v2875
        %3321 = vmatmul.mubr.bf16.gmra.mrb[0].mxu0 %v2874
        %v3322 = vpop.f32.mrb[0].mxu0
        %v3323 = vadd.f32 %v2941, %v3322
        %v3324 = vpop.f32.mrb[0].mxu0
        %v3325 = vadd.f32 %v2945, %v3324
        %v3326 = vpop.f32.mrb[0].mxu0
        %v3327 = vadd.f32 %v2941, %v3326
        %v3328 = vpop.f32.mrb[0].mxu0
        %v3329 = vadd.f32 %v2945, %v3328
        %3330 = vmatprep.mubr.bf16.mxu0 %v2877
        %3331 = vmatmul.mubr.bf16.gmra.mrb[0].mxu0 %v2876
        %v3332 = vpop.f32.mrb[0].mxu0
        %v3333 = vadd.f32 %v2941, %v3332
        %v3334 = vpop.f32.mrb[0].mxu0
        %v3335 = vadd.f32 %v2945, %v3334
        %v3336 = vpop.f32.mrb[0].mxu0
        %v3337 = vadd.f32 %v2941, %v3336
        %v3338 = vpop.f32.mrb[0].mxu0
        %v3339 = vadd.f32 %v2945, %v3338
        %3340 = vmatprep.mubr.bf16.mxu0 %v2879
        %3341 = vmatmul.mubr.bf16.gmra.mrb[0].mxu0 %v2878
        %v3342 = vpop.f32.mrb[0].mxu0
        %v3343 = vadd.f32 %v2941, %v3342
        %v3344 = vpop.f32.mrb[0].mxu0
        %v3345 = vadd.f32 %v2945, %v3344
        %v3346 = vpop.f32.mrb[0].mxu0
        %v3347 = vadd.f32 %v2941, %v3346
        %v3348 = vpop.f32.mrb[0].mxu0
        %v3349 = vadd.f32 %v2945, %v3348
        %3350 = vmatprep.mubr.bf16.mxu0 %v2881
        %3351 = vmatmul.mubr.bf16.gmra.mrb[0].mxu0 %v2880
        %v3352 = vpop.f32.mrb[0].mxu0
        %v3353 = vadd.f32 %v2941, %v3352
        %v3354 = vpop.f32.mrb[0].mxu0
        %v3355 = vadd.f32 %v2945, %v3354
        %v3356 = vpop.f32.mrb[0].mxu0
        %v3357 = vadd.f32 %v2941, %v3356
        %v3358 = vpop.f32.mrb[0].mxu0
        %v3359 = vadd.f32 %v2945, %v3358
        %3360 = vmatprep.mubr.bf16.mxu0 %v2883
        %3361 = vmatmul.mubr.bf16.gmra.mrb[0].mxu0 %v2882
        %v3362 = vpop.f32.mrb[0].mxu0
        %v3363 = vadd.f32 %v2941, %v3362
        %v3364 = vpop.f32.mrb[0].mxu0
        %v3365 = vadd.f32 %v2945, %v3364
        %v3366 = vpop.f32.mrb[0].mxu0
        %v3367 = vadd.f32 %v2941, %v3366
        %v3368 = vpop.f32.mrb[0].mxu0
        %v3369 = vadd.f32 %v2945, %v3368
        %3370 = vmatprep.mubr.bf16.mxu0 %v2885
        %3371 = vmatmul.mubr.bf16.gmra.mrb[0].mxu0 %v2884
        %v3372 = vpop.f32.mrb[0].mxu0
        %v3373 = vadd.f32 %v2941, %v3372
        %v3374 = vpop.f32.mrb[0].mxu0
        %v3375 = vadd.f32 %v2945, %v3374
        %v3376 = vpop.f32.mrb[0].mxu0
        %v3377 = vadd.f32 %v2941, %v3376
        %v3378 = vpop.f32.mrb[0].mxu0
        %v3379 = vadd.f32 %v2945, %v3378
        %3380 = vmatprep.mubr.bf16.mxu0 %v2887
        %3381 = vmatmul.mubr.bf16.gmra.mrb[0].mxu0 %v2886
        %v3382 = vpop.f32.mrb[0].mxu0
        %v3383 = vadd.f32 %v2941, %v3382
        %v3384 = vpop.f32.mrb[0].mxu0
        %v3385 = vadd.f32 %v2945, %v3384
        %v3386 = vpop.f32.mrb[0].mxu0
        %v3387 = vadd.f32 %v2941, %v3386
        %v3388 = vpop.f32.mrb[0].mxu0
        %v3389 = vadd.f32 %v2945, %v3388
        %3390 = vmatprep.mubr.bf16.mxu0 %v2889
        %3391 = vmatmul.mubr.bf16.gmra.mrb[0].mxu0 %v2888
        %v3392 = vpop.f32.mrb[0].mxu0
        %v3393 = vadd.f32 %v2941, %v3392
        %v3394 = vpop.f32.mrb[0].mxu0
        %v3395 = vadd.f32 %v2945, %v3394
        %v3396 = vpop.f32.mrb[0].mxu0
        %v3397 = vadd.f32 %v2941, %v3396
        %v3398 = vpop.f32.mrb[0].mxu0
        %v3399 = vadd.f32 %v2945, %v3398
        %3400 = vmatprep.mubr.bf16.mxu0 %v2891
        %3401 = vmatmul.mubr.bf16.gmra.mrb[0].mxu0 %v2890
        %v3402 = vpop.f32.mrb[0].mxu0
        %v3403 = vadd.f32 %v2941, %v3402
        %v3404 = vpop.f32.mrb[0].mxu0
        %v3405 = vadd.f32 %v2945, %v3404
        %v3406 = vpop.f32.mrb[0].mxu0
        %v3407 = vadd.f32 %v2941, %v3406
        %v3408 = vpop.f32.mrb[0].mxu0
        %v3409 = vadd.f32 %v2945, %v3408
        %3410 = vmatprep.mubr.bf16.mxu0 %v2893
        %3411 = vmatmul.mubr.bf16.gmra.mrb[0].mxu0 %v2892
        %v3412 = vpop.f32.mrb[0].mxu0
        %v3413 = vadd.f32 %v2941, %v3412
        %v3414 = vpop.f32.mrb[0].mxu0
        %v3415 = vadd.f32 %v2945, %v3414
        %v3416 = vpop.f32.mrb[0].mxu0
        %v3417 = vadd.f32 %v2941, %v3416
        %v3418 = vpop.f32.mrb[0].mxu0
        %v3419 = vadd.f32 %v2945, %v3418
        %3420 = vmatprep.mubr.bf16.mxu0 %v2895
        %3421 = vmatmul.mubr.bf16.gmra.mrb[0].mxu0 %v2894
        %v3422 = vpop.f32.mrb[0].mxu0
        %v3423 = vadd.f32 %v2941, %v3422
        %v3424 = vpop.f32.mrb[0].mxu0
        %v3425 = vadd.f32 %v2945, %v3424
        %v3426 = vpop.f32.mrb[0].mxu0
        %v3427 = vadd.f32 %v2941, %v3426
        %v3428 = vpop.f32.mrb[0].mxu0
        %v3429 = vadd.f32 %v2945, %v3428
        %3430 = vmatprep.mubr.bf16.mxu0 %v2897
        %3431 = vmatmul.mubr.bf16.gmra.mrb[0].mxu0 %v2896
        %v3432 = vpop.f32.mrb[0].mxu0
        %v3433 = vadd.f32 %v2941, %v3432
        %v3434 = vpop.f32.mrb[0].mxu0
        %v3435 = vadd.f32 %v2945, %v3434
        %v3436 = vpop.f32.mrb[0].mxu0
        %v3437 = vadd.f32 %v2941, %v3436
        %v3438 = vpop.f32.mrb[0].mxu0
        %v3439 = vadd.f32 %v2945, %v3438
        %3440 = vmatprep.mubr.bf16.mxu0 %v2899
        %3441 = vmatmul.mubr.bf16.gmra.mrb[0].mxu0 %v2898
        %v3442 = vpop.f32.mrb[0].mxu0
        %v3443 = vadd.f32 %v2941, %v3442
        %v3444 = vpop.f32.mrb[0].mxu0
        %v3445 = vadd.f32 %v2945, %v3444
        %v3446 = vpop.f32.mrb[0].mxu0
        %v3447 = vadd.f32 %v2941, %v3446
        %v3448 = vpop.f32.mrb[0].mxu0
        %v3449 = vadd.f32 %v2945, %v3448
        %3450 = vmatprep.mubr.bf16.mxu0 %v2901
        %3451 = vmatmul.mubr.bf16.gmra.mrb[0].mxu0 %v2900
        %v3452 = vpop.f32.mrb[0].mxu0
        %v3453 = vadd.f32 %v2941, %v3452
        %v3454 = vpop.f32.mrb[0].mxu0
        %v3455 = vadd.f32 %v2945, %v3454
        %v3456 = vpop.f32.mrb[0].mxu0
        %v3457 = vadd.f32 %v2941, %v3456
        %v3458 = vpop.f32.mrb[0].mxu0
        %v3459 = vadd.f32 %v2945, %v3458
        %3460 = vdwg.mxu0
        %v3461 = vmax.f32 %v3143, 0.0
        %v3462 = vmax.f32 %v3145, 0.0
        %v3463 = vmax.f32 %v3147, 0.0
        %v3464 = vmax.f32 %v3149, 0.0
        %v3465 = vmax.f32 %v3153, 0.0
        %v3466 = vmax.f32 %v3155, 0.0
        %v3467 = vmax.f32 %v3157, 0.0
        %v3468 = vmax.f32 %v3159, 0.0
        %v3469 = vmax.f32 %v3163, 0.0
        %v3470 = vmax.f32 %v3165, 0.0
        %v3471 = vmax.f32 %v3167, 0.0
        %v3472 = vmax.f32 %v3169, 0.0
        %v3473 = vmax.f32 %v3173, 0.0
        %v3474 = vmax.f32 %v3175, 0.0
        %v3475 = vmax.f32 %v3177, 0.0
        %v3476 = vmax.f32 %v3179, 0.0
        %v3477 = vmax.f32 %v3183, 0.0
        %v3478 = vmax.f32 %v3185, 0.0
        %v3479 = vmax.f32 %v3187, 0.0
        %v3480 = vmax.f32 %v3189, 0.0
        %v3481 = vmax.f32 %v3193, 0.0
        %v3482 = vmax.f32 %v3195, 0.0
        %v3483 = vmax.f32 %v3197, 0.0
        %v3484 = vmax.f32 %v3199, 0.0
        %v3485 = vmax.f32 %v3203, 0.0
        %v3486 = vmax.f32 %v3205, 0.0
        %v3487 = vmax.f32 %v3207, 0.0
        %v3488 = vmax.f32 %v3209, 0.0
        %v3489 = vmax.f32 %v3213, 0.0
        %v3490 = vmax.f32 %v3215, 0.0
        %v3491 = vmax.f32 %v3217, 0.0
        %v3492 = vmax.f32 %v3219, 0.0
        %v3493 = vmax.f32 %v3223, 0.0
        %v3494 = vmax.f32 %v3225, 0.0
        %v3495 = vmax.f32 %v3227, 0.0
        %v3496 = vmax.f32 %v3229, 0.0
        %v3497 = vmax.f32 %v3233, 0.0
        %v3498 = vmax.f32 %v3235, 0.0
        %v3499 = vmax.f32 %v3237, 0.0
        %v3500 = vmax.f32 %v3239, 0.0
        %v3501 = vmax.f32 %v3243, 0.0
        %v3502 = vmax.f32 %v3245, 0.0
        %v3503 = vmax.f32 %v3247, 0.0
        %v3504 = vmax.f32 %v3249, 0.0
        %v3505 = vmax.f32 %v3253, 0.0
        %v3506 = vmax.f32 %v3255, 0.0
        %v3507 = vmax.f32 %v3257, 0.0
        %v3508 = vmax.f32 %v3259, 0.0
        %v3509 = vmax.f32 %v3263, 0.0
        %v3510 = vmax.f32 %v3265, 0.0
        %v3511 = vmax.f32 %v3267, 0.0
        %v3512 = vmax.f32 %v3269, 0.0
        %v3513 = vmax.f32 %v3273, 0.0
        %v3514 = vmax.f32 %v3275, 0.0
        %v3515 = vmax.f32 %v3277, 0.0
        %v3516 = vmax.f32 %v3279, 0.0
        %v3517 = vmax.f32 %v3283, 0.0
        %v3518 = vmax.f32 %v3285, 0.0
        %v3519 = vmax.f32 %v3287, 0.0
        %v3520 = vmax.f32 %v3289, 0.0
        %v3521 = vmax.f32 %v3293, 0.0
        %v3522 = vmax.f32 %v3295, 0.0
        %v3523 = vmax.f32 %v3297, 0.0
        %v3524 = vmax.f32 %v3299, 0.0
        %v3525 = vmax.f32 %v3303, 0.0
        %v3526 = vmax.f32 %v3305, 0.0
        %v3527 = vmax.f32 %v3307, 0.0
        %v3528 = vmax.f32 %v3309, 0.0
        %v3529 = vmax.f32 %v3313, 0.0
        %v3530 = vmax.f32 %v3315, 0.0
        %v3531 = vmax.f32 %v3317, 0.0
        %v3532 = vmax.f32 %v3319, 0.0
        %v3533 = vmax.f32 %v3323, 0.0
        %v3534 = vmax.f32 %v3325, 0.0
        %v3535 = vmax.f32 %v3327, 0.0
        %v3536 = vmax.f32 %v3329, 0.0
        %v3537 = vmax.f32 %v3333, 0.0
        %v3538 = vmax.f32 %v3335, 0.0
        %v3539 = vmax.f32 %v3337, 0.0
        %v3540 = vmax.f32 %v3339, 0.0
        %v3541 = vmax.f32 %v3343, 0.0
        %v3542 = vmax.f32 %v3345, 0.0
        %v3543 = vmax.f32 %v3347, 0.0
        %v3544 = vmax.f32 %v3349, 0.0
        %v3545 = vmax.f32 %v3353, 0.0
        %v3546 = vmax.f32 %v3355, 0.0
        %v3547 = vmax.f32 %v3357, 0.0
        %v3548 = vmax.f32 %v3359, 0.0
        %v3549 = vmax.f32 %v3363, 0.0
        %v3550 = vmax.f32 %v3365, 0.0
        %v3551 = vmax.f32 %v3367, 0.0
        %v3552 = vmax.f32 %v3369, 0.0
        %v3553 = vmax.f32 %v3373, 0.0
        %v3554 = vmax.f32 %v3375, 0.0
        %v3555 = vmax.f32 %v3377, 0.0
        %v3556 = vmax.f32 %v3379, 0.0
        %v3557 = vmax.f32 %v3383, 0.0
        %v3558 = vmax.f32 %v3385, 0.0
        %v3559 = vmax.f32 %v3387, 0.0
        %v3560 = vmax.f32 %v3389, 0.0
        %v3561 = vmax.f32 %v3393, 0.0
        %v3562 = vmax.f32 %v3395, 0.0
        %v3563 = vmax.f32 %v3397, 0.0
        %v3564 = vmax.f32 %v3399, 0.0
        %v3565 = vmax.f32 %v3403, 0.0
        %v3566 = vmax.f32 %v3405, 0.0
        %v3567 = vmax.f32 %v3407, 0.0
        %v3568 = vmax.f32 %v3409, 0.0
        %v3569 = vmax.f32 %v3413, 0.0
        %v3570 = vmax.f32 %v3415, 0.0
        %v3571 = vmax.f32 %v3417, 0.0
        %v3572 = vmax.f32 %v3419, 0.0
        %v3573 = vmax.f32 %v3423, 0.0
        %v3574 = vmax.f32 %v3425, 0.0
        %v3575 = vmax.f32 %v3427, 0.0
        %v3576 = vmax.f32 %v3429, 0.0
        %v3577 = vmax.f32 %v3433, 0.0
        %v3578 = vmax.f32 %v3435, 0.0
        %v3579 = vmax.f32 %v3437, 0.0
        %v3580 = vmax.f32 %v3439, 0.0
        %v3581 = vmax.f32 %v3443, 0.0
        %v3582 = vmax.f32 %v3445, 0.0
        %v3583 = vmax.f32 %v3447, 0.0
        %v3584 = vmax.f32 %v3449, 0.0
        %v3585 = vmax.f32 %v3453, 0.0
        %v3586 = vmax.f32 %v3455, 0.0
        %v3587 = vmax.f32 %v3457, 0.0
        %v3588 = vmax.f32 %v3459, 0.0
        %v3589 = vpack.c.bf16 %v3463, %v3461
        %v3590 = vpack.c.bf16 %v3464, %v3462
        %v3591 = vpack.c.bf16 %v3467, %v3465
        %v3592 = vpack.c.bf16 %v3468, %v3466
        %v3593 = vpack.c.bf16 %v3471, %v3469
        %v3594 = vpack.c.bf16 %v3472, %v3470
        %v3595 = vpack.c.bf16 %v3475, %v3473
        %v3596 = vpack.c.bf16 %v3476, %v3474
        %v3597 = vpack.c.bf16 %v3479, %v3477
        %v3598 = vpack.c.bf16 %v3480, %v3478
        %v3599 = vpack.c.bf16 %v3483, %v3481
        %v3600 = vpack.c.bf16 %v3484, %v3482
        %v3601 = vpack.c.bf16 %v3487, %v3485
        %v3602 = vpack.c.bf16 %v3488, %v3486
        %v3603 = vpack.c.bf16 %v3491, %v3489
        %v3604 = vpack.c.bf16 %v3492, %v3490
        %v3605 = vpack.c.bf16 %v3495, %v3493
        %v3606 = vpack.c.bf16 %v3496, %v3494
        %v3607 = vpack.c.bf16 %v3499, %v3497
        %v3608 = vpack.c.bf16 %v3500, %v3498
        %v3609 = vpack.c.bf16 %v3503, %v3501
        %v3610 = vpack.c.bf16 %v3504, %v3502
        %v3611 = vpack.c.bf16 %v3507, %v3505
        %v3612 = vpack.c.bf16 %v3508, %v3506
        %v3613 = vpack.c.bf16 %v3511, %v3509
        %v3614 = vpack.c.bf16 %v3512, %v3510
        %v3615 = vpack.c.bf16 %v3515, %v3513
        %v3616 = vpack.c.bf16 %v3516, %v3514
        %v3617 = vpack.c.bf16 %v3519, %v3517
        %v3618 = vpack.c.bf16 %v3520, %v3518
        %v3619 = vpack.c.bf16 %v3523, %v3521
        %v3620 = vpack.c.bf16 %v3524, %v3522
        %v3621 = vpack.c.bf16 %v3527, %v3525
        %v3622 = vpack.c.bf16 %v3528, %v3526
        %v3623 = vpack.c.bf16 %v3531, %v3529
        %v3624 = vpack.c.bf16 %v3532, %v3530
        %v3625 = vpack.c.bf16 %v3535, %v3533
        %v3626 = vpack.c.bf16 %v3536, %v3534
        %v3627 = vpack.c.bf16 %v3539, %v3537
        %v3628 = vpack.c.bf16 %v3540, %v3538
        %v3629 = vpack.c.bf16 %v3543, %v3541
        %v3630 = vpack.c.bf16 %v3544, %v3542
        %v3631 = vpack.c.bf16 %v3547, %v3545
        %v3632 = vpack.c.bf16 %v3548, %v3546
        %v3633 = vpack.c.bf16 %v3551, %v3549
        %v3634 = vpack.c.bf16 %v3552, %v3550
        %v3635 = vpack.c.bf16 %v3555, %v3553
        %v3636 = vpack.c.bf16 %v3556, %v3554
        %v3637 = vpack.c.bf16 %v3559, %v3557
        %v3638 = vpack.c.bf16 %v3560, %v3558
        %v3639 = vpack.c.bf16 %v3563, %v3561
        %v3640 = vpack.c.bf16 %v3564, %v3562
        %v3641 = vpack.c.bf16 %v3567, %v3565
        %v3642 = vpack.c.bf16 %v3568, %v3566
        %v3643 = vpack.c.bf16 %v3571, %v3569
        %v3644 = vpack.c.bf16 %v3572, %v3570
        %v3645 = vpack.c.bf16 %v3575, %v3573
        %v3646 = vpack.c.bf16 %v3576, %v3574
        %v3647 = vpack.c.bf16 %v3579, %v3577
        %v3648 = vpack.c.bf16 %v3580, %v3578
        %v3649 = vpack.c.bf16 %v3583, %v3581
        %v3650 = vpack.c.bf16 %v3584, %v3582
        %v3651 = vpack.c.bf16 %v3587, %v3585
        %v3652 = vpack.c.bf16 %v3588, %v3586
        %s3653 = scalar_lea.vmem %s5, 512
        %v3654 = vld [vmem:[%s3653] sm:$0xff]
        %v3655 = vld [vmem:[%s3653 + $0x8] sm:$0xff]
        %v3656 = vld [vmem:[%s3653 + $0x10] sm:$0xff]
        %v3657 = vld [vmem:[%s3653 + $0x18] sm:$0xff]
        %v3658 = vld [vmem:[%s3653 + $0x20] sm:$0xff]
        %v3659 = vld [vmem:[%s3653 + $0x28] sm:$0xff]
        %v3660 = vld [vmem:[%s3653 + $0x30] sm:$0xff]
        %v3661 = vld [vmem:[%s3653 + $0x38] sm:$0xff]
        %v3662 = vld [vmem:[%s3653 + $0x40] sm:$0xff]
        %v3663 = vld [vmem:[%s3653 + $0x48] sm:$0xff]
        %v3664 = vld [vmem:[%s3653 + $0x50] sm:$0xff]
        %v3665 = vld [vmem:[%s3653 + $0x58] sm:$0xff]
        %v3666 = vld [vmem:[%s3653 + $0x60] sm:$0xff]
        %v3667 = vld [vmem:[%s3653 + $0x68] sm:$0xff]
        %v3668 = vld [vmem:[%s3653 + $0x70] sm:$0xff]
        %v3669 = vld [vmem:[%s3653 + $0x78] sm:$0xff]
        %v3670 = vld [vmem:[%s3653 + $0x80] sm:$0xff]
        %v3671 = vld [vmem:[%s3653 + $0x88] sm:$0xff]
        %v3672 = vld [vmem:[%s3653 + $0x90] sm:$0xff]
        %v3673 = vld [vmem:[%s3653 + $0x98] sm:$0xff]
        %v3674 = vld [vmem:[%s3653 + $0xa0] sm:$0xff]
        %v3675 = vld [vmem:[%s3653 + $0xa8] sm:$0xff]
        %v3676 = vld [vmem:[%s3653 + $0xb0] sm:$0xff]
        %v3677 = vld [vmem:[%s3653 + $0xb8] sm:$0xff]
        %v3678 = vld [vmem:[%s3653 + $0xc0] sm:$0xff]
        %v3679 = vld [vmem:[%s3653 + $0xc8] sm:$0xff]
        %v3680 = vld [vmem:[%s3653 + $0xd0] sm:$0xff]
        %v3681 = vld [vmem:[%s3653 + $0xd8] sm:$0xff]
        %v3682 = vld [vmem:[%s3653 + $0xe0] sm:$0xff]
        %v3683 = vld [vmem:[%s3653 + $0xe8] sm:$0xff]
        %v3684 = vld [vmem:[%s3653 + $0xf0] sm:$0xff]
        %v3685 = vld [vmem:[%s3653 + $0xf8] sm:$0xff]
        %s3686 = scalar_lea.vmem %s6, 2
        %v3687 = vld [vmem:[%s3686] ss:$4 sm:$0x3]
        %v3689 = vlaneseq
        %v3690 = vshrl.u32 %v3689, 7
        %v3691 = vsub.s32 0, %v3690
        %v3692 = vrot.slane %v3687, %v3691
        %v3693 = vlaneseq
        %v3694 = vshrl.u32 %v3693, 7
        %v3695 = vsub.s32 1, %v3694
        %v3696 = vrot.slane %v3687, %v3695
        %v3731 = vunpack.c.l.b16 %v3654
        %v3732 = vunpack.c.h.b16 %v3654
        %v3733 = vunpack.c.l.b16 %v3655
        %v3734 = vunpack.c.h.b16 %v3655
        %v3735 = vunpack.c.l.b16 %v3656
        %v3736 = vunpack.c.h.b16 %v3656
        %v3737 = vunpack.c.l.b16 %v3657
        %v3738 = vunpack.c.h.b16 %v3657
        %v3739 = vunpack.c.l.b16 %v3658
        %v3740 = vunpack.c.h.b16 %v3658
        %v3741 = vunpack.c.l.b16 %v3659
        %v3742 = vunpack.c.h.b16 %v3659
        %v3743 = vunpack.c.l.b16 %v3660
        %v3744 = vunpack.c.h.b16 %v3660
        %v3745 = vunpack.c.l.b16 %v3661
        %v3746 = vunpack.c.h.b16 %v3661
        %v3747 = vunpack.c.l.b16 %v3662
        %v3748 = vunpack.c.h.b16 %v3662
        %v3749 = vunpack.c.l.b16 %v3663
        %v3750 = vunpack.c.h.b16 %v3663
        %v3751 = vunpack.c.l.b16 %v3664
        %v3752 = vunpack.c.h.b16 %v3664
        %v3753 = vunpack.c.l.b16 %v3665
        %v3754 = vunpack.c.h.b16 %v3665
        %v3755 = vunpack.c.l.b16 %v3666
        %v3756 = vunpack.c.h.b16 %v3666
        %v3757 = vunpack.c.l.b16 %v3667
        %v3758 = vunpack.c.h.b16 %v3667
        %v3759 = vunpack.c.l.b16 %v3668
        %v3760 = vunpack.c.h.b16 %v3668
        %v3761 = vunpack.c.l.b16 %v3669
        %v3762 = vunpack.c.h.b16 %v3669
        %v3763 = vunpack.c.l.b16 %v3670
        %v3764 = vunpack.c.h.b16 %v3670
        %v3765 = vunpack.c.l.b16 %v3671
        %v3766 = vunpack.c.h.b16 %v3671
        %v3767 = vunpack.c.l.b16 %v3672
        %v3768 = vunpack.c.h.b16 %v3672
        %v3769 = vunpack.c.l.b16 %v3673
        %v3770 = vunpack.c.h.b16 %v3673
        %v3771 = vunpack.c.l.b16 %v3674
        %v3772 = vunpack.c.h.b16 %v3674
        %v3773 = vunpack.c.l.b16 %v3675
        %v3774 = vunpack.c.h.b16 %v3675
        %v3775 = vunpack.c.l.b16 %v3676
        %v3776 = vunpack.c.h.b16 %v3676
        %v3777 = vunpack.c.l.b16 %v3677
        %v3778 = vunpack.c.h.b16 %v3677
        %v3779 = vunpack.c.l.b16 %v3678
        %v3780 = vunpack.c.h.b16 %v3678
        %v3781 = vunpack.c.l.b16 %v3679
        %v3782 = vunpack.c.h.b16 %v3679
        %v3783 = vunpack.c.l.b16 %v3680
        %v3784 = vunpack.c.h.b16 %v3680
        %v3785 = vunpack.c.l.b16 %v3681
        %v3786 = vunpack.c.h.b16 %v3681
        %v3787 = vunpack.c.l.b16 %v3682
        %v3788 = vunpack.c.h.b16 %v3682
        %v3789 = vunpack.c.l.b16 %v3683
        %v3790 = vunpack.c.h.b16 %v3683
        %v3791 = vunpack.c.l.b16 %v3684
        %v3792 = vunpack.c.h.b16 %v3684
        %v3793 = vunpack.c.l.b16 %v3685
        %v3794 = vunpack.c.h.b16 %v3685
        %v3795 = vpack.c.b16 %v3733, %v3731
        %v3796 = vpack.c.b16 %v3734, %v3732
        %v3797 = vpack.c.b16 %v3737, %v3735
        %v3798 = vpack.c.b16 %v3738, %v3736
        %v3799 = vpack.c.b16 %v3741, %v3739
        %v3800 = vpack.c.b16 %v3742, %v3740
        %v3801 = vpack.c.b16 %v3745, %v3743
        %v3802 = vpack.c.b16 %v3746, %v3744
        %v3803 = vpack.c.b16 %v3749, %v3747
        %v3804 = vpack.c.b16 %v3750, %v3748
        %v3805 = vpack.c.b16 %v3753, %v3751
        %v3806 = vpack.c.b16 %v3754, %v3752
        %v3807 = vpack.c.b16 %v3757, %v3755
        %v3808 = vpack.c.b16 %v3758, %v3756
        %v3809 = vpack.c.b16 %v3761, %v3759
        %v3810 = vpack.c.b16 %v3762, %v3760
        %v3811 = vpack.c.b16 %v3765, %v3763
        %v3812 = vpack.c.b16 %v3766, %v3764
        %v3813 = vpack.c.b16 %v3769, %v3767
        %v3814 = vpack.c.b16 %v3770, %v3768
        %v3815 = vpack.c.b16 %v3773, %v3771
        %v3816 = vpack.c.b16 %v3774, %v3772
        %v3817 = vpack.c.b16 %v3777, %v3775
        %v3818 = vpack.c.b16 %v3778, %v3776
        %v3819 = vpack.c.b16 %v3781, %v3779
        %v3820 = vpack.c.b16 %v3782, %v3780
        %v3821 = vpack.c.b16 %v3785, %v3783
        %v3822 = vpack.c.b16 %v3786, %v3784
        %v3823 = vpack.c.b16 %v3789, %v3787
        %v3824 = vpack.c.b16 %v3790, %v3788
        %v3825 = vpack.c.b16 %v3793, %v3791
        %v3826 = vpack.c.b16 %v3794, %v3792
        %3859 = vmatprep.subr.bf16.mxu0 %v3796
        %3860 = vmatpush1.bf16.msra.mxu0 %v3795
        %3861 = vmatprep.subr.bf16.mxu0 %v3798
        %3862 = vmatpush1.bf16.msra.mxu0 %v3797
        %3863 = vmatprep.subr.bf16.mxu0 %v3800
        %3864 = vmatpush1.bf16.msra.mxu0 %v3799
        %3865 = vmatprep.subr.bf16.mxu0 %v3802
        %3866 = vmatpush1.bf16.msra.mxu0 %v3801
        %3867 = vmatprep.subr.bf16.mxu0 %v3804
        %3868 = vmatpush1.bf16.msra.mxu0 %v3803
        %3869 = vmatprep.subr.bf16.mxu0 %v3806
        %3870 = vmatpush1.bf16.msra.mxu0 %v3805
        %3871 = vmatprep.subr.bf16.mxu0 %v3808
        %3872 = vmatpush1.bf16.msra.mxu0 %v3807
        %3873 = vmatprep.subr.bf16.mxu0 %v3810
        %3874 = vmatpush1.bf16.msra.mxu0 %v3809
        %3875 = vmatprep.subr.bf16.mxu0 %v3812
        %3876 = vmatpush1.bf16.msra.mxu0 %v3811
        %3877 = vmatprep.subr.bf16.mxu0 %v3814
        %3878 = vmatpush1.bf16.msra.mxu0 %v3813
        %3879 = vmatprep.subr.bf16.mxu0 %v3816
        %3880 = vmatpush1.bf16.msra.mxu0 %v3815
        %3881 = vmatprep.subr.bf16.mxu0 %v3818
        %3882 = vmatpush1.bf16.msra.mxu0 %v3817
        %3883 = vmatprep.subr.bf16.mxu0 %v3820
        %3884 = vmatpush1.bf16.msra.mxu0 %v3819
        %3885 = vmatprep.subr.bf16.mxu0 %v3822
        %3886 = vmatpush1.bf16.msra.mxu0 %v3821
        %3887 = vmatprep.subr.bf16.mxu0 %v3824
        %3888 = vmatpush1.bf16.msra.mxu0 %v3823
        %3889 = vmatprep.subr.bf16.mxu0 %v3826
        %3890 = vmatpush1.bf16.msra.mxu0 %v3825
        %3891 = vmatprep.mubr.bf16.mxu0 %v3590
        %3892 = vmatmul.mubr.bf16.gmra.mrb[0].mxu0 %v3589
        %v3893 = vpop.f32.mrb[0].mxu0
        %v3894 = vadd.f32 %v3692, %v3893
        %v3895 = vpop.f32.mrb[0].mxu0
        %v3896 = vadd.f32 %v3696, %v3895
        %v3897 = vpop.f32.mrb[0].mxu0
        %v3898 = vadd.f32 %v3692, %v3897
        %v3899 = vpop.f32.mrb[0].mxu0
        %v3900 = vadd.f32 %v3696, %v3899
        %3901 = vmatprep.mubr.bf16.mxu0 %v3592
        %3902 = vmatmul.mubr.bf16.gmra.mrb[0].mxu0 %v3591
        %v3903 = vpop.f32.mrb[0].mxu0
        %v3904 = vadd.f32 %v3692, %v3903
        %v3905 = vpop.f32.mrb[0].mxu0
        %v3906 = vadd.f32 %v3696, %v3905
        %v3907 = vpop.f32.mrb[0].mxu0
        %v3908 = vadd.f32 %v3692, %v3907
        %v3909 = vpop.f32.mrb[0].mxu0
        %v3910 = vadd.f32 %v3696, %v3909
        %3911 = vmatprep.mubr.bf16.mxu0 %v3594
        %3912 = vmatmul.mubr.bf16.gmra.mrb[0].mxu0 %v3593
        %v3913 = vpop.f32.mrb[0].mxu0
        %v3914 = vadd.f32 %v3692, %v3913
        %v3915 = vpop.f32.mrb[0].mxu0
        %v3916 = vadd.f32 %v3696, %v3915
        %v3917 = vpop.f32.mrb[0].mxu0
        %v3918 = vadd.f32 %v3692, %v3917
        %v3919 = vpop.f32.mrb[0].mxu0
        %v3920 = vadd.f32 %v3696, %v3919
        %3921 = vmatprep.mubr.bf16.mxu0 %v3596
        %3922 = vmatmul.mubr.bf16.gmra.mrb[0].mxu0 %v3595
        %v3923 = vpop.f32.mrb[0].mxu0
        %v3924 = vadd.f32 %v3692, %v3923
        %v3925 = vpop.f32.mrb[0].mxu0
        %v3926 = vadd.f32 %v3696, %v3925
        %v3927 = vpop.f32.mrb[0].mxu0
        %v3928 = vadd.f32 %v3692, %v3927
        %v3929 = vpop.f32.mrb[0].mxu0
        %v3930 = vadd.f32 %v3696, %v3929
        %3931 = vmatprep.mubr.bf16.mxu0 %v3598
        %3932 = vmatmul.mubr.bf16.gmra.mrb[0].mxu0 %v3597
        %v3933 = vpop.f32.mrb[0].mxu0
        %v3934 = vadd.f32 %v3692, %v3933
        %v3935 = vpop.f32.mrb[0].mxu0
        %v3936 = vadd.f32 %v3696, %v3935
        %v3937 = vpop.f32.mrb[0].mxu0
        %v3938 = vadd.f32 %v3692, %v3937
        %v3939 = vpop.f32.mrb[0].mxu0
        %v3940 = vadd.f32 %v3696, %v3939
        %3941 = vmatprep.mubr.bf16.mxu0 %v3600
        %3942 = vmatmul.mubr.bf16.gmra.mrb[0].mxu0 %v3599
        %v3943 = vpop.f32.mrb[0].mxu0
        %v3944 = vadd.f32 %v3692, %v3943
        %v3945 = vpop.f32.mrb[0].mxu0
        %v3946 = vadd.f32 %v3696, %v3945
        %v3947 = vpop.f32.mrb[0].mxu0
        %v3948 = vadd.f32 %v3692, %v3947
        %v3949 = vpop.f32.mrb[0].mxu0
        %v3950 = vadd.f32 %v3696, %v3949
        %3951 = vmatprep.mubr.bf16.mxu0 %v3602
        %3952 = vmatmul.mubr.bf16.gmra.mrb[0].mxu0 %v3601
        %v3953 = vpop.f32.mrb[0].mxu0
        %v3954 = vadd.f32 %v3692, %v3953
        %v3955 = vpop.f32.mrb[0].mxu0
        %v3956 = vadd.f32 %v3696, %v3955
        %v3957 = vpop.f32.mrb[0].mxu0
        %v3958 = vadd.f32 %v3692, %v3957
        %v3959 = vpop.f32.mrb[0].mxu0
        %v3960 = vadd.f32 %v3696, %v3959
        %3961 = vmatprep.mubr.bf16.mxu0 %v3604
        %3962 = vmatmul.mubr.bf16.gmra.mrb[0].mxu0 %v3603
        %v3963 = vpop.f32.mrb[0].mxu0
        %v3964 = vadd.f32 %v3692, %v3963
        %v3965 = vpop.f32.mrb[0].mxu0
        %v3966 = vadd.f32 %v3696, %v3965
        %v3967 = vpop.f32.mrb[0].mxu0
        %v3968 = vadd.f32 %v3692, %v3967
        %v3969 = vpop.f32.mrb[0].mxu0
        %v3970 = vadd.f32 %v3696, %v3969
        %3971 = vmatprep.mubr.bf16.mxu0 %v3606
        %3972 = vmatmul.mubr.bf16.gmra.mrb[0].mxu0 %v3605
        %v3973 = vpop.f32.mrb[0].mxu0
        %v3974 = vadd.f32 %v3692, %v3973
        %v3975 = vpop.f32.mrb[0].mxu0
        %v3976 = vadd.f32 %v3696, %v3975
        %v3977 = vpop.f32.mrb[0].mxu0
        %v3978 = vadd.f32 %v3692, %v3977
        %v3979 = vpop.f32.mrb[0].mxu0
        %v3980 = vadd.f32 %v3696, %v3979
        %3981 = vmatprep.mubr.bf16.mxu0 %v3608
        %3982 = vmatmul.mubr.bf16.gmra.mrb[0].mxu0 %v3607
        %v3983 = vpop.f32.mrb[0].mxu0
        %v3984 = vadd.f32 %v3692, %v3983
        %v3985 = vpop.f32.mrb[0].mxu0
        %v3986 = vadd.f32 %v3696, %v3985
        %v3987 = vpop.f32.mrb[0].mxu0
        %v3988 = vadd.f32 %v3692, %v3987
        %v3989 = vpop.f32.mrb[0].mxu0
        %v3990 = vadd.f32 %v3696, %v3989
        %3991 = vmatprep.mubr.bf16.mxu0 %v3610
        %3992 = vmatmul.mubr.bf16.gmra.mrb[0].mxu0 %v3609
        %v3993 = vpop.f32.mrb[0].mxu0
        %v3994 = vadd.f32 %v3692, %v3993
        %v3995 = vpop.f32.mrb[0].mxu0
        %v3996 = vadd.f32 %v3696, %v3995
        %v3997 = vpop.f32.mrb[0].mxu0
        %v3998 = vadd.f32 %v3692, %v3997
        %v3999 = vpop.f32.mrb[0].mxu0
        %v4000 = vadd.f32 %v3696, %v3999
        %4001 = vmatprep.mubr.bf16.mxu0 %v3612
        %4002 = vmatmul.mubr.bf16.gmra.mrb[0].mxu0 %v3611
        %v4003 = vpop.f32.mrb[0].mxu0
        %v4004 = vadd.f32 %v3692, %v4003
        %v4005 = vpop.f32.mrb[0].mxu0
        %v4006 = vadd.f32 %v3696, %v4005
        %v4007 = vpop.f32.mrb[0].mxu0
        %v4008 = vadd.f32 %v3692, %v4007
        %v4009 = vpop.f32.mrb[0].mxu0
        %v4010 = vadd.f32 %v3696, %v4009
        %4011 = vmatprep.mubr.bf16.mxu0 %v3614
        %4012 = vmatmul.mubr.bf16.gmra.mrb[0].mxu0 %v3613
        %v4013 = vpop.f32.mrb[0].mxu0
        %v4014 = vadd.f32 %v3692, %v4013
        %v4015 = vpop.f32.mrb[0].mxu0
        %v4016 = vadd.f32 %v3696, %v4015
        %v4017 = vpop.f32.mrb[0].mxu0
        %v4018 = vadd.f32 %v3692, %v4017
        %v4019 = vpop.f32.mrb[0].mxu0
        %v4020 = vadd.f32 %v3696, %v4019
        %4021 = vmatprep.mubr.bf16.mxu0 %v3616
        %4022 = vmatmul.mubr.bf16.gmra.mrb[0].mxu0 %v3615
        %v4023 = vpop.f32.mrb[0].mxu0
        %v4024 = vadd.f32 %v3692, %v4023
        %v4025 = vpop.f32.mrb[0].mxu0
        %v4026 = vadd.f32 %v3696, %v4025
        %v4027 = vpop.f32.mrb[0].mxu0
        %v4028 = vadd.f32 %v3692, %v4027
        %v4029 = vpop.f32.mrb[0].mxu0
        %v4030 = vadd.f32 %v3696, %v4029
        %4031 = vmatprep.mubr.bf16.mxu0 %v3618
        %4032 = vmatmul.mubr.bf16.gmra.mrb[0].mxu0 %v3617
        %v4033 = vpop.f32.mrb[0].mxu0
        %v4034 = vadd.f32 %v3692, %v4033
        %v4035 = vpop.f32.mrb[0].mxu0
        %v4036 = vadd.f32 %v3696, %v4035
        %v4037 = vpop.f32.mrb[0].mxu0
        %v4038 = vadd.f32 %v3692, %v4037
        %v4039 = vpop.f32.mrb[0].mxu0
        %v4040 = vadd.f32 %v3696, %v4039
        %4041 = vmatprep.mubr.bf16.mxu0 %v3620
        %4042 = vmatmul.mubr.bf16.gmra.mrb[0].mxu0 %v3619
        %v4043 = vpop.f32.mrb[0].mxu0
        %v4044 = vadd.f32 %v3692, %v4043
        %v4045 = vpop.f32.mrb[0].mxu0
        %v4046 = vadd.f32 %v3696, %v4045
        %v4047 = vpop.f32.mrb[0].mxu0
        %v4048 = vadd.f32 %v3692, %v4047
        %v4049 = vpop.f32.mrb[0].mxu0
        %v4050 = vadd.f32 %v3696, %v4049
        %4051 = vmatprep.mubr.bf16.mxu0 %v3622
        %4052 = vmatmul.mubr.bf16.gmra.mrb[0].mxu0 %v3621
        %v4053 = vpop.f32.mrb[0].mxu0
        %v4054 = vadd.f32 %v3692, %v4053
        %v4055 = vpop.f32.mrb[0].mxu0
        %v4056 = vadd.f32 %v3696, %v4055
        %v4057 = vpop.f32.mrb[0].mxu0
        %v4058 = vadd.f32 %v3692, %v4057
        %v4059 = vpop.f32.mrb[0].mxu0
        %v4060 = vadd.f32 %v3696, %v4059
        %4061 = vmatprep.mubr.bf16.mxu0 %v3624
        %4062 = vmatmul.mubr.bf16.gmra.mrb[0].mxu0 %v3623
        %v4063 = vpop.f32.mrb[0].mxu0
        %v4064 = vadd.f32 %v3692, %v4063
        %v4065 = vpop.f32.mrb[0].mxu0
        %v4066 = vadd.f32 %v3696, %v4065
        %v4067 = vpop.f32.mrb[0].mxu0
        %v4068 = vadd.f32 %v3692, %v4067
        %v4069 = vpop.f32.mrb[0].mxu0
        %v4070 = vadd.f32 %v3696, %v4069
        %4071 = vmatprep.mubr.bf16.mxu0 %v3626
        %4072 = vmatmul.mubr.bf16.gmra.mrb[0].mxu0 %v3625
        %v4073 = vpop.f32.mrb[0].mxu0
        %v4074 = vadd.f32 %v3692, %v4073
        %v4075 = vpop.f32.mrb[0].mxu0
        %v4076 = vadd.f32 %v3696, %v4075
        %v4077 = vpop.f32.mrb[0].mxu0
        %v4078 = vadd.f32 %v3692, %v4077
        %v4079 = vpop.f32.mrb[0].mxu0
        %v4080 = vadd.f32 %v3696, %v4079
        %4081 = vmatprep.mubr.bf16.mxu0 %v3628
        %4082 = vmatmul.mubr.bf16.gmra.mrb[0].mxu0 %v3627
        %v4083 = vpop.f32.mrb[0].mxu0
        %v4084 = vadd.f32 %v3692, %v4083
        %v4085 = vpop.f32.mrb[0].mxu0
        %v4086 = vadd.f32 %v3696, %v4085
        %v4087 = vpop.f32.mrb[0].mxu0
        %v4088 = vadd.f32 %v3692, %v4087
        %v4089 = vpop.f32.mrb[0].mxu0
        %v4090 = vadd.f32 %v3696, %v4089
        %4091 = vmatprep.mubr.bf16.mxu0 %v3630
        %4092 = vmatmul.mubr.bf16.gmra.mrb[0].mxu0 %v3629
        %v4093 = vpop.f32.mrb[0].mxu0
        %v4094 = vadd.f32 %v3692, %v4093
        %v4095 = vpop.f32.mrb[0].mxu0
        %v4096 = vadd.f32 %v3696, %v4095
        %v4097 = vpop.f32.mrb[0].mxu0
        %v4098 = vadd.f32 %v3692, %v4097
        %v4099 = vpop.f32.mrb[0].mxu0
        %v4100 = vadd.f32 %v3696, %v4099
        %4101 = vmatprep.mubr.bf16.mxu0 %v3632
        %4102 = vmatmul.mubr.bf16.gmra.mrb[0].mxu0 %v3631
        %v4103 = vpop.f32.mrb[0].mxu0
        %v4104 = vadd.f32 %v3692, %v4103
        %v4105 = vpop.f32.mrb[0].mxu0
        %v4106 = vadd.f32 %v3696, %v4105
        %v4107 = vpop.f32.mrb[0].mxu0
        %v4108 = vadd.f32 %v3692, %v4107
        %v4109 = vpop.f32.mrb[0].mxu0
        %v4110 = vadd.f32 %v3696, %v4109
        %4111 = vmatprep.mubr.bf16.mxu0 %v3634
        %4112 = vmatmul.mubr.bf16.gmra.mrb[0].mxu0 %v3633
        %v4113 = vpop.f32.mrb[0].mxu0
        %v4114 = vadd.f32 %v3692, %v4113
        %v4115 = vpop.f32.mrb[0].mxu0
        %v4116 = vadd.f32 %v3696, %v4115
        %v4117 = vpop.f32.mrb[0].mxu0
        %v4118 = vadd.f32 %v3692, %v4117
        %v4119 = vpop.f32.mrb[0].mxu0
        %v4120 = vadd.f32 %v3696, %v4119
        %4121 = vmatprep.mubr.bf16.mxu0 %v3636
        %4122 = vmatmul.mubr.bf16.gmra.mrb[0].mxu0 %v3635
        %v4123 = vpop.f32.mrb[0].mxu0
        %v4124 = vadd.f32 %v3692, %v4123
        %v4125 = vpop.f32.mrb[0].mxu0
        %v4126 = vadd.f32 %v3696, %v4125
        %v4127 = vpop.f32.mrb[0].mxu0
        %v4128 = vadd.f32 %v3692, %v4127
        %v4129 = vpop.f32.mrb[0].mxu0
        %v4130 = vadd.f32 %v3696, %v4129
        %4131 = vmatprep.mubr.bf16.mxu0 %v3638
        %4132 = vmatmul.mubr.bf16.gmra.mrb[0].mxu0 %v3637
        %v4133 = vpop.f32.mrb[0].mxu0
        %v4134 = vadd.f32 %v3692, %v4133
        %v4135 = vpop.f32.mrb[0].mxu0
        %v4136 = vadd.f32 %v3696, %v4135
        %v4137 = vpop.f32.mrb[0].mxu0
        %v4138 = vadd.f32 %v3692, %v4137
        %v4139 = vpop.f32.mrb[0].mxu0
        %v4140 = vadd.f32 %v3696, %v4139
        %4141 = vmatprep.mubr.bf16.mxu0 %v3640
        %4142 = vmatmul.mubr.bf16.gmra.mrb[0].mxu0 %v3639
        %v4143 = vpop.f32.mrb[0].mxu0
        %v4144 = vadd.f32 %v3692, %v4143
        %v4145 = vpop.f32.mrb[0].mxu0
        %v4146 = vadd.f32 %v3696, %v4145
        %v4147 = vpop.f32.mrb[0].mxu0
        %v4148 = vadd.f32 %v3692, %v4147
        %v4149 = vpop.f32.mrb[0].mxu0
        %v4150 = vadd.f32 %v3696, %v4149
        %4151 = vmatprep.mubr.bf16.mxu0 %v3642
        %4152 = vmatmul.mubr.bf16.gmra.mrb[0].mxu0 %v3641
        %v4153 = vpop.f32.mrb[0].mxu0
        %v4154 = vadd.f32 %v3692, %v4153
        %v4155 = vpop.f32.mrb[0].mxu0
        %v4156 = vadd.f32 %v3696, %v4155
        %v4157 = vpop.f32.mrb[0].mxu0
        %v4158 = vadd.f32 %v3692, %v4157
        %v4159 = vpop.f32.mrb[0].mxu0
        %v4160 = vadd.f32 %v3696, %v4159
        %4161 = vmatprep.mubr.bf16.mxu0 %v3644
        %4162 = vmatmul.mubr.bf16.gmra.mrb[0].mxu0 %v3643
        %v4163 = vpop.f32.mrb[0].mxu0
        %v4164 = vadd.f32 %v3692, %v4163
        %v4165 = vpop.f32.mrb[0].mxu0
        %v4166 = vadd.f32 %v3696, %v4165
        %v4167 = vpop.f32.mrb[0].mxu0
        %v4168 = vadd.f32 %v3692, %v4167
        %v4169 = vpop.f32.mrb[0].mxu0
        %v4170 = vadd.f32 %v3696, %v4169
        %4171 = vmatprep.mubr.bf16.mxu0 %v3646
        %4172 = vmatmul.mubr.bf16.gmra.mrb[0].mxu0 %v3645
        %v4173 = vpop.f32.mrb[0].mxu0
        %v4174 = vadd.f32 %v3692, %v4173
        %v4175 = vpop.f32.mrb[0].mxu0
        %v4176 = vadd.f32 %v3696, %v4175
        %v4177 = vpop.f32.mrb[0].mxu0
        %v4178 = vadd.f32 %v3692, %v4177
        %v4179 = vpop.f32.mrb[0].mxu0
        %v4180 = vadd.f32 %v3696, %v4179
        %4181 = vmatprep.mubr.bf16.mxu0 %v3648
        %4182 = vmatmul.mubr.bf16.gmra.mrb[0].mxu0 %v3647
        %v4183 = vpop.f32.mrb[0].mxu0
        %v4184 = vadd.f32 %v3692, %v4183
        %v4185 = vpop.f32.mrb[0].mxu0
        %v4186 = vadd.f32 %v3696, %v4185
        %v4187 = vpop.f32.mrb[0].mxu0
        %v4188 = vadd.f32 %v3692, %v4187
        %v4189 = vpop.f32.mrb[0].mxu0
        %v4190 = vadd.f32 %v3696, %v4189
        %4191 = vmatprep.mubr.bf16.mxu0 %v3650
        %4192 = vmatmul.mubr.bf16.gmra.mrb[0].mxu0 %v3649
        %v4193 = vpop.f32.mrb[0].mxu0
        %v4194 = vadd.f32 %v3692, %v4193
        %v4195 = vpop.f32.mrb[0].mxu0
        %v4196 = vadd.f32 %v3696, %v4195
        %v4197 = vpop.f32.mrb[0].mxu0
        %v4198 = vadd.f32 %v3692, %v4197
        %v4199 = vpop.f32.mrb[0].mxu0
        %v4200 = vadd.f32 %v3696, %v4199
        %4201 = vmatprep.mubr.bf16.mxu0 %v3652
        %4202 = vmatmul.mubr.bf16.gmra.mrb[0].mxu0 %v3651
        %v4203 = vpop.f32.mrb[0].mxu0
        %v4204 = vadd.f32 %v3692, %v4203
        %v4205 = vpop.f32.mrb[0].mxu0
        %v4206 = vadd.f32 %v3696, %v4205
        %v4207 = vpop.f32.mrb[0].mxu0
        %v4208 = vadd.f32 %v3692, %v4207
        %v4209 = vpop.f32.mrb[0].mxu0
        %v4210 = vadd.f32 %v3696, %v4209
        %4211 = vdwg.mxu0
        %v4212 = vmax.f32 %v3894, 0.0
        %v4213 = vmax.f32 %v3896, 0.0
        %v4214 = vmax.f32 %v3898, 0.0
        %v4215 = vmax.f32 %v3900, 0.0
        %v4216 = vmax.f32 %v3904, 0.0
        %v4217 = vmax.f32 %v3906, 0.0
        %v4218 = vmax.f32 %v3908, 0.0
        %v4219 = vmax.f32 %v3910, 0.0
        %v4220 = vmax.f32 %v3914, 0.0
        %v4221 = vmax.f32 %v3916, 0.0
        %v4222 = vmax.f32 %v3918, 0.0
        %v4223 = vmax.f32 %v3920, 0.0
        %v4224 = vmax.f32 %v3924, 0.0
        %v4225 = vmax.f32 %v3926, 0.0
        %v4226 = vmax.f32 %v3928, 0.0
        %v4227 = vmax.f32 %v3930, 0.0
        %v4228 = vmax.f32 %v3934, 0.0
        %v4229 = vmax.f32 %v3936, 0.0
        %v4230 = vmax.f32 %v3938, 0.0
        %v4231 = vmax.f32 %v3940, 0.0
        %v4232 = vmax.f32 %v3944, 0.0
        %v4233 = vmax.f32 %v3946, 0.0
        %v4234 = vmax.f32 %v3948, 0.0
        %v4235 = vmax.f32 %v3950, 0.0
        %v4236 = vmax.f32 %v3954, 0.0
        %v4237 = vmax.f32 %v3956, 0.0
        %v4238 = vmax.f32 %v3958, 0.0
        %v4239 = vmax.f32 %v3960, 0.0
        %v4240 = vmax.f32 %v3964, 0.0
        %v4241 = vmax.f32 %v3966, 0.0
        %v4242 = vmax.f32 %v3968, 0.0
        %v4243 = vmax.f32 %v3970, 0.0
        %v4244 = vmax.f32 %v3974, 0.0
        %v4245 = vmax.f32 %v3976, 0.0
        %v4246 = vmax.f32 %v3978, 0.0
        %v4247 = vmax.f32 %v3980, 0.0
        %v4248 = vmax.f32 %v3984, 0.0
        %v4249 = vmax.f32 %v3986, 0.0
        %v4250 = vmax.f32 %v3988, 0.0
        %v4251 = vmax.f32 %v3990, 0.0
        %v4252 = vmax.f32 %v3994, 0.0
        %v4253 = vmax.f32 %v3996, 0.0
        %v4254 = vmax.f32 %v3998, 0.0
        %v4255 = vmax.f32 %v4000, 0.0
        %v4256 = vmax.f32 %v4004, 0.0
        %v4257 = vmax.f32 %v4006, 0.0
        %v4258 = vmax.f32 %v4008, 0.0
        %v4259 = vmax.f32 %v4010, 0.0
        %v4260 = vmax.f32 %v4014, 0.0
        %v4261 = vmax.f32 %v4016, 0.0
        %v4262 = vmax.f32 %v4018, 0.0
        %v4263 = vmax.f32 %v4020, 0.0
        %v4264 = vmax.f32 %v4024, 0.0
        %v4265 = vmax.f32 %v4026, 0.0
        %v4266 = vmax.f32 %v4028, 0.0
        %v4267 = vmax.f32 %v4030, 0.0
        %v4268 = vmax.f32 %v4034, 0.0
        %v4269 = vmax.f32 %v4036, 0.0
        %v4270 = vmax.f32 %v4038, 0.0
        %v4271 = vmax.f32 %v4040, 0.0
        %v4272 = vmax.f32 %v4044, 0.0
        %v4273 = vmax.f32 %v4046, 0.0
        %v4274 = vmax.f32 %v4048, 0.0
        %v4275 = vmax.f32 %v4050, 0.0
        %v4276 = vmax.f32 %v4054, 0.0
        %v4277 = vmax.f32 %v4056, 0.0
        %v4278 = vmax.f32 %v4058, 0.0
        %v4279 = vmax.f32 %v4060, 0.0
        %v4280 = vmax.f32 %v4064, 0.0
        %v4281 = vmax.f32 %v4066, 0.0
        %v4282 = vmax.f32 %v4068, 0.0
        %v4283 = vmax.f32 %v4070, 0.0
        %v4284 = vmax.f32 %v4074, 0.0
        %v4285 = vmax.f32 %v4076, 0.0
        %v4286 = vmax.f32 %v4078, 0.0
        %v4287 = vmax.f32 %v4080, 0.0
        %v4288 = vmax.f32 %v4084, 0.0
        %v4289 = vmax.f32 %v4086, 0.0
        %v4290 = vmax.f32 %v4088, 0.0
        %v4291 = vmax.f32 %v4090, 0.0
        %v4292 = vmax.f32 %v4094, 0.0
        %v4293 = vmax.f32 %v4096, 0.0
        %v4294 = vmax.f32 %v4098, 0.0
        %v4295 = vmax.f32 %v4100, 0.0
        %v4296 = vmax.f32 %v4104, 0.0
        %v4297 = vmax.f32 %v4106, 0.0
        %v4298 = vmax.f32 %v4108, 0.0
        %v4299 = vmax.f32 %v4110, 0.0
        %v4300 = vmax.f32 %v4114, 0.0
        %v4301 = vmax.f32 %v4116, 0.0
        %v4302 = vmax.f32 %v4118, 0.0
        %v4303 = vmax.f32 %v4120, 0.0
        %v4304 = vmax.f32 %v4124, 0.0
        %v4305 = vmax.f32 %v4126, 0.0
        %v4306 = vmax.f32 %v4128, 0.0
        %v4307 = vmax.f32 %v4130, 0.0
        %v4308 = vmax.f32 %v4134, 0.0
        %v4309 = vmax.f32 %v4136, 0.0
        %v4310 = vmax.f32 %v4138, 0.0
        %v4311 = vmax.f32 %v4140, 0.0
        %v4312 = vmax.f32 %v4144, 0.0
        %v4313 = vmax.f32 %v4146, 0.0
        %v4314 = vmax.f32 %v4148, 0.0
        %v4315 = vmax.f32 %v4150, 0.0
        %v4316 = vmax.f32 %v4154, 0.0
        %v4317 = vmax.f32 %v4156, 0.0
        %v4318 = vmax.f32 %v4158, 0.0
        %v4319 = vmax.f32 %v4160, 0.0
        %v4320 = vmax.f32 %v4164, 0.0
        %v4321 = vmax.f32 %v4166, 0.0
        %v4322 = vmax.f32 %v4168, 0.0
        %v4323 = vmax.f32 %v4170, 0.0
        %v4324 = vmax.f32 %v4174, 0.0
        %v4325 = vmax.f32 %v4176, 0.0
        %v4326 = vmax.f32 %v4178, 0.0
        %v4327 = vmax.f32 %v4180, 0.0
        %v4328 = vmax.f32 %v4184, 0.0
        %v4329 = vmax.f32 %v4186, 0.0
        %v4330 = vmax.f32 %v4188, 0.0
        %v4331 = vmax.f32 %v4190, 0.0
        %v4332 = vmax.f32 %v4194, 0.0
        %v4333 = vmax.f32 %v4196, 0.0
        %v4334 = vmax.f32 %v4198, 0.0
        %v4335 = vmax.f32 %v4200, 0.0
        %v4336 = vmax.f32 %v4204, 0.0
        %v4337 = vmax.f32 %v4206, 0.0
        %v4338 = vmax.f32 %v4208, 0.0
        %v4339 = vmax.f32 %v4210, 0.0
        %v4340 = vpack.c.bf16 %v4214, %v4212
        %v4341 = vpack.c.bf16 %v4215, %v4213
        %v4342 = vpack.c.bf16 %v4218, %v4216
        %v4343 = vpack.c.bf16 %v4219, %v4217
        %v4344 = vpack.c.bf16 %v4222, %v4220
        %v4345 = vpack.c.bf16 %v4223, %v4221
        %v4346 = vpack.c.bf16 %v4226, %v4224
        %v4347 = vpack.c.bf16 %v4227, %v4225
        %v4348 = vpack.c.bf16 %v4230, %v4228
        %v4349 = vpack.c.bf16 %v4231, %v4229
        %v4350 = vpack.c.bf16 %v4234, %v4232
        %v4351 = vpack.c.bf16 %v4235, %v4233
        %v4352 = vpack.c.bf16 %v4238, %v4236
        %v4353 = vpack.c.bf16 %v4239, %v4237
        %v4354 = vpack.c.bf16 %v4242, %v4240
        %v4355 = vpack.c.bf16 %v4243, %v4241
        %v4356 = vpack.c.bf16 %v4246, %v4244
        %v4357 = vpack.c.bf16 %v4247, %v4245
        %v4358 = vpack.c.bf16 %v4250, %v4248
        %v4359 = vpack.c.bf16 %v4251, %v4249
        %v4360 = vpack.c.bf16 %v4254, %v4252
        %v4361 = vpack.c.bf16 %v4255, %v4253
        %v4362 = vpack.c.bf16 %v4258, %v4256
        %v4363 = vpack.c.bf16 %v4259, %v4257
        %v4364 = vpack.c.bf16 %v4262, %v4260
        %v4365 = vpack.c.bf16 %v4263, %v4261
        %v4366 = vpack.c.bf16 %v4266, %v4264
        %v4367 = vpack.c.bf16 %v4267, %v4265
        %v4368 = vpack.c.bf16 %v4270, %v4268
        %v4369 = vpack.c.bf16 %v4271, %v4269
        %v4370 = vpack.c.bf16 %v4274, %v4272
        %v4371 = vpack.c.bf16 %v4275, %v4273
        %v4372 = vpack.c.bf16 %v4278, %v4276
        %v4373 = vpack.c.bf16 %v4279, %v4277
        %v4374 = vpack.c.bf16 %v4282, %v4280
        %v4375 = vpack.c.bf16 %v4283, %v4281
        %v4376 = vpack.c.bf16 %v4286, %v4284
        %v4377 = vpack.c.bf16 %v4287, %v4285
        %v4378 = vpack.c.bf16 %v4290, %v4288
        %v4379 = vpack.c.bf16 %v4291, %v4289
        %v4380 = vpack.c.bf16 %v4294, %v4292
        %v4381 = vpack.c.bf16 %v4295, %v4293
        %v4382 = vpack.c.bf16 %v4298, %v4296
        %v4383 = vpack.c.bf16 %v4299, %v4297
        %v4384 = vpack.c.bf16 %v4302, %v4300
        %v4385 = vpack.c.bf16 %v4303, %v4301
        %v4386 = vpack.c.bf16 %v4306, %v4304
        %v4387 = vpack.c.bf16 %v4307, %v4305
        %v4388 = vpack.c.bf16 %v4310, %v4308
        %v4389 = vpack.c.bf16 %v4311, %v4309
        %v4390 = vpack.c.bf16 %v4314, %v4312
        %v4391 = vpack.c.bf16 %v4315, %v4313
        %v4392 = vpack.c.bf16 %v4318, %v4316
        %v4393 = vpack.c.bf16 %v4319, %v4317
        %v4394 = vpack.c.bf16 %v4322, %v4320
        %v4395 = vpack.c.bf16 %v4323, %v4321
        %v4396 = vpack.c.bf16 %v4326, %v4324
        %v4397 = vpack.c.bf16 %v4327, %v4325
        %v4398 = vpack.c.bf16 %v4330, %v4328
        %v4399 = vpack.c.bf16 %v4331, %v4329
        %v4400 = vpack.c.bf16 %v4334, %v4332
        %v4401 = vpack.c.bf16 %v4335, %v4333
        %v4402 = vpack.c.bf16 %v4338, %v4336
        %v4403 = vpack.c.bf16 %v4339, %v4337
        %v4404 = vld [vmem:[%s7] sm:$0xf]
        %v4405 = vld [vmem:[%s7 + $0x4] sm:$0xf]
        %v4406 = vld [vmem:[%s7 + $0x8] sm:$0xf]
        %v4407 = vld [vmem:[%s7 + $0xc] sm:$0xf]
        %v4408 = vld [vmem:[%s7 + $0x10] sm:$0xf]
        %v4409 = vld [vmem:[%s7 + $0x14] sm:$0xf]
        %v4410 = vld [vmem:[%s7 + $0x18] sm:$0xf]
        %v4411 = vld [vmem:[%s7 + $0x1c] sm:$0xf]
        %v4412 = vld [vmem:[%s7 + $0x20] sm:$0xf]
        %v4413 = vld [vmem:[%s7 + $0x24] sm:$0xf]
        %v4414 = vld [vmem:[%s7 + $0x28] sm:$0xf]
        %v4415 = vld [vmem:[%s7 + $0x2c] sm:$0xf]
        %v4416 = vld [vmem:[%s7 + $0x30] sm:$0xf]
        %v4417 = vld [vmem:[%s7 + $0x34] sm:$0xf]
        %v4418 = vld [vmem:[%s7 + $0x38] sm:$0xf]
        %v4419 = vld [vmem:[%s7 + $0x3c] sm:$0xf]
        %v4420 = vld [vmem:[%s7 + $0x40] sm:$0xf]
        %v4421 = vld [vmem:[%s7 + $0x44] sm:$0xf]
        %v4422 = vld [vmem:[%s7 + $0x48] sm:$0xf]
        %v4423 = vld [vmem:[%s7 + $0x4c] sm:$0xf]
        %v4424 = vld [vmem:[%s7 + $0x50] sm:$0xf]
        %v4425 = vld [vmem:[%s7 + $0x54] sm:$0xf]
        %v4426 = vld [vmem:[%s7 + $0x58] sm:$0xf]
        %v4427 = vld [vmem:[%s7 + $0x5c] sm:$0xf]
        %v4428 = vld [vmem:[%s7 + $0x60] sm:$0xf]
        %v4429 = vld [vmem:[%s7 + $0x64] sm:$0xf]
        %v4430 = vld [vmem:[%s7 + $0x68] sm:$0xf]
        %v4431 = vld [vmem:[%s7 + $0x6c] sm:$0xf]
        %v4432 = vld [vmem:[%s7 + $0x70] sm:$0xf]
        %v4433 = vld [vmem:[%s7 + $0x74] sm:$0xf]
        %v4434 = vld [vmem:[%s7 + $0x78] sm:$0xf]
        %v4435 = vld [vmem:[%s7 + $0x7c] sm:$0xf]
        %v4436 = vld [vmem:[%s8] sm:$0x1]
        %v4438 = vlaneseq
        %v4439 = vshrl.u32 %v4438, 7
        %v4440 = vsub.s32 0, %v4439
        %v4441 = vrot.slane %v4436, %v4440
        %v4475 = vunpack.c.l.b16 %v4404
        %v4476 = vunpack.c.l.b16 %v4405
        %v4477 = vunpack.c.l.b16 %v4406
        %v4478 = vunpack.c.l.b16 %v4407
        %v4479 = vunpack.c.l.b16 %v4408
        %v4480 = vunpack.c.l.b16 %v4409
        %v4481 = vunpack.c.l.b16 %v4410
        %v4482 = vunpack.c.l.b16 %v4411
        %v4483 = vunpack.c.l.b16 %v4412
        %v4484 = vunpack.c.l.b16 %v4413
        %v4485 = vunpack.c.l.b16 %v4414
        %v4486 = vunpack.c.l.b16 %v4415
        %v4487 = vunpack.c.l.b16 %v4416
        %v4488 = vunpack.c.l.b16 %v4417
        %v4489 = vunpack.c.l.b16 %v4418
        %v4490 = vunpack.c.l.b16 %v4419
        %v4491 = vunpack.c.l.b16 %v4420
        %v4492 = vunpack.c.l.b16 %v4421
        %v4493 = vunpack.c.l.b16 %v4422
        %v4494 = vunpack.c.l.b16 %v4423
        %v4495 = vunpack.c.l.b16 %v4424
        %v4496 = vunpack.c.l.b16 %v4425
        %v4497 = vunpack.c.l.b16 %v4426
        %v4498 = vunpack.c.l.b16 %v4427
        %v4499 = vunpack.c.l.b16 %v4428
        %v4500 = vunpack.c.l.b16 %v4429
        %v4501 = vunpack.c.l.b16 %v4430
        %v4502 = vunpack.c.l.b16 %v4431
        %v4503 = vunpack.c.l.b16 %v4432
        %v4504 = vunpack.c.l.b16 %v4433
        %v4505 = vunpack.c.l.b16 %v4434
        %v4506 = vunpack.c.l.b16 %v4435
        %v4507 = vpack.c.b16 %v4476, %v4475
        %v4508 = vpack.c.b16 %v4478, %v4477
        %v4509 = vpack.c.b16 %v4480, %v4479
        %v4510 = vpack.c.b16 %v4482, %v4481
        %v4511 = vpack.c.b16 %v4484, %v4483
        %v4512 = vpack.c.b16 %v4486, %v4485
        %v4513 = vpack.c.b16 %v4488, %v4487
        %v4514 = vpack.c.b16 %v4490, %v4489
        %v4515 = vpack.c.b16 %v4492, %v4491
        %v4516 = vpack.c.b16 %v4494, %v4493
        %v4517 = vpack.c.b16 %v4496, %v4495
        %v4518 = vpack.c.b16 %v4498, %v4497
        %v4519 = vpack.c.b16 %v4500, %v4499
        %v4520 = vpack.c.b16 %v4502, %v4501
        %v4521 = vpack.c.b16 %v4504, %v4503
        %v4522 = vpack.c.b16 %v4506, %v4505
        %4539 = vmatprep.subr.bf16.mxu0 0
        %4540 = vmatpush1.bf16.msra.mxu0 %v4507
        %4541 = vmatprep.subr.bf16.mxu0 0
        %4542 = vmatpush1.bf16.msra.mxu0 %v4508
        %4543 = vmatprep.subr.bf16.mxu0 0
        %4544 = vmatpush1.bf16.msra.mxu0 %v4509
        %4545 = vmatprep.subr.bf16.mxu0 0
        %4546 = vmatpush1.bf16.msra.mxu0 %v4510
        %4547 = vmatprep.subr.bf16.mxu0 0
        %4548 = vmatpush1.bf16.msra.mxu0 %v4511
        %4549 = vmatprep.subr.bf16.mxu0 0
        %4550 = vmatpush1.bf16.msra.mxu0 %v4512
        %4551 = vmatprep.subr.bf16.mxu0 0
        %4552 = vmatpush1.bf16.msra.mxu0 %v4513
        %4553 = vmatprep.subr.bf16.mxu0 0
        %4554 = vmatpush1.bf16.msra.mxu0 %v4514
        %4555 = vmatprep.subr.bf16.mxu0 0
        %4556 = vmatpush1.bf16.msra.mxu0 %v4515
        %4557 = vmatprep.subr.bf16.mxu0 0
        %4558 = vmatpush1.bf16.msra.mxu0 %v4516
        %4559 = vmatprep.subr.bf16.mxu0 0
        %4560 = vmatpush1.bf16.msra.mxu0 %v4517
        %4561 = vmatprep.subr.bf16.mxu0 0
        %4562 = vmatpush1.bf16.msra.mxu0 %v4518
        %4563 = vmatprep.subr.bf16.mxu0 0
        %4564 = vmatpush1.bf16.msra.mxu0 %v4519
        %4565 = vmatprep.subr.bf16.mxu0 0
        %4566 = vmatpush1.bf16.msra.mxu0 %v4520
        %4567 = vmatprep.subr.bf16.mxu0 0
        %4568 = vmatpush1.bf16.msra.mxu0 %v4521
        %4569 = vmatprep.subr.bf16.mxu0 0
        %4570 = vmatpush1.bf16.msra.mxu0 %v4522
        %4571 = vmatprep.mubr.bf16.mxu0 %v4341
        %4572 = vmatmul.mubr.bf16.gmra.mrb[0].mxu0 %v4340
        %v4573 = vpop.f32.mrb[0].mxu0
        %v4574 = vadd.f32 %v4441, %v4573
        %v4575 = vpop.f32.mrb[0].mxu0
        %v4576 = vpop.f32.mrb[0].mxu0
        %v4577 = vadd.f32 %v4441, %v4576
        %v4578 = vpop.f32.mrb[0].mxu0
        %4579 = vmatprep.mubr.bf16.mxu0 %v4343
        %4580 = vmatmul.mubr.bf16.gmra.mrb[0].mxu0 %v4342
        %v4581 = vpop.f32.mrb[0].mxu0
        %v4582 = vadd.f32 %v4441, %v4581
        %v4583 = vpop.f32.mrb[0].mxu0
        %v4584 = vpop.f32.mrb[0].mxu0
        %v4585 = vadd.f32 %v4441, %v4584
        %v4586 = vpop.f32.mrb[0].mxu0
        %4587 = vmatprep.mubr.bf16.mxu0 %v4345
        %4588 = vmatmul.mubr.bf16.gmra.mrb[0].mxu0 %v4344
        %v4589 = vpop.f32.mrb[0].mxu0
        %v4590 = vadd.f32 %v4441, %v4589
        %v4591 = vpop.f32.mrb[0].mxu0
        %v4592 = vpop.f32.mrb[0].mxu0
        %v4593 = vadd.f32 %v4441, %v4592
        %v4594 = vpop.f32.mrb[0].mxu0
        %4595 = vmatprep.mubr.bf16.mxu0 %v4347
        %4596 = vmatmul.mubr.bf16.gmra.mrb[0].mxu0 %v4346
        %v4597 = vpop.f32.mrb[0].mxu0
        %v4598 = vadd.f32 %v4441, %v4597
        %v4599 = vpop.f32.mrb[0].mxu0
        %v4600 = vpop.f32.mrb[0].mxu0
        %v4601 = vadd.f32 %v4441, %v4600
        %v4602 = vpop.f32.mrb[0].mxu0
        %4603 = vmatprep.mubr.bf16.mxu0 %v4349
        %4604 = vmatmul.mubr.bf16.gmra.mrb[0].mxu0 %v4348
        %v4605 = vpop.f32.mrb[0].mxu0
        %v4606 = vadd.f32 %v4441, %v4605
        %v4607 = vpop.f32.mrb[0].mxu0
        %v4608 = vpop.f32.mrb[0].mxu0
        %v4609 = vadd.f32 %v4441, %v4608
        %v4610 = vpop.f32.mrb[0].mxu0
        %4611 = vmatprep.mubr.bf16.mxu0 %v4351
        %4612 = vmatmul.mubr.bf16.gmra.mrb[0].mxu0 %v4350
        %v4613 = vpop.f32.mrb[0].mxu0
        %v4614 = vadd.f32 %v4441, %v4613
        %v4615 = vpop.f32.mrb[0].mxu0
        %v4616 = vpop.f32.mrb[0].mxu0
        %v4617 = vadd.f32 %v4441, %v4616
        %v4618 = vpop.f32.mrb[0].mxu0
        %4619 = vmatprep.mubr.bf16.mxu0 %v4353
        %4620 = vmatmul.mubr.bf16.gmra.mrb[0].mxu0 %v4352
        %v4621 = vpop.f32.mrb[0].mxu0
        %v4622 = vadd.f32 %v4441, %v4621
        %v4623 = vpop.f32.mrb[0].mxu0
        %v4624 = vpop.f32.mrb[0].mxu0
        %v4625 = vadd.f32 %v4441, %v4624
        %v4626 = vpop.f32.mrb[0].mxu0
        %4627 = vmatprep.mubr.bf16.mxu0 %v4355
        %4628 = vmatmul.mubr.bf16.gmra.mrb[0].mxu0 %v4354
        %v4629 = vpop.f32.mrb[0].mxu0
        %v4630 = vadd.f32 %v4441, %v4629
        %v4631 = vpop.f32.mrb[0].mxu0
        %v4632 = vpop.f32.mrb[0].mxu0
        %v4633 = vadd.f32 %v4441, %v4632
        %v4634 = vpop.f32.mrb[0].mxu0
        %4635 = vmatprep.mubr.bf16.mxu0 %v4357
        %4636 = vmatmul.mubr.bf16.gmra.mrb[0].mxu0 %v4356
        %v4637 = vpop.f32.mrb[0].mxu0
        %v4638 = vadd.f32 %v4441, %v4637
        %v4639 = vpop.f32.mrb[0].mxu0
        %v4640 = vpop.f32.mrb[0].mxu0
        %v4641 = vadd.f32 %v4441, %v4640
        %v4642 = vpop.f32.mrb[0].mxu0
        %4643 = vmatprep.mubr.bf16.mxu0 %v4359
        %4644 = vmatmul.mubr.bf16.gmra.mrb[0].mxu0 %v4358
        %v4645 = vpop.f32.mrb[0].mxu0
        %v4646 = vadd.f32 %v4441, %v4645
        %v4647 = vpop.f32.mrb[0].mxu0
        %v4648 = vpop.f32.mrb[0].mxu0
        %v4649 = vadd.f32 %v4441, %v4648
        %v4650 = vpop.f32.mrb[0].mxu0
        %4651 = vmatprep.mubr.bf16.mxu0 %v4361
        %4652 = vmatmul.mubr.bf16.gmra.mrb[0].mxu0 %v4360
        %v4653 = vpop.f32.mrb[0].mxu0
        %v4654 = vadd.f32 %v4441, %v4653
        %v4655 = vpop.f32.mrb[0].mxu0
        %v4656 = vpop.f32.mrb[0].mxu0
        %v4657 = vadd.f32 %v4441, %v4656
        %v4658 = vpop.f32.mrb[0].mxu0
        %4659 = vmatprep.mubr.bf16.mxu0 %v4363
        %4660 = vmatmul.mubr.bf16.gmra.mrb[0].mxu0 %v4362
        %v4661 = vpop.f32.mrb[0].mxu0
        %v4662 = vadd.f32 %v4441, %v4661
        %v4663 = vpop.f32.mrb[0].mxu0
        %v4664 = vpop.f32.mrb[0].mxu0
        %v4665 = vadd.f32 %v4441, %v4664
        %v4666 = vpop.f32.mrb[0].mxu0
        %4667 = vmatprep.mubr.bf16.mxu0 %v4365
        %4668 = vmatmul.mubr.bf16.gmra.mrb[0].mxu0 %v4364
        %v4669 = vpop.f32.mrb[0].mxu0
        %v4670 = vadd.f32 %v4441, %v4669
        %v4671 = vpop.f32.mrb[0].mxu0
        %v4672 = vpop.f32.mrb[0].mxu0
        %v4673 = vadd.f32 %v4441, %v4672
        %v4674 = vpop.f32.mrb[0].mxu0
        %4675 = vmatprep.mubr.bf16.mxu0 %v4367
        %4676 = vmatmul.mubr.bf16.gmra.mrb[0].mxu0 %v4366
        %v4677 = vpop.f32.mrb[0].mxu0
        %v4678 = vadd.f32 %v4441, %v4677
        %v4679 = vpop.f32.mrb[0].mxu0
        %v4680 = vpop.f32.mrb[0].mxu0
        %v4681 = vadd.f32 %v4441, %v4680
        %v4682 = vpop.f32.mrb[0].mxu0
        %4683 = vmatprep.mubr.bf16.mxu0 %v4369
        %4684 = vmatmul.mubr.bf16.gmra.mrb[0].mxu0 %v4368
        %v4685 = vpop.f32.mrb[0].mxu0
        %v4686 = vadd.f32 %v4441, %v4685
        %v4687 = vpop.f32.mrb[0].mxu0
        %v4688 = vpop.f32.mrb[0].mxu0
        %v4689 = vadd.f32 %v4441, %v4688
        %v4690 = vpop.f32.mrb[0].mxu0
        %4691 = vmatprep.mubr.bf16.mxu0 %v4371
        %4692 = vmatmul.mubr.bf16.gmra.mrb[0].mxu0 %v4370
        %v4693 = vpop.f32.mrb[0].mxu0
        %v4694 = vadd.f32 %v4441, %v4693
        %v4695 = vpop.f32.mrb[0].mxu0
        %v4696 = vpop.f32.mrb[0].mxu0
        %v4697 = vadd.f32 %v4441, %v4696
        %v4698 = vpop.f32.mrb[0].mxu0
        %4699 = vmatprep.mubr.bf16.mxu0 %v4373
        %4700 = vmatmul.mubr.bf16.gmra.mrb[0].mxu0 %v4372
        %v4701 = vpop.f32.mrb[0].mxu0
        %v4702 = vadd.f32 %v4441, %v4701
        %v4703 = vpop.f32.mrb[0].mxu0
        %v4704 = vpop.f32.mrb[0].mxu0
        %v4705 = vadd.f32 %v4441, %v4704
        %v4706 = vpop.f32.mrb[0].mxu0
        %4707 = vmatprep.mubr.bf16.mxu0 %v4375
        %4708 = vmatmul.mubr.bf16.gmra.mrb[0].mxu0 %v4374
        %v4709 = vpop.f32.mrb[0].mxu0
        %v4710 = vadd.f32 %v4441, %v4709
        %v4711 = vpop.f32.mrb[0].mxu0
        %v4712 = vpop.f32.mrb[0].mxu0
        %v4713 = vadd.f32 %v4441, %v4712
        %v4714 = vpop.f32.mrb[0].mxu0
        %4715 = vmatprep.mubr.bf16.mxu0 %v4377
        %4716 = vmatmul.mubr.bf16.gmra.mrb[0].mxu0 %v4376
        %v4717 = vpop.f32.mrb[0].mxu0
        %v4718 = vadd.f32 %v4441, %v4717
        %v4719 = vpop.f32.mrb[0].mxu0
        %v4720 = vpop.f32.mrb[0].mxu0
        %v4721 = vadd.f32 %v4441, %v4720
        %v4722 = vpop.f32.mrb[0].mxu0
        %4723 = vmatprep.mubr.bf16.mxu0 %v4379
        %4724 = vmatmul.mubr.bf16.gmra.mrb[0].mxu0 %v4378
        %v4725 = vpop.f32.mrb[0].mxu0
        %v4726 = vadd.f32 %v4441, %v4725
        %v4727 = vpop.f32.mrb[0].mxu0
        %v4728 = vpop.f32.mrb[0].mxu0
        %v4729 = vadd.f32 %v4441, %v4728
        %v4730 = vpop.f32.mrb[0].mxu0
        %4731 = vmatprep.mubr.bf16.mxu0 %v4381
        %4732 = vmatmul.mubr.bf16.gmra.mrb[0].mxu0 %v4380
        %v4733 = vpop.f32.mrb[0].mxu0
        %v4734 = vadd.f32 %v4441, %v4733
        %v4735 = vpop.f32.mrb[0].mxu0
        %v4736 = vpop.f32.mrb[0].mxu0
        %v4737 = vadd.f32 %v4441, %v4736
        %v4738 = vpop.f32.mrb[0].mxu0
        %4739 = vmatprep.mubr.bf16.mxu0 %v4383
        %4740 = vmatmul.mubr.bf16.gmra.mrb[0].mxu0 %v4382
        %v4741 = vpop.f32.mrb[0].mxu0
        %v4742 = vadd.f32 %v4441, %v4741
        %v4743 = vpop.f32.mrb[0].mxu0
        %v4744 = vpop.f32.mrb[0].mxu0
        %v4745 = vadd.f32 %v4441, %v4744
        %v4746 = vpop.f32.mrb[0].mxu0
        %4747 = vmatprep.mubr.bf16.mxu0 %v4385
        %4748 = vmatmul.mubr.bf16.gmra.mrb[0].mxu0 %v4384
        %v4749 = vpop.f32.mrb[0].mxu0
        %v4750 = vadd.f32 %v4441, %v4749
        %v4751 = vpop.f32.mrb[0].mxu0
        %v4752 = vpop.f32.mrb[0].mxu0
        %v4753 = vadd.f32 %v4441, %v4752
        %v4754 = vpop.f32.mrb[0].mxu0
        %4755 = vmatprep.mubr.bf16.mxu0 %v4387
        %4756 = vmatmul.mubr.bf16.gmra.mrb[0].mxu0 %v4386
        %v4757 = vpop.f32.mrb[0].mxu0
        %v4758 = vadd.f32 %v4441, %v4757
        %v4759 = vpop.f32.mrb[0].mxu0
        %v4760 = vpop.f32.mrb[0].mxu0
        %v4761 = vadd.f32 %v4441, %v4760
        %v4762 = vpop.f32.mrb[0].mxu0
        %4763 = vmatprep.mubr.bf16.mxu0 %v4389
        %4764 = vmatmul.mubr.bf16.gmra.mrb[0].mxu0 %v4388
        %v4765 = vpop.f32.mrb[0].mxu0
        %v4766 = vadd.f32 %v4441, %v4765
        %v4767 = vpop.f32.mrb[0].mxu0
        %v4768 = vpop.f32.mrb[0].mxu0
        %v4769 = vadd.f32 %v4441, %v4768
        %v4770 = vpop.f32.mrb[0].mxu0
        %4771 = vmatprep.mubr.bf16.mxu0 %v4391
        %4772 = vmatmul.mubr.bf16.gmra.mrb[0].mxu0 %v4390
        %v4773 = vpop.f32.mrb[0].mxu0
        %v4774 = vadd.f32 %v4441, %v4773
        %v4775 = vpop.f32.mrb[0].mxu0
        %v4776 = vpop.f32.mrb[0].mxu0
        %v4777 = vadd.f32 %v4441, %v4776
        %v4778 = vpop.f32.mrb[0].mxu0
        %4779 = vmatprep.mubr.bf16.mxu0 %v4393
        %4780 = vmatmul.mubr.bf16.gmra.mrb[0].mxu0 %v4392
        %v4781 = vpop.f32.mrb[0].mxu0
        %v4782 = vadd.f32 %v4441, %v4781
        %v4783 = vpop.f32.mrb[0].mxu0
        %v4784 = vpop.f32.mrb[0].mxu0
        %v4785 = vadd.f32 %v4441, %v4784
        %v4786 = vpop.f32.mrb[0].mxu0
        %4787 = vmatprep.mubr.bf16.mxu0 %v4395
        %4788 = vmatmul.mubr.bf16.gmra.mrb[0].mxu0 %v4394
        %v4789 = vpop.f32.mrb[0].mxu0
        %v4790 = vadd.f32 %v4441, %v4789
        %v4791 = vpop.f32.mrb[0].mxu0
        %v4792 = vpop.f32.mrb[0].mxu0
        %v4793 = vadd.f32 %v4441, %v4792
        %v4794 = vpop.f32.mrb[0].mxu0
        %4795 = vmatprep.mubr.bf16.mxu0 %v4397
        %4796 = vmatmul.mubr.bf16.gmra.mrb[0].mxu0 %v4396
        %v4797 = vpop.f32.mrb[0].mxu0
        %v4798 = vadd.f32 %v4441, %v4797
        %v4799 = vpop.f32.mrb[0].mxu0
        %v4800 = vpop.f32.mrb[0].mxu0
        %v4801 = vadd.f32 %v4441, %v4800
        %v4802 = vpop.f32.mrb[0].mxu0
        %4803 = vmatprep.mubr.bf16.mxu0 %v4399
        %4804 = vmatmul.mubr.bf16.gmra.mrb[0].mxu0 %v4398
        %v4805 = vpop.f32.mrb[0].mxu0
        %v4806 = vadd.f32 %v4441, %v4805
        %v4807 = vpop.f32.mrb[0].mxu0
        %v4808 = vpop.f32.mrb[0].mxu0
        %v4809 = vadd.f32 %v4441, %v4808
        %v4810 = vpop.f32.mrb[0].mxu0
        %4811 = vmatprep.mubr.bf16.mxu0 %v4401
        %4812 = vmatmul.mubr.bf16.gmra.mrb[0].mxu0 %v4400
        %v4813 = vpop.f32.mrb[0].mxu0
        %v4814 = vadd.f32 %v4441, %v4813
        %v4815 = vpop.f32.mrb[0].mxu0
        %v4816 = vpop.f32.mrb[0].mxu0
        %v4817 = vadd.f32 %v4441, %v4816
        %v4818 = vpop.f32.mrb[0].mxu0
        %4819 = vmatprep.mubr.bf16.mxu0 %v4403
        %4820 = vmatmul.mubr.bf16.gmra.mrb[0].mxu0 %v4402
        %v4821 = vpop.f32.mrb[0].mxu0
        %v4822 = vadd.f32 %v4441, %v4821
        %v4823 = vpop.f32.mrb[0].mxu0
        %v4824 = vpop.f32.mrb[0].mxu0
        %v4825 = vadd.f32 %v4441, %v4824
        %v4826 = vpop.f32.mrb[0].mxu0
        %4827 = vdwg.mxu0
        %v4828 = vsub.f32 0.0, %v4574
        %v4829 = vsub.f32 0.0, %v4577
        %v4830 = vsub.f32 0.0, %v4582
        %v4831 = vsub.f32 0.0, %v4585
        %v4832 = vsub.f32 0.0, %v4590
        %v4833 = vsub.f32 0.0, %v4593
        %v4834 = vsub.f32 0.0, %v4598
        %v4835 = vsub.f32 0.0, %v4601
        %v4836 = vsub.f32 0.0, %v4606
        %v4837 = vsub.f32 0.0, %v4609
        %v4838 = vsub.f32 0.0, %v4614
        %v4839 = vsub.f32 0.0, %v4617
        %v4840 = vsub.f32 0.0, %v4622
        %v4841 = vsub.f32 0.0, %v4625
        %v4842 = vsub.f32 0.0, %v4630
        %v4843 = vsub.f32 0.0, %v4633
        %v4844 = vsub.f32 0.0, %v4638
        %v4845 = vsub.f32 0.0, %v4641
        %v4846 = vsub.f32 0.0, %v4646
        %v4847 = vsub.f32 0.0, %v4649
        %v4848 = vsub.f32 0.0, %v4654
        %v4849 = vsub.f32 0.0, %v4657
        %v4850 = vsub.f32 0.0, %v4662
        %v4851 = vsub.f32 0.0, %v4665
        %v4852 = vsub.f32 0.0, %v4670
        %v4853 = vsub.f32 0.0, %v4673
        %v4854 = vsub.f32 0.0, %v4678
        %v4855 = vsub.f32 0.0, %v4681
        %v4856 = vsub.f32 0.0, %v4686
        %v4857 = vsub.f32 0.0, %v4689
        %v4858 = vsub.f32 0.0, %v4694
        %v4859 = vsub.f32 0.0, %v4697
        %v4860 = vsub.f32 0.0, %v4702
        %v4861 = vsub.f32 0.0, %v4705
        %v4862 = vsub.f32 0.0, %v4710
        %v4863 = vsub.f32 0.0, %v4713
        %v4864 = vsub.f32 0.0, %v4718
        %v4865 = vsub.f32 0.0, %v4721
        %v4866 = vsub.f32 0.0, %v4726
        %v4867 = vsub.f32 0.0, %v4729
        %v4868 = vsub.f32 0.0, %v4734
        %v4869 = vsub.f32 0.0, %v4737
        %v4870 = vsub.f32 0.0, %v4742
        %v4871 = vsub.f32 0.0, %v4745
        %v4872 = vsub.f32 0.0, %v4750
        %v4873 = vsub.f32 0.0, %v4753
        %v4874 = vsub.f32 0.0, %v4758
        %v4875 = vsub.f32 0.0, %v4761
        %v4876 = vsub.f32 0.0, %v4766
        %v4877 = vsub.f32 0.0, %v4769
        %v4878 = vsub.f32 0.0, %v4774
        %v4879 = vsub.f32 0.0, %v4777
        %v4880 = vsub.f32 0.0, %v4782
        %v4881 = vsub.f32 0.0, %v4785
        %v4882 = vsub.f32 0.0, %v4790
        %v4883 = vsub.f32 0.0, %v4793
        %v4884 = vsub.f32 0.0, %v4798
        %v4885 = vsub.f32 0.0, %v4801
        %v4886 = vsub.f32 0.0, %v4806
        %v4887 = vsub.f32 0.0, %v4809
        %v4888 = vsub.f32 0.0, %v4814
        %v4889 = vsub.f32 0.0, %v4817
        %v4890 = vsub.f32 0.0, %v4822
        %v4891 = vsub.f32 0.0, %v4825
        %v4892 = vmul.f32 %v4828, 1.442695
        %v4893 = vpow.pop %v4892
        %v4894 = vmul.f32 %v4829, 1.442695
        %v4895 = vpow.pop %v4894
        %v4896 = vmul.f32 %v4830, 1.442695
        %v4897 = vpow.pop %v4896
        %v4898 = vmul.f32 %v4831, 1.442695
        %v4899 = vpow.pop %v4898
        %v4900 = vmul.f32 %v4832, 1.442695
        %v4901 = vpow.pop %v4900
        %v4902 = vmul.f32 %v4833, 1.442695
        %v4903 = vpow.pop %v4902
        %v4904 = vmul.f32 %v4834, 1.442695
        %v4905 = vpow.pop %v4904
        %v4906 = vmul.f32 %v4835, 1.442695
        %v4907 = vpow.pop %v4906
        %v4908 = vmul.f32 %v4836, 1.442695
        %v4909 = vpow.pop %v4908
        %v4910 = vmul.f32 %v4837, 1.442695
        %v4911 = vpow.pop %v4910
        %v4912 = vmul.f32 %v4838, 1.442695
        %v4913 = vpow.pop %v4912
        %v4914 = vmul.f32 %v4839, 1.442695
        %v4915 = vpow.pop %v4914
        %v4916 = vmul.f32 %v4840, 1.442695
        %v4917 = vpow.pop %v4916
        %v4918 = vmul.f32 %v4841, 1.442695
        %v4919 = vpow.pop %v4918
        %v4920 = vmul.f32 %v4842, 1.442695
        %v4921 = vpow.pop %v4920
        %v4922 = vmul.f32 %v4843, 1.442695
        %v4923 = vpow.pop %v4922
        %v4924 = vmul.f32 %v4844, 1.442695
        %v4925 = vpow.pop %v4924
        %v4926 = vmul.f32 %v4845, 1.442695
        %v4927 = vpow.pop %v4926
        %v4928 = vmul.f32 %v4846, 1.442695
        %v4929 = vpow.pop %v4928
        %v4930 = vmul.f32 %v4847, 1.442695
        %v4931 = vpow.pop %v4930
        %v4932 = vmul.f32 %v4848, 1.442695
        %v4933 = vpow.pop %v4932
        %v4934 = vmul.f32 %v4849, 1.442695
        %v4935 = vpow.pop %v4934
        %v4936 = vmul.f32 %v4850, 1.442695
        %v4937 = vpow.pop %v4936
        %v4938 = vmul.f32 %v4851, 1.442695
        %v4939 = vpow.pop %v4938
        %v4940 = vmul.f32 %v4852, 1.442695
        %v4941 = vpow.pop %v4940
        %v4942 = vmul.f32 %v4853, 1.442695
        %v4943 = vpow.pop %v4942
        %v4944 = vmul.f32 %v4854, 1.442695
        %v4945 = vpow.pop %v4944
        %v4946 = vmul.f32 %v4855, 1.442695
        %v4947 = vpow.pop %v4946
        %v4948 = vmul.f32 %v4856, 1.442695
        %v4949 = vpow.pop %v4948
        %v4950 = vmul.f32 %v4857, 1.442695
        %v4951 = vpow.pop %v4950
        %v4952 = vmul.f32 %v4858, 1.442695
        %v4953 = vpow.pop %v4952
        %v4954 = vmul.f32 %v4859, 1.442695
        %v4955 = vpow.pop %v4954
        %v4956 = vmul.f32 %v4860, 1.442695
        %v4957 = vpow.pop %v4956
        %v4958 = vmul.f32 %v4861, 1.442695
        %v4959 = vpow.pop %v4958
        %v4960 = vmul.f32 %v4862, 1.442695
        %v4961 = vpow.pop %v4960
        %v4962 = vmul.f32 %v4863, 1.442695
        %v4963 = vpow.pop %v4962
        %v4964 = vmul.f32 %v4864, 1.442695
        %v4965 = vpow.pop %v4964
        %v4966 = vmul.f32 %v4865, 1.442695
        %v4967 = vpow.pop %v4966
        %v4968 = vmul.f32 %v4866, 1.442695
        %v4969 = vpow.pop %v4968
        %v4970 = vmul.f32 %v4867, 1.442695
        %v4971 = vpow.pop %v4970
        %v4972 = vmul.f32 %v4868, 1.442695
        %v4973 = vpow.pop %v4972
        %v4974 = vmul.f32 %v4869, 1.442695
        %v4975 = vpow.pop %v4974
        %v4976 = vmul.f32 %v4870, 1.442695
        %v4977 = vpow.pop %v4976
        %v4978 = vmul.f32 %v4871, 1.442695
        %v4979 = vpow.pop %v4978
        %v4980 = vmul.f32 %v4872, 1.442695
        %v4981 = vpow.pop %v4980
        %v4982 = vmul.f32 %v4873, 1.442695
        %v4983 = vpow.pop %v4982
        %v4984 = vmul.f32 %v4874, 1.442695
        %v4985 = vpow.pop %v4984
        %v4986 = vmul.f32 %v4875, 1.442695
        %v4987 = vpow.pop %v4986
        %v4988 = vmul.f32 %v4876, 1.442695
        %v4989 = vpow.pop %v4988
        %v4990 = vmul.f32 %v4877, 1.442695
        %v4991 = vpow.pop %v4990
        %v4992 = vmul.f32 %v4878, 1.442695
        %v4993 = vpow.pop %v4992
        %v4994 = vmul.f32 %v4879, 1.442695
        %v4995 = vpow.pop %v4994
        %v4996 = vmul.f32 %v4880, 1.442695
        %v4997 = vpow.pop %v4996
        %v4998 = vmul.f32 %v4881, 1.442695
        %v4999 = vpow.pop %v4998
        %v5000 = vmul.f32 %v4882, 1.442695
        %v5001 = vpow.pop %v5000
        %v5002 = vmul.f32 %v4883, 1.442695
        %v5003 = vpow.pop %v5002
        %v5004 = vmul.f32 %v4884, 1.442695
        %v5005 = vpow.pop %v5004
        %v5006 = vmul.f32 %v4885, 1.442695
        %v5007 = vpow.pop %v5006
        %v5008 = vmul.f32 %v4886, 1.442695
        %v5009 = vpow.pop %v5008
        %v5010 = vmul.f32 %v4887, 1.442695
        %v5011 = vpow.pop %v5010
        %v5012 = vmul.f32 %v4888, 1.442695
        %v5013 = vpow.pop %v5012
        %v5014 = vmul.f32 %v4889, 1.442695
        %v5015 = vpow.pop %v5014
        %v5016 = vmul.f32 %v4890, 1.442695
        %v5017 = vpow.pop %v5016
        %v5018 = vmul.f32 %v4891, 1.442695
        %v5019 = vpow.pop %v5018
        %v5020 = vadd.f32 %v4893, 1.0
        %v5021 = vadd.f32 %v4895, 1.0
        %v5022 = vadd.f32 %v4897, 1.0
        %v5023 = vadd.f32 %v4899, 1.0
        %v5024 = vadd.f32 %v4901, 1.0
        %v5025 = vadd.f32 %v4903, 1.0
        %v5026 = vadd.f32 %v4905, 1.0
        %v5027 = vadd.f32 %v4907, 1.0
        %v5028 = vadd.f32 %v4909, 1.0
        %v5029 = vadd.f32 %v4911, 1.0
        %v5030 = vadd.f32 %v4913, 1.0
        %v5031 = vadd.f32 %v4915, 1.0
        %v5032 = vadd.f32 %v4917, 1.0
        %v5033 = vadd.f32 %v4919, 1.0
        %v5034 = vadd.f32 %v4921, 1.0
        %v5035 = vadd.f32 %v4923, 1.0
        %v5036 = vadd.f32 %v4925, 1.0
        %v5037 = vadd.f32 %v4927, 1.0
        %v5038 = vadd.f32 %v4929, 1.0
        %v5039 = vadd.f32 %v4931, 1.0
        %v5040 = vadd.f32 %v4933, 1.0
        %v5041 = vadd.f32 %v4935, 1.0
        %v5042 = vadd.f32 %v4937, 1.0
        %v5043 = vadd.f32 %v4939, 1.0
        %v5044 = vadd.f32 %v4941, 1.0
        %v5045 = vadd.f32 %v4943, 1.0
        %v5046 = vadd.f32 %v4945, 1.0
        %v5047 = vadd.f32 %v4947, 1.0
        %v5048 = vadd.f32 %v4949, 1.0
        %v5049 = vadd.f32 %v4951, 1.0
        %v5050 = vadd.f32 %v4953, 1.0
        %v5051 = vadd.f32 %v4955, 1.0
        %v5052 = vadd.f32 %v4957, 1.0
        %v5053 = vadd.f32 %v4959, 1.0
        %v5054 = vadd.f32 %v4961, 1.0
        %v5055 = vadd.f32 %v4963, 1.0
        %v5056 = vadd.f32 %v4965, 1.0
        %v5057 = vadd.f32 %v4967, 1.0
        %v5058 = vadd.f32 %v4969, 1.0
        %v5059 = vadd.f32 %v4971, 1.0
        %v5060 = vadd.f32 %v4973, 1.0
        %v5061 = vadd.f32 %v4975, 1.0
        %v5062 = vadd.f32 %v4977, 1.0
        %v5063 = vadd.f32 %v4979, 1.0
        %v5064 = vadd.f32 %v4981, 1.0
        %v5065 = vadd.f32 %v4983, 1.0
        %v5066 = vadd.f32 %v4985, 1.0
        %v5067 = vadd.f32 %v4987, 1.0
        %v5068 = vadd.f32 %v4989, 1.0
        %v5069 = vadd.f32 %v4991, 1.0
        %v5070 = vadd.f32 %v4993, 1.0
        %v5071 = vadd.f32 %v4995, 1.0
        %v5072 = vadd.f32 %v4997, 1.0
        %v5073 = vadd.f32 %v4999, 1.0
        %v5074 = vadd.f32 %v5001, 1.0
        %v5075 = vadd.f32 %v5003, 1.0
        %v5076 = vadd.f32 %v5005, 1.0
        %v5077 = vadd.f32 %v5007, 1.0
        %v5078 = vadd.f32 %v5009, 1.0
        %v5079 = vadd.f32 %v5011, 1.0
        %v5080 = vadd.f32 %v5013, 1.0
        %v5081 = vadd.f32 %v5015, 1.0
        %v5082 = vadd.f32 %v5017, 1.0
        %v5083 = vadd.f32 %v5019, 1.0
        %v5084 = vrcp.pop %v5020
        %v5085 = vrcp.pop %v5021
        %v5086 = vrcp.pop %v5022
        %v5087 = vrcp.pop %v5023
        %v5088 = vrcp.pop %v5024
        %v5089 = vrcp.pop %v5025
        %v5090 = vrcp.pop %v5026
        %v5091 = vrcp.pop %v5027
        %v5092 = vrcp.pop %v5028
        %v5093 = vrcp.pop %v5029
        %v5094 = vrcp.pop %v5030
        %v5095 = vrcp.pop %v5031
        %v5096 = vrcp.pop %v5032
        %v5097 = vrcp.pop %v5033
        %v5098 = vrcp.pop %v5034
        %v5099 = vrcp.pop %v5035
        %v5100 = vrcp.pop %v5036
        %v5101 = vrcp.pop %v5037
        %v5102 = vrcp.pop %v5038
        %v5103 = vrcp.pop %v5039
        %v5104 = vrcp.pop %v5040
        %v5105 = vrcp.pop %v5041
        %v5106 = vrcp.pop %v5042
        %v5107 = vrcp.pop %v5043
        %v5108 = vrcp.pop %v5044
        %v5109 = vrcp.pop %v5045
        %v5110 = vrcp.pop %v5046
        %v5111 = vrcp.pop %v5047
        %v5112 = vrcp.pop %v5048
        %v5113 = vrcp.pop %v5049
        %v5114 = vrcp.pop %v5050
        %v5115 = vrcp.pop %v5051
        %v5116 = vrcp.pop %v5052
        %v5117 = vrcp.pop %v5053
        %v5118 = vrcp.pop %v5054
        %v5119 = vrcp.pop %v5055
        %v5120 = vrcp.pop %v5056
        %v5121 = vrcp.pop %v5057
        %v5122 = vrcp.pop %v5058
        %v5123 = vrcp.pop %v5059
        %v5124 = vrcp.pop %v5060
        %v5125 = vrcp.pop %v5061
        %v5126 = vrcp.pop %v5062
        %v5127 = vrcp.pop %v5063
        %v5128 = vrcp.pop %v5064
        %v5129 = vrcp.pop %v5065
        %v5130 = vrcp.pop %v5066
        %v5131 = vrcp.pop %v5067
        %v5132 = vrcp.pop %v5068
        %v5133 = vrcp.pop %v5069
        %v5134 = vrcp.pop %v5070
        %v5135 = vrcp.pop %v5071
        %v5136 = vrcp.pop %v5072
        %v5137 = vrcp.pop %v5073
        %v5138 = vrcp.pop %v5074
        %v5139 = vrcp.pop %v5075
        %v5140 = vrcp.pop %v5076
        %v5141 = vrcp.pop %v5077
        %v5142 = vrcp.pop %v5078
        %v5143 = vrcp.pop %v5079
        %v5144 = vrcp.pop %v5080
        %v5145 = vrcp.pop %v5081
        %v5146 = vrcp.pop %v5082
        %v5147 = vrcp.pop %v5083
        %v5148 = vpack.c.bf16 %v5085, %v5084
        %v5149 = vpack.c.bf16 %v5087, %v5086
        %v5150 = vpack.c.bf16 %v5089, %v5088
        %v5151 = vpack.c.bf16 %v5091, %v5090
        %v5152 = vpack.c.bf16 %v5093, %v5092
        %v5153 = vpack.c.bf16 %v5095, %v5094
        %v5154 = vpack.c.bf16 %v5097, %v5096
        %v5155 = vpack.c.bf16 %v5099, %v5098
        %v5156 = vpack.c.bf16 %v5101, %v5100
        %v5157 = vpack.c.bf16 %v5103, %v5102
        %v5158 = vpack.c.bf16 %v5105, %v5104
        %v5159 = vpack.c.bf16 %v5107, %v5106
        %v5160 = vpack.c.bf16 %v5109, %v5108
        %v5161 = vpack.c.bf16 %v5111, %v5110
        %v5162 = vpack.c.bf16 %v5113, %v5112
        %v5163 = vpack.c.bf16 %v5115, %v5114
        %v5164 = vpack.c.bf16 %v5117, %v5116
        %v5165 = vpack.c.bf16 %v5119, %v5118
        %v5166 = vpack.c.bf16 %v5121, %v5120
        %v5167 = vpack.c.bf16 %v5123, %v5122
        %v5168 = vpack.c.bf16 %v5125, %v5124
        %v5169 = vpack.c.bf16 %v5127, %v5126
        %v5170 = vpack.c.bf16 %v5129, %v5128
        %v5171 = vpack.c.bf16 %v5131, %v5130
        %v5172 = vpack.c.bf16 %v5133, %v5132
        %v5173 = vpack.c.bf16 %v5135, %v5134
        %v5174 = vpack.c.bf16 %v5137, %v5136
        %v5175 = vpack.c.bf16 %v5139, %v5138
        %v5176 = vpack.c.bf16 %v5141, %v5140
        %v5177 = vpack.c.bf16 %v5143, %v5142
        %v5178 = vpack.c.bf16 %v5145, %v5144
        %v5179 = vpack.c.bf16 %v5147, %v5146
        %v5212 = vunpack.c.l.b16 %v5148
        %v5213 = vunpack.c.h.b16 %v5148
        %v5214 = vunpack.c.l.b16 %v5149
        %v5215 = vunpack.c.h.b16 %v5149
        %v5216 = vunpack.c.l.b16 %v5150
        %v5217 = vunpack.c.h.b16 %v5150
        %v5218 = vunpack.c.l.b16 %v5151
        %v5219 = vunpack.c.h.b16 %v5151
        %v5220 = vunpack.c.l.b16 %v5152
        %v5221 = vunpack.c.h.b16 %v5152
        %v5222 = vunpack.c.l.b16 %v5153
        %v5223 = vunpack.c.h.b16 %v5153
        %v5224 = vunpack.c.l.b16 %v5154
        %v5225 = vunpack.c.h.b16 %v5154
        %v5226 = vunpack.c.l.b16 %v5155
        %v5227 = vunpack.c.h.b16 %v5155
        %v5228 = vunpack.c.l.b16 %v5156
        %v5229 = vunpack.c.h.b16 %v5156
        %v5230 = vunpack.c.l.b16 %v5157
        %v5231 = vunpack.c.h.b16 %v5157
        %v5232 = vunpack.c.l.b16 %v5158
        %v5233 = vunpack.c.h.b16 %v5158
        %v5234 = vunpack.c.l.b16 %v5159
        %v5235 = vunpack.c.h.b16 %v5159
        %v5236 = vunpack.c.l.b16 %v5160
        %v5237 = vunpack.c.h.b16 %v5160
        %v5238 = vunpack.c.l.b16 %v5161
        %v5239 = vunpack.c.h.b16 %v5161
        %v5240 = vunpack.c.l.b16 %v5162
        %v5241 = vunpack.c.h.b16 %v5162
        %v5242 = vunpack.c.l.b16 %v5163
        %v5243 = vunpack.c.h.b16 %v5163
        %v5244 = vunpack.c.l.b16 %v5164
        %v5245 = vunpack.c.h.b16 %v5164
        %v5246 = vunpack.c.l.b16 %v5165
        %v5247 = vunpack.c.h.b16 %v5165
        %v5248 = vunpack.c.l.b16 %v5166
        %v5249 = vunpack.c.h.b16 %v5166
        %v5250 = vunpack.c.l.b16 %v5167
        %v5251 = vunpack.c.h.b16 %v5167
        %v5252 = vunpack.c.l.b16 %v5168
        %v5253 = vunpack.c.h.b16 %v5168
        %v5254 = vunpack.c.l.b16 %v5169
        %v5255 = vunpack.c.h.b16 %v5169
        %v5256 = vunpack.c.l.b16 %v5170
        %v5257 = vunpack.c.h.b16 %v5170
        %v5258 = vunpack.c.l.b16 %v5171
        %v5259 = vunpack.c.h.b16 %v5171
        %v5260 = vunpack.c.l.b16 %v5172
        %v5261 = vunpack.c.h.b16 %v5172
        %v5262 = vunpack.c.l.b16 %v5173
        %v5263 = vunpack.c.h.b16 %v5173
        %v5264 = vunpack.c.l.b16 %v5174
        %v5265 = vunpack.c.h.b16 %v5174
        %v5266 = vunpack.c.l.b16 %v5175
        %v5267 = vunpack.c.h.b16 %v5175
        %v5268 = vunpack.c.l.b16 %v5176
        %v5269 = vunpack.c.h.b16 %v5176
        %v5270 = vunpack.c.l.b16 %v5177
        %v5271 = vunpack.c.h.b16 %v5177
        %v5272 = vunpack.c.l.b16 %v5178
        %v5273 = vunpack.c.h.b16 %v5178
        %v5274 = vunpack.c.l.b16 %v5179
        %v5275 = vunpack.c.h.b16 %v5179
        %v5276 = vpack.c.b16 %v5212, %v5212
        %v5277 = vpack.c.b16 %v5213, %v5213
        %v5278 = vpack.c.b16 %v5214, %v5214
        %v5279 = vpack.c.b16 %v5215, %v5215
        %v5280 = vpack.c.b16 %v5216, %v5216
        %v5281 = vpack.c.b16 %v5217, %v5217
        %v5282 = vpack.c.b16 %v5218, %v5218
        %v5283 = vpack.c.b16 %v5219, %v5219
        %v5284 = vpack.c.b16 %v5220, %v5220
        %v5285 = vpack.c.b16 %v5221, %v5221
        %v5286 = vpack.c.b16 %v5222, %v5222
        %v5287 = vpack.c.b16 %v5223, %v5223
        %v5288 = vpack.c.b16 %v5224, %v5224
        %v5289 = vpack.c.b16 %v5225, %v5225
        %v5290 = vpack.c.b16 %v5226, %v5226
        %v5291 = vpack.c.b16 %v5227, %v5227
        %v5292 = vpack.c.b16 %v5228, %v5228
        %v5293 = vpack.c.b16 %v5229, %v5229
        %v5294 = vpack.c.b16 %v5230, %v5230
        %v5295 = vpack.c.b16 %v5231, %v5231
        %v5296 = vpack.c.b16 %v5232, %v5232
        %v5297 = vpack.c.b16 %v5233, %v5233
        %v5298 = vpack.c.b16 %v5234, %v5234
        %v5299 = vpack.c.b16 %v5235, %v5235
        %v5300 = vpack.c.b16 %v5236, %v5236
        %v5301 = vpack.c.b16 %v5237, %v5237
        %v5302 = vpack.c.b16 %v5238, %v5238
        %v5303 = vpack.c.b16 %v5239, %v5239
        %v5304 = vpack.c.b16 %v5240, %v5240
        %v5305 = vpack.c.b16 %v5241, %v5241
        %v5306 = vpack.c.b16 %v5242, %v5242
        %v5307 = vpack.c.b16 %v5243, %v5243
        %v5308 = vpack.c.b16 %v5244, %v5244
        %v5309 = vpack.c.b16 %v5245, %v5245
        %v5310 = vpack.c.b16 %v5246, %v5246
        %v5311 = vpack.c.b16 %v5247, %v5247
        %v5312 = vpack.c.b16 %v5248, %v5248
        %v5313 = vpack.c.b16 %v5249, %v5249
        %v5314 = vpack.c.b16 %v5250, %v5250
        %v5315 = vpack.c.b16 %v5251, %v5251
        %v5316 = vpack.c.b16 %v5252, %v5252
        %v5317 = vpack.c.b16 %v5253, %v5253
        %v5318 = vpack.c.b16 %v5254, %v5254
        %v5319 = vpack.c.b16 %v5255, %v5255
        %v5320 = vpack.c.b16 %v5256, %v5256
        %v5321 = vpack.c.b16 %v5257, %v5257
        %v5322 = vpack.c.b16 %v5258, %v5258
        %v5323 = vpack.c.b16 %v5259, %v5259
        %v5324 = vpack.c.b16 %v5260, %v5260
        %v5325 = vpack.c.b16 %v5261, %v5261
        %v5326 = vpack.c.b16 %v5262, %v5262
        %v5327 = vpack.c.b16 %v5263, %v5263
        %v5328 = vpack.c.b16 %v5264, %v5264
        %v5329 = vpack.c.b16 %v5265, %v5265
        %v5330 = vpack.c.b16 %v5266, %v5266
        %v5331 = vpack.c.b16 %v5267, %v5267
        %v5332 = vpack.c.b16 %v5268, %v5268
        %v5333 = vpack.c.b16 %v5269, %v5269
        %v5334 = vpack.c.b16 %v5270, %v5270
        %v5335 = vpack.c.b16 %v5271, %v5271
        %v5336 = vpack.c.b16 %v5272, %v5272
        %v5337 = vpack.c.b16 %v5273, %v5273
        %v5338 = vpack.c.b16 %v5274, %v5274
        %v5339 = vpack.c.b16 %v5275, %v5275
        %5404 = vst [vmem:[%s376] sm:$0xf] %v5276
        %5405 = vst [vmem:[%s376 + $0x4] sm:$0xf] %v5277
        %5406 = vst [vmem:[%s376 + $0x8] sm:$0xf] %v5278
        %5407 = vst [vmem:[%s376 + $0xc] sm:$0xf] %v5279
        %5408 = vst [vmem:[%s376 + $0x10] sm:$0xf] %v5280
        %5409 = vst [vmem:[%s376 + $0x14] sm:$0xf] %v5281
        %5410 = vst [vmem:[%s376 + $0x18] sm:$0xf] %v5282
        %5411 = vst [vmem:[%s376 + $0x1c] sm:$0xf] %v5283
        %5412 = vst [vmem:[%s376 + $0x20] sm:$0xf] %v5284
        %5413 = vst [vmem:[%s376 + $0x24] sm:$0xf] %v5285
        %5414 = vst [vmem:[%s376 + $0x28] sm:$0xf] %v5286
        %5415 = vst [vmem:[%s376 + $0x2c] sm:$0xf] %v5287
        %5416 = vst [vmem:[%s376 + $0x30] sm:$0xf] %v5288
        %5417 = vst [vmem:[%s376 + $0x34] sm:$0xf] %v5289
        %5418 = vst [vmem:[%s376 + $0x38] sm:$0xf] %v5290
        %5419 = vst [vmem:[%s376 + $0x3c] sm:$0xf] %v5291
        %5420 = vst [vmem:[%s376 + $0x40] sm:$0xf] %v5292
        %5421 = vst [vmem:[%s376 + $0x44] sm:$0xf] %v5293
        %5422 = vst [vmem:[%s376 + $0x48] sm:$0xf] %v5294
        %5423 = vst [vmem:[%s376 + $0x4c] sm:$0xf] %v5295
        %5424 = vst [vmem:[%s376 + $0x50] sm:$0xf] %v5296
        %5425 = vst [vmem:[%s376 + $0x54] sm:$0xf] %v5297
        %5426 = vst [vmem:[%s376 + $0x58] sm:$0xf] %v5298
        %5427 = vst [vmem:[%s376 + $0x5c] sm:$0xf] %v5299
        %5428 = vst [vmem:[%s376 + $0x60] sm:$0xf] %v5300
        %5429 = vst [vmem:[%s376 + $0x64] sm:$0xf] %v5301
        %5430 = vst [vmem:[%s376 + $0x68] sm:$0xf] %v5302
        %5431 = vst [vmem:[%s376 + $0x6c] sm:$0xf] %v5303
        %5432 = vst [vmem:[%s376 + $0x70] sm:$0xf] %v5304
        %5433 = vst [vmem:[%s376 + $0x74] sm:$0xf] %v5305
        %5434 = vst [vmem:[%s376 + $0x78] sm:$0xf] %v5306
        %5435 = vst [vmem:[%s376 + $0x7c] sm:$0xf] %v5307
        %5436 = vst [vmem:[%s376 + $0x80] sm:$0xf] %v5308
        %5437 = vst [vmem:[%s376 + $0x84] sm:$0xf] %v5309
        %5438 = vst [vmem:[%s376 + $0x88] sm:$0xf] %v5310
        %5439 = vst [vmem:[%s376 + $0x8c] sm:$0xf] %v5311
        %5440 = vst [vmem:[%s376 + $0x90] sm:$0xf] %v5312
        %5441 = vst [vmem:[%s376 + $0x94] sm:$0xf] %v5313
        %5442 = vst [vmem:[%s376 + $0x98] sm:$0xf] %v5314
        %5443 = vst [vmem:[%s376 + $0x9c] sm:$0xf] %v5315
        %5444 = vst [vmem:[%s376 + $0xa0] sm:$0xf] %v5316
        %5445 = vst [vmem:[%s376 + $0xa4] sm:$0xf] %v5317
        %5446 = vst [vmem:[%s376 + $0xa8] sm:$0xf] %v5318
        %5447 = vst [vmem:[%s376 + $0xac] sm:$0xf] %v5319
        %5448 = vst [vmem:[%s376 + $0xb0] sm:$0xf] %v5320
        %5449 = vst [vmem:[%s376 + $0xb4] sm:$0xf] %v5321
        %5450 = vst [vmem:[%s376 + $0xb8] sm:$0xf] %v5322
        %5451 = vst [vmem:[%s376 + $0xbc] sm:$0xf] %v5323
        %5452 = vst [vmem:[%s376 + $0xc0] sm:$0xf] %v5324
        %5453 = vst [vmem:[%s376 + $0xc4] sm:$0xf] %v5325
        %5454 = vst [vmem:[%s376 + $0xc8] sm:$0xf] %v5326
        %5455 = vst [vmem:[%s376 + $0xcc] sm:$0xf] %v5327
        %5456 = vst [vmem:[%s376 + $0xd0] sm:$0xf] %v5328
        %5457 = vst [vmem:[%s376 + $0xd4] sm:$0xf] %v5329
        %5458 = vst [vmem:[%s376 + $0xd8] sm:$0xf] %v5330
        %5459 = vst [vmem:[%s376 + $0xdc] sm:$0xf] %v5331
        %5460 = vst [vmem:[%s376 + $0xe0] sm:$0xf] %v5332
        %5461 = vst [vmem:[%s376 + $0xe4] sm:$0xf] %v5333
        %5462 = vst [vmem:[%s376 + $0xe8] sm:$0xf] %v5334
        %5463 = vst [vmem:[%s376 + $0xec] sm:$0xf] %v5335
        %5464 = vst [vmem:[%s376 + $0xf0] sm:$0xf] %v5336
        %5465 = vst [vmem:[%s376 + $0xf4] sm:$0xf] %v5337
        %5466 = vst [vmem:[%s376 + $0xf8] sm:$0xf] %v5338
        %5467 = vst [vmem:[%s376 + $0xfc] sm:$0xf] %v5339
        %s5468 = smul.u32 64, %s23
        %p5469 = scmp.lt.s32.totalorder %s5468, 127
        %s5470 = scalar_select %p5469, %s5468, 127
        %s5471 = smul.addr %s5470, 4
        %s5472 = scalar_lea.vmem %s9, %s5471
        // Predicated region
        $region61: #{rendering_forward.1} parent=55 // pred_check
          %p5473 = pneg %p240
        $region62: #{rendering_forward.1} parent=55 // pred_check_branch
          %5475 = sbr.rel (%p5473) target = $region64
        $region63: #{rendering_forward.1} parent=55 // pred_region
          %s5476 = smul.u32 64, %s23
        $region64: #{rendering_forward.1} parent=55 // pred_fallthru
          _
      $region56: #{rendering_forward.1} parent=5 // pred_fallthru
        _
      %p5477 = scmp.le.s32.totalorder 2, %s18
      // Predicated region
      $region65: #{rendering_forward.1} parent=5 // pred_check
        %p5478 = pneg %p5477
      $region66: #{rendering_forward.1} parent=5 // pred_check_branch
        %5480 = sbr.rel (%p5478) target = $region68
      $region67: #{rendering_forward.1} parent=5 // pred_region
        %s5481 = ssub.s32 %s18, 2
        // Predicated region
        $region69: #{rendering_forward.1} parent=67 // pred_check
          %p5482 = pneg %p246
        $region70: #{rendering_forward.1} parent=67 // pred_check_branch
          %5484 = sbr.rel (%p5482) target = $region72
        $region71: #{rendering_forward.1} parent=67 // pred_region
          %s5485 = smul.u32 64, %s24
          %p5486 = scmp.lt.s32.totalorder %s5485, 127
          %s5487 = scalar_select %p5486, %s5485, 127
          %s5488 = smul.addr %s5487, 4
          %s5489 = scalar_lea.vmem %s9, %s5488
        $region72: #{rendering_forward.1} parent=67 // pred_fallthru
          _
      $region68: #{rendering_forward.1} parent=5 // pred_fallthru
        _
    $region6: #{rendering_forward.1} parent=1 // loop_footer
      %s22 = sadd.s32 1, %s18
    $region7: #{rendering_forward.1} parent=1 // loop_footer_branch
      %17 = sbr.rel target = $region3
    $region8: #{rendering_forward.1} parent=1 // loop_exit
      _
    %5490 = vsyncpa [#allocation3], 1
    %s5491 = scalar_lea.sflag [#allocation3], 1
    %5492 = vsyncpa %s5491, 1

</llo_original>
